<compile_context>
chip_gen: v5e
topology: v5e:2x2
jax: 0.10.0
libtpu: 0.0.40
codegen_flags: <defaults>
</compile_context>

<pallas_src>
import functools

import numpy as np
import jax
import jax.numpy as jnp
from jax import lax
from jax.experimental import pallas as pl
from jax.experimental.pallas import tpu as pltpu


# ----------------------------------------------------------------------------
# cfg (values from the standard faster-rcnn config; defined in-script)
# ----------------------------------------------------------------------------
class cfg:
    rpn_neg_iou_thr = 0.3
    rpn_pos_iou_thr = 0.7
    anchor_batch_size = 256
    rpn_bbox_inside_weight = (1.0, 1.0, 1.0, 1.0)


# ----------------------------------------------------------------------------
# anchor generation (numpy glue, deterministic "parameters" of the module)
# ----------------------------------------------------------------------------
def _whctrs(anchor):
    w = anchor[2] - anchor[0] + 1
    h = anchor[3] - anchor[1] + 1
    x_ctr = anchor[0] + 0.5 * (w - 1)
    y_ctr = anchor[1] + 0.5 * (h - 1)
    return w, h, x_ctr, y_ctr


def _mkanchors(ws, hs, x_ctr, y_ctr):
    ws = ws[:, None]
    hs = hs[:, None]
    return np.hstack((x_ctr - 0.5 * (ws - 1), y_ctr - 0.5 * (hs - 1),
                      x_ctr + 0.5 * (ws - 1), y_ctr + 0.5 * (hs - 1)))


def _ratio_enum(anchor, ratios):
    w, h, x_ctr, y_ctr = _whctrs(anchor)
    size = w * h
    size_ratios = size / ratios
    ws = np.round(np.sqrt(size_ratios))
    hs = np.round(ws * ratios)
    return _mkanchors(ws, hs, x_ctr, y_ctr)


def _scale_enum(anchor, scales):
    w, h, x_ctr, y_ctr = _whctrs(anchor)
    ws = w * scales
    hs = h * scales
    return _mkanchors(ws, hs, x_ctr, y_ctr)


def generate_anchors(base_size, scales, ratios):
    base_anchor = np.array([1, 1, base_size, base_size], dtype=np.float64) - 1
    ratio_anchors = _ratio_enum(base_anchor, np.asarray(ratios, dtype=np.float64))
    anchors = np.vstack([_scale_enum(ratio_anchors[i, :], np.asarray(scales, dtype=np.float64))
                         for i in range(ratio_anchors.shape[0])])
    return anchors.astype(np.float32)


# ----------------------------------------------------------------------------
# Host-precomputed per-anchor constant table (16, N), N ordered A-major.
# ----------------------------------------------------------------------------
_R_X1, _R_Y1, _R_X2, _R_Y2 = 0, 1, 2, 3
_R_AREA, _R_CTRX, _R_CTRY = 4, 5, 6
_R_INVW, _R_INVH, _R_LOGW, _R_LOGH = 7, 8, 9, 10
_R_INSIDE, _R_AZERO = 11, 12
_NUM_ROWS = 16          # pad to a multiple of 8 sublanes


def _build_anchor_table(base_anchors, feat_h, feat_w, feat_stride, im_h, im_w):
    """A-major anchor enumeration (n = a*K + k, k = h*W + w) + constants.

    A-major ordering means kernel outputs are already in the PyTorch channel
    order (free reshapes downstream); precomputed rows avoid per-image
    recomputation of anchor-only quantities inside the kernel.
    """
    A = base_anchors.shape[0]
    K = feat_h * feat_w
    shift_x = np.arange(0, feat_w) * feat_stride
    shift_y = np.arange(0, feat_h) * feat_stride
    sx, sy = np.meshgrid(shift_x, shift_y)
    shifts = np.stack([sx.ravel(), sy.ravel(), sx.ravel(), sy.ravel()],
                      axis=1).astype(np.float32)                       # (K, 4)
    all_anchors = (base_anchors.reshape(A, 1, 4).astype(np.float32)
                   + shifts.reshape(1, K, 4)).reshape(A * K, 4)        # A-major
    N = A * K
    x1, y1, x2, y2 = (all_anchors[:, 0], all_anchors[:, 1],
                      all_anchors[:, 2], all_anchors[:, 3])
    a_w = x2 - x1 + 1.0
    a_h = y2 - y1 + 1.0

    tbl = np.zeros((_NUM_ROWS, N), dtype=np.float32)
    tbl[_R_X1], tbl[_R_Y1], tbl[_R_X2], tbl[_R_Y2] = x1, y1, x2, y2
    tbl[_R_AREA] = a_w * a_h
    tbl[_R_CTRX] = x1 + 0.5 * a_w
    tbl[_R_CTRY] = y1 + 0.5 * a_h
    tbl[_R_INVW] = 1.0 / a_w
    tbl[_R_INVH] = 1.0 / a_h
    tbl[_R_LOGW] = np.log(a_w)
    tbl[_R_LOGH] = np.log(a_h)
    # _allowed_border == 0; the reference uses im_info[0] for the whole batch.
    inside = (x1 >= 0.0) & (y1 >= 0.0) & (x2 < float(im_w)) & (y2 < float(im_h))
    tbl[_R_INSIDE] = inside.astype(np.float32)
    tbl[_R_AZERO] = ((a_w == 1.0) & (a_h == 1.0)).astype(np.float32)
    return tbl


# ----------------------------------------------------------------------------
# Pallas kernel: streams over the G gt boxes, keeps running max / argmax-coords
# / keep-mask, emits labels and bbox targets (targets already in final layout).
# ----------------------------------------------------------------------------
def _make_anchor_target_kernel(G, A, K):
    N = A * K
    NEG = -1e30

    def kernel(gt_ref,      # SMEM scalar prefetch: (B*G*5,) f32 gt boxes
               anch_ref,    # VMEM (16, N) f32 anchor constant table
               tgt_ref,     # VMEM out (1, 4*A, K) f32 : final channel order
               lbl_ref):    # VMEM out (1, 1, N) f32
        b = pl.program_id(0)

        ax1 = anch_ref[_R_X1:_R_X1 + 1, :]          # (1, N)
        ay1 = anch_ref[_R_Y1:_R_Y1 + 1, :]
        ax2 = anch_ref[_R_X2:_R_X2 + 1, :]
        ay2 = anch_ref[_R_Y2:_R_Y2 + 1, :]
        a_area = anch_ref[_R_AREA:_R_AREA + 1, :]
        inside = anch_ref[_R_INSIDE:_R_INSIDE + 1, :] > 0.5
        a_zero = anch_ref[_R_AZERO:_R_AZERO + 1, :] > 0.5

        def body(g, carry):
            max_ov, sx1, sy1, sx2, sy2, keep_cnt = carry
            base = (b * G + g) * 5
            gx1 = gt_ref[base + 0]
            gy1 = gt_ref[base + 1]
            gx2 = gt_ref[base + 2]
            gy2 = gt_ref[base + 3]
            gt_w = gx2 - gx1 + 1.0
            gt_h = gy2 - gy1 + 1.0
            gt_area = gt_w * gt_h
            gt_zero = jnp.logical_and(gt_w == 1.0, gt_h == 1.0).astype(jnp.float32)

            # one IoU row (1, N) for this gt box
            iw = jnp.maximum(jnp.minimum(ax2, gx2) - jnp.maximum(ax1, gx1) + 1.0, 0.0)
            ih = jnp.maximum(jnp.minimum(ay2, gy2) - jnp.maximum(ay1, gy1) + 1.0, 0.0)
            inter = iw * ih
            ua = a_area + (gt_area - inter)
            ov = inter / ua
            ov = ov * (1.0 - gt_zero)                 # padded (all-zero) gt rows -> 0
            ov = jnp.where(a_zero, -1.0, ov)          # zero-area anchors -> -1

            # running per-anchor max over gt; strict '>' keeps the FIRST argmax
            better = ov > max_ov
            max_ov = jnp.where(better, ov, max_ov)
            sx1 = jnp.where(better, gx1, sx1)
            sy1 = jnp.where(better, gy1, sy1)
            sx2 = jnp.where(better, gx2, sx2)
            sy2 = jnp.where(better, gy2, sy2)

            # per-gt max over *inside* anchors (torch.max(overlaps, 1)) + keep
            ov_in = jnp.where(inside, ov, NEG)
            gmax = jnp.max(ov_in, axis=1, keepdims=True)       # (1, 1)
            gmax = jnp.where(gmax == 0.0, 1e-5, gmax)
            keep_cnt = keep_cnt + (ov_in == gmax).astype(jnp.float32)
            return (max_ov, sx1, sy1, sx2, sy2, keep_cnt)

        zeros = jnp.zeros((1, N), jnp.float32)
        init = (jnp.full((1, N), NEG, jnp.float32),
                zeros, zeros, zeros, zeros, zeros)
        max_ov, sx1, sy1, sx2, sy2, keep_cnt = lax.fori_loop(
            0, G, body, init, unroll=True)

        # ---- raw labels (fg/bg subsampling happens in the wrapper) ----------
        labels = jnp.full((1, N), -1.0, jnp.float32)
        labels = jnp.where(max_ov < cfg.rpn_neg_iou_thr, 0.0, labels)
        # NOTE: if an image had no inside anchors at all, keep_cnt fires
        # spuriously for outside anchors (gmax stays at the -1e30 sentinel);
        # harmless because outside anchors are forced back to -1 below.
        labels = jnp.where(keep_cnt > 0.0, 1.0, labels)
        labels = jnp.where(max_ov >= cfg.rpn_pos_iou_thr, 1.0, labels)
        labels = jnp.where(inside, labels, -1.0)               # _unmap(fill=-1)
        lbl_ref[0] = labels

        # ---- bbox_transform_batch against the argmax gt ---------------------
        g_w = sx2 - sx1 + 1.0
        g_h = sy2 - sy1 + 1.0
        g_ctr_x = sx1 + 0.5 * g_w
        g_ctr_y = sy1 + 0.5 * g_h
        dx = (g_ctr_x - anch_ref[_R_CTRX:_R_CTRX + 1, :]) * anch_ref[_R_INVW:_R_INVW + 1, :]
        dy = (g_ctr_y - anch_ref[_R_CTRY:_R_CTRY + 1, :]) * anch_ref[_R_INVH:_R_INVH + 1, :]
        dw = jnp.log(g_w) - anch_ref[_R_LOGW:_R_LOGW + 1, :]
        dh = jnp.log(g_h) - anch_ref[_R_LOGH:_R_LOGH + 1, :]
        tgt = jnp.concatenate([dx, dy, dw, dh], axis=0)        # (4, N)
        tgt = jnp.where(inside, tgt, 0.0)                      # _unmap(fill=0)

        # Write directly in the final PyTorch channel order: output row
        # 4*a + c holds coordinate c of anchor shape a over the H*W positions,
        # so the wrapper needs no transpose at all.
        for a in range(A):
            tgt_ref[0, 4 * a:4 * (a + 1), :] = tgt[:, a * K:(a + 1) * K]

    return kernel


def _run_anchor_target_kernel(gt_flat, anchors_tbl, B, G, A, K):
    N = A * K
    kernel = _make_anchor_target_kernel(G, A, K)
    targets, labels = pl.pallas_call(
        kernel,
        out_shape=(jax.ShapeDtypeStruct((B, 4 * A, K), jnp.float32),
                   jax.ShapeDtypeStruct((B, 1, N), jnp.float32)),
        grid_spec=pltpu.PrefetchScalarGridSpec(
            num_scalar_prefetch=1,
            grid=(B,),
            in_specs=[pl.BlockSpec((_NUM_ROWS, N), lambda b, gt: (0, 0))],
            out_specs=[pl.BlockSpec((1, 4 * A, K), lambda b, gt: (b, 0, 0)),
                       pl.BlockSpec((1, 1, N), lambda b, gt: (b, 0, 0))]),
        compiler_params=pltpu.CompilerParams(
            # images are independent -> shards across the 2 TCs on v7x
            dimension_semantics=("parallel",)),
    )(gt_flat, anchors_tbl)
    return targets, labels[:, 0, :]          # (B, 4A, K), (B, N)


# ----------------------------------------------------------------------------
# Device-side forward (kernel + subsampling / weights / final reshapes), jitted
# so the epilogue fuses and never materializes transposed intermediates.
# ----------------------------------------------------------------------------
@functools.partial(jax.jit, static_argnames=("B", "G", "A", "feat_h", "feat_w"))
def _device_forward(gt_flat, anchors_tbl, *, B, G, A, feat_h, feat_w):
    K = feat_h * feat_w

    bbox_targets, labels = _run_anchor_target_kernel(gt_flat, anchors_tbl, B, G, A, K)

    # -- fg / bg subsampling ---------------------------------------------------
    # TODO(synk): original uses unseeded np.random.permutation to pick which
    # excess fg/bg anchors to disable; replaced by a deterministic prefix-keep
    # (in A-major anchor order) — same counts/shapes, not the same random set.
    num_fg = int(cfg.anchor_batch_size * 0.5)
    is_fg = labels == 1.0
    is_bg = labels == 0.0
    sum_fg = jnp.sum(is_fg.astype(jnp.int32), axis=1)
    sum_bg = jnp.sum(is_bg.astype(jnp.int32), axis=1)
    fg_rank = jnp.cumsum(is_fg.astype(jnp.int32), axis=1)
    labels = jnp.where(is_fg & (sum_fg[:, None] > num_fg) & (fg_rank > num_fg),
                       -1.0, labels)
    fg_after = jnp.sum((labels == 1.0).astype(jnp.int32), axis=1)
    num_bg = cfg.anchor_batch_size - fg_after
    bg_rank = jnp.cumsum(is_bg.astype(jnp.int32), axis=1)
    labels = jnp.where(is_bg & (sum_bg[:, None] > num_bg[:, None]) & (bg_rank > num_bg[:, None]),
                       -1.0, labels)

    # -- bbox weights (reproduces the original's use of the *last* image's count)
    bbox_inside = jnp.where(labels == 1.0, cfg.rpn_bbox_inside_weight[0], 0.0)
    num_examples = jnp.sum((labels[B - 1] >= 0.0).astype(jnp.float32))
    positive_weights = 1.0 / num_examples
    negative_weights = 1.0 / num_examples
    bbox_outside = jnp.where(labels == 1.0, positive_weights, 0.0)
    bbox_outside = jnp.where(labels == 0.0, negative_weights, bbox_outside)

    # -- final layouts: A-major ordering makes these free reshapes / broadcasts
    labels_out = labels.reshape(B, 1, A * feat_h, feat_w)
    bbox_targets_out = bbox_targets.reshape(B, 4 * A, feat_h, feat_w)
    biw_out = jnp.broadcast_to(bbox_inside.reshape(B, A, 1, K),
                               (B, A, 4, K)).reshape(B, 4 * A, feat_h, feat_w)
    bow_out = jnp.broadcast_to(bbox_outside.reshape(B, A, 1, K),
                               (B, A, 4, K)).reshape(B, 4 * A, feat_h, feat_w)
    return labels_out, bbox_targets_out, biw_out, bow_out


# ----------------------------------------------------------------------------
# Public forward pass (host-side glue around the kernel)
# ----------------------------------------------------------------------------
def anchor_target_forward(rpn_cls_score, gt_boxes, im_info,
                          feat_stride, scales, ratios):
    B, G = int(gt_boxes.shape[0]), int(gt_boxes.shape[1])
    feat_h, feat_w = int(rpn_cls_score.shape[2]), int(rpn_cls_score.shape[3])

    base_anchors = generate_anchors(feat_stride, scales, ratios)   # (A, 4)
    A = base_anchors.shape[0]

    im_info_np = np.asarray(im_info)
    im_h, im_w = int(im_info_np[0][0]), int(im_info_np[0][1])

    anchors_tbl = jnp.asarray(
        _build_anchor_table(base_anchors, feat_h, feat_w, feat_stride, im_h, im_w))
    gt_flat = jnp.asarray(gt_boxes, jnp.float32).reshape(-1)       # (B*G*5,)

    outs = _device_forward(gt_flat, anchors_tbl,
                           B=B, G=G, A=A, feat_h=feat_h, feat_w=feat_w)
    return list(outs)


# ----------------------------------------------------------------------------
if __name__ == "__main__":
    B = 2
    feat_h = feat_w = 16
    feat_stride = 8
    scales = (2, 4, 8)
    ratios = (0.5, 1.0, 2.0)
    A = len(scales) * len(ratios)           # 9
    G = 8                                   # gt boxes per image (with zero padding)
    IM_H = IM_W = 128.0

    key = jax.random.PRNGKey(0)
    k0, k1, k2, k3, k4 = jax.random.split(key, 5)

    # rpn_cls_score: only its spatial shape is used (NCHW)
    rpn_cls_score = jax.random.normal(k0, (B, 2 * A, feat_h, feat_w), dtype=jnp.float32)

    x1 = jax.random.uniform(k1, (B, G), minval=0.0, maxval=60.0)
    y1 = jax.random.uniform(k2, (B, G), minval=0.0, maxval=60.0)
    bw = jax.random.uniform(k3, (B, G), minval=8.0, maxval=60.0)
    bh = jax.random.uniform(k4, (B, G), minval=8.0, maxval=60.0)
    x2 = jnp.minimum(x1 + bw, IM_W - 1.0)
    y2 = jnp.minimum(y1 + bh, IM_H - 1.0)
    cls = jnp.ones((B, G), dtype=jnp.float32)
    gt_boxes = jnp.stack([x1, y1, x2, y2, cls], axis=-1)
    # zero-pad last 2 gt rows per image (exercises the gt_area_zero path)
    valid = (jnp.arange(G) < G - 2).astype(jnp.float32)[None, :, None]
    gt_boxes = gt_boxes * valid

    im_info = np.array([[IM_H, IM_W, 1.0]] * B, dtype=np.float32)

    outputs = anchor_target_forward(rpn_cls_score, gt_boxes, im_info,
                                    feat_stride, scales, ratios)
    for o in outputs:
        jax.block_until_ready(o)

    assert outputs[0].shape == (B, 1, A * feat_h, feat_w)
    assert outputs[1].shape == (B, 4 * A, feat_h, feat_w)
    assert outputs[2].shape == (B, 4 * A, feat_h, feat_w)
    assert outputs[3].shape == (B, 4 * A, feat_h, feat_w)
    print("KERNEL_OK")
</pallas_src>

<mosaic_0001>
module attributes {stable_mosaic.version = 11 : i64} {
  func.func @kernel(%arg0: i32, %arg1: memref<80xf32, #tpu.memory_space<smem>>, %arg2: memref<16x2304xf32, #tpu.memory_space<vmem>>, %arg3: memref<1x36x256xf32, #tpu.memory_space<vmem>>, %arg4: memref<1x1x2304xf32, #tpu.memory_space<vmem>>) attributes {dimension_semantics = [#tpu.dimension_semantics<parallel>], iteration_bounds = array<i64: 2>, scalar_prefetch = 1 : i64, scratch_operands = 0 : i64, tpu.core_type = #tpu.core_type<tc>, window_params = [{pipeline_mode = #tpu.pipeline_mode<synchronous>, transform_indices = @transform_0, window_bounds = array<i64: 16, 2304>}, {transform_indices = @transform_1, window_bounds = array<i64: 1, 36, 256>}, {transform_indices = @transform_2, window_bounds = array<i64: 1, 1, 2304>}]} {
    %c0 = arith.constant 0 : index
    %c0_0 = arith.constant 0 : index
    %0 = vector.load %arg2[%c0, %c0_0] : memref<16x2304xf32, #tpu.memory_space<vmem>>, vector<1x2304xf32>
    %c1 = arith.constant 1 : index
    %c0_1 = arith.constant 0 : index
    %1 = vector.load %arg2[%c1, %c0_1] : memref<16x2304xf32, #tpu.memory_space<vmem>>, vector<1x2304xf32>
    %c2 = arith.constant 2 : index
    %c0_2 = arith.constant 0 : index
    %2 = vector.load %arg2[%c2, %c0_2] : memref<16x2304xf32, #tpu.memory_space<vmem>>, vector<1x2304xf32>
    %c3 = arith.constant 3 : index
    %c0_3 = arith.constant 0 : index
    %3 = vector.load %arg2[%c3, %c0_3] : memref<16x2304xf32, #tpu.memory_space<vmem>>, vector<1x2304xf32>
    %c4 = arith.constant 4 : index
    %c0_4 = arith.constant 0 : index
    %4 = vector.load %arg2[%c4, %c0_4] : memref<16x2304xf32, #tpu.memory_space<vmem>>, vector<1x2304xf32>
    %c11 = arith.constant 11 : index
    %c0_5 = arith.constant 0 : index
    %5 = vector.load %arg2[%c11, %c0_5] : memref<16x2304xf32, #tpu.memory_space<vmem>>, vector<1x2304xf32>
    %cst = arith.constant 5.000000e-01 : f32
    %6 = vector.broadcast %cst : f32 to vector<1x2304xf32>
    %7 = arith.cmpf ogt, %5, %6 : vector<1x2304xf32>
    %c12 = arith.constant 12 : index
    %c0_6 = arith.constant 0 : index
    %8 = vector.load %arg2[%c12, %c0_6] : memref<16x2304xf32, #tpu.memory_space<vmem>>, vector<1x2304xf32>
    %cst_7 = arith.constant 5.000000e-01 : f32
    %9 = vector.broadcast %cst_7 : f32 to vector<1x2304xf32>
    %10 = arith.cmpf ogt, %8, %9 : vector<1x2304xf32>
    %cst_8 = arith.constant 0.000000e+00 : f32
    %11 = vector.broadcast %cst_8 : f32 to vector<1x2304xf32>
    %cst_9 = arith.constant -1.000000e+30 : f32
    %12 = vector.broadcast %cst_9 : f32 to vector<1x2304xf32>
    %c0_i32 = arith.constant 0 : i32
    %c8_i32 = arith.constant 8 : i32
    %13 = arith.muli %arg0, %c8_i32 : i32
    %14 = arith.addi %13, %c0_i32 : i32
    %c5_i32 = arith.constant 5 : i32
    %15 = arith.muli %14, %c5_i32 : i32
    %c0_i32_10 = arith.constant 0 : i32
    %16 = arith.addi %15, %c0_i32_10 : i32
    %17 = arith.index_cast %16 : i32 to index
    %18 = memref.load %arg1[%17] : memref<80xf32, #tpu.memory_space<smem>>
    %c1_i32 = arith.constant 1 : i32
    %19 = arith.addi %15, %c1_i32 : i32
    %20 = arith.index_cast %19 : i32 to index
    %21 = memref.load %arg1[%20] : memref<80xf32, #tpu.memory_space<smem>>
    %c2_i32 = arith.constant 2 : i32
    %22 = arith.addi %15, %c2_i32 : i32
    %23 = arith.index_cast %22 : i32 to index
    %24 = memref.load %arg1[%23] : memref<80xf32, #tpu.memory_space<smem>>
    %c3_i32 = arith.constant 3 : i32
    %25 = arith.addi %15, %c3_i32 : i32
    %26 = arith.index_cast %25 : i32 to index
    %27 = memref.load %arg1[%26] : memref<80xf32, #tpu.memory_space<smem>>
    %28 = arith.subf %24, %18 : f32
    %cst_11 = arith.constant 1.000000e+00 : f32
    %29 = arith.addf %28, %cst_11 : f32
    %30 = arith.subf %27, %21 : f32
    %cst_12 = arith.constant 1.000000e+00 : f32
    %31 = arith.addf %30, %cst_12 : f32
    %32 = arith.mulf %29, %31 : f32
    %cst_13 = arith.constant 1.000000e+00 : f32
    %33 = arith.cmpf oeq, %29, %cst_13 : f32
    %cst_14 = arith.constant 1.000000e+00 : f32
    %34 = arith.cmpf oeq, %31, %cst_14 : f32
    %35 = arith.andi %33, %34 : i1
    %36 = arith.extui %35 : i1 to i32
    %37 = arith.sitofp %36 : i32 to f32
    %38 = vector.broadcast %24 : f32 to vector<1x2304xf32>
    %39 = arith.minimumf %2, %38 : vector<1x2304xf32>
    %40 = vector.broadcast %18 : f32 to vector<1x2304xf32>
    %41 = arith.maximumf %0, %40 : vector<1x2304xf32>
    %42 = arith.subf %39, %41 : vector<1x2304xf32>
    %cst_15 = arith.constant 1.000000e+00 : f32
    %43 = vector.broadcast %cst_15 : f32 to vector<1x2304xf32>
    %44 = arith.addf %42, %43 : vector<1x2304xf32>
    %cst_16 = arith.constant 0.000000e+00 : f32
    %45 = vector.broadcast %cst_16 : f32 to vector<1x2304xf32>
    %46 = arith.maximumf %44, %45 : vector<1x2304xf32>
    %47 = vector.broadcast %27 : f32 to vector<1x2304xf32>
    %48 = arith.minimumf %3, %47 : vector<1x2304xf32>
    %49 = vector.broadcast %21 : f32 to vector<1x2304xf32>
    %50 = arith.maximumf %1, %49 : vector<1x2304xf32>
    %51 = arith.subf %48, %50 : vector<1x2304xf32>
    %cst_17 = arith.constant 1.000000e+00 : f32
    %52 = vector.broadcast %cst_17 : f32 to vector<1x2304xf32>
    %53 = arith.addf %51, %52 : vector<1x2304xf32>
    %cst_18 = arith.constant 0.000000e+00 : f32
    %54 = vector.broadcast %cst_18 : f32 to vector<1x2304xf32>
    %55 = arith.maximumf %53, %54 : vector<1x2304xf32>
    %56 = arith.mulf %46, %55 : vector<1x2304xf32>
    %57 = vector.broadcast %32 : f32 to vector<1x2304xf32>
    %58 = arith.subf %57, %56 : vector<1x2304xf32>
    %59 = arith.addf %4, %58 : vector<1x2304xf32>
    %60 = arith.divf %56, %59 : vector<1x2304xf32>
    %cst_19 = arith.constant 1.000000e+00 : f32
    %61 = arith.subf %cst_19, %37 : f32
    %62 = vector.broadcast %61 : f32 to vector<1x2304xf32>
    %63 = arith.mulf %60, %62 : vector<1x2304xf32>
    %cst_20 = arith.constant -1.000000e+00 : f32
    %64 = vector.broadcast %cst_20 : f32 to vector<1x2304xf32>
    %65 = arith.select %10, %64, %63 : vector<1x2304xi1>, vector<1x2304xf32>
    %66 = arith.cmpf ogt, %65, %12 : vector<1x2304xf32>
    %67 = arith.select %66, %65, %12 : vector<1x2304xi1>, vector<1x2304xf32>
    %68 = vector.broadcast %18 : f32 to vector<1x2304xf32>
    %69 = arith.select %66, %68, %11 : vector<1x2304xi1>, vector<1x2304xf32>
    %70 = vector.broadcast %21 : f32 to vector<1x2304xf32>
    %71 = arith.select %66, %70, %11 : vector<1x2304xi1>, vector<1x2304xf32>
    %72 = vector.broadcast %24 : f32 to vector<1x2304xf32>
    %73 = arith.select %66, %72, %11 : vector<1x2304xi1>, vector<1x2304xf32>
    %74 = vector.broadcast %27 : f32 to vector<1x2304xf32>
    %75 = arith.select %66, %74, %11 : vector<1x2304xi1>, vector<1x2304xf32>
    %cst_21 = arith.constant -1.000000e+30 : f32
    %76 = vector.broadcast %cst_21 : f32 to vector<1x2304xf32>
    %77 = arith.select %7, %65, %76 : vector<1x2304xi1>, vector<1x2304xf32>
    %cst_22 = arith.constant dense<0xFF800000> : vector<1xf32>
    %78 = vector.multi_reduction <maximumf>, %77, %cst_22 [1] : vector<1x2304xf32> to vector<1xf32>
    %79 = vector.shape_cast %78 : vector<1xf32> to vector<1x1xf32>
    %cst_23 = arith.constant 0.000000e+00 : f32
    %80 = vector.broadcast %cst_23 : f32 to vector<1x1xf32>
    %81 = arith.cmpf oeq, %79, %80 : vector<1x1xf32>
    %cst_24 = arith.constant 9.99999974E-6 : f32
    %82 = vector.broadcast %cst_24 : f32 to vector<1x1xf32>
    %83 = arith.select %81, %82, %79 : vector<1x1xi1>, vector<1x1xf32>
    %84 = vector.broadcast %83 : vector<1x1xf32> to vector<1x2304xf32>
    %85 = arith.cmpf oeq, %77, %84 : vector<1x2304xf32>
    %86 = arith.extui %85 : vector<1x2304xi1> to vector<1x2304xi32>
    %87 = arith.sitofp %86 : vector<1x2304xi32> to vector<1x2304xf32>
    %88 = arith.addf %11, %87 : vector<1x2304xf32>
    %c1_i32_25 = arith.constant 1 : i32
    %c8_i32_26 = arith.constant 8 : i32
    %89 = arith.muli %arg0, %c8_i32_26 : i32
    %90 = arith.addi %89, %c1_i32_25 : i32
    %c5_i32_27 = arith.constant 5 : i32
    %91 = arith.muli %90, %c5_i32_27 : i32
    %c0_i32_28 = arith.constant 0 : i32
    %92 = arith.addi %91, %c0_i32_28 : i32
    %93 = arith.index_cast %92 : i32 to index
    %94 = memref.load %arg1[%93] : memref<80xf32, #tpu.memory_space<smem>>
    %c1_i32_29 = arith.constant 1 : i32
    %95 = arith.addi %91, %c1_i32_29 : i32
    %96 = arith.index_cast %95 : i32 to index
    %97 = memref.load %arg1[%96] : memref<80xf32, #tpu.memory_space<smem>>
    %c2_i32_30 = arith.constant 2 : i32
    %98 = arith.addi %91, %c2_i32_30 : i32
    %99 = arith.index_cast %98 : i32 to index
    %100 = memref.load %arg1[%99] : memref<80xf32, #tpu.memory_space<smem>>
    %c3_i32_31 = arith.constant 3 : i32
    %101 = arith.addi %91, %c3_i32_31 : i32
    %102 = arith.index_cast %101 : i32 to index
    %103 = memref.load %arg1[%102] : memref<80xf32, #tpu.memory_space<smem>>
    %104 = arith.subf %100, %94 : f32
    %cst_32 = arith.constant 1.000000e+00 : f32
    %105 = arith.addf %104, %cst_32 : f32
    %106 = arith.subf %103, %97 : f32
    %cst_33 = arith.constant 1.000000e+00 : f32
    %107 = arith.addf %106, %cst_33 : f32
    %108 = arith.mulf %105, %107 : f32
    %cst_34 = arith.constant 1.000000e+00 : f32
    %109 = arith.cmpf oeq, %105, %cst_34 : f32
    %cst_35 = arith.constant 1.000000e+00 : f32
    %110 = arith.cmpf oeq, %107, %cst_35 : f32
    %111 = arith.andi %109, %110 : i1
    %112 = arith.extui %111 : i1 to i32
    %113 = arith.sitofp %112 : i32 to f32
    %114 = vector.broadcast %100 : f32 to vector<1x2304xf32>
    %115 = arith.minimumf %2, %114 : vector<1x2304xf32>
    %116 = vector.broadcast %94 : f32 to vector<1x2304xf32>
    %117 = arith.maximumf %0, %116 : vector<1x2304xf32>
    %118 = arith.subf %115, %117 : vector<1x2304xf32>
    %cst_36 = arith.constant 1.000000e+00 : f32
    %119 = vector.broadcast %cst_36 : f32 to vector<1x2304xf32>
    %120 = arith.addf %118, %119 : vector<1x2304xf32>
    %cst_37 = arith.constant 0.000000e+00 : f32
    %121 = vector.broadcast %cst_37 : f32 to vector<1x2304xf32>
    %122 = arith.maximumf %120, %121 : vector<1x2304xf32>
    %123 = vector.broadcast %103 : f32 to vector<1x2304xf32>
    %124 = arith.minimumf %3, %123 : vector<1x2304xf32>
    %125 = vector.broadcast %97 : f32 to vector<1x2304xf32>
    %126 = arith.maximumf %1, %125 : vector<1x2304xf32>
    %127 = arith.subf %124, %126 : vector<1x2304xf32>
    %cst_38 = arith.constant 1.000000e+00 : f32
    %128 = vector.broadcast %cst_38 : f32 to vector<1x2304xf32>
    %129 = arith.addf %127, %128 : vector<1x2304xf32>
    %cst_39 = arith.constant 0.000000e+00 : f32
    %130 = vector.broadcast %cst_39 : f32 to vector<1x2304xf32>
    %131 = arith.maximumf %129, %130 : vector<1x2304xf32>
    %132 = arith.mulf %122, %131 : vector<1x2304xf32>
    %133 = vector.broadcast %108 : f32 to vector<1x2304xf32>
    %134 = arith.subf %133, %132 : vector<1x2304xf32>
    %135 = arith.addf %4, %134 : vector<1x2304xf32>
    %136 = arith.divf %132, %135 : vector<1x2304xf32>
    %cst_40 = arith.constant 1.000000e+00 : f32
    %137 = arith.subf %cst_40, %113 : f32
    %138 = vector.broadcast %137 : f32 to vector<1x2304xf32>
    %139 = arith.mulf %136, %138 : vector<1x2304xf32>
    %cst_41 = arith.constant -1.000000e+00 : f32
    %140 = vector.broadcast %cst_41 : f32 to vector<1x2304xf32>
    %141 = arith.select %10, %140, %139 : vector<1x2304xi1>, vector<1x2304xf32>
    %142 = arith.cmpf ogt, %141, %67 : vector<1x2304xf32>
    %143 = arith.select %142, %141, %67 : vector<1x2304xi1>, vector<1x2304xf32>
    %144 = vector.broadcast %94 : f32 to vector<1x2304xf32>
    %145 = arith.select %142, %144, %69 : vector<1x2304xi1>, vector<1x2304xf32>
    %146 = vector.broadcast %97 : f32 to vector<1x2304xf32>
    %147 = arith.select %142, %146, %71 : vector<1x2304xi1>, vector<1x2304xf32>
    %148 = vector.broadcast %100 : f32 to vector<1x2304xf32>
    %149 = arith.select %142, %148, %73 : vector<1x2304xi1>, vector<1x2304xf32>
    %150 = vector.broadcast %103 : f32 to vector<1x2304xf32>
    %151 = arith.select %142, %150, %75 : vector<1x2304xi1>, vector<1x2304xf32>
    %cst_42 = arith.constant -1.000000e+30 : f32
    %152 = vector.broadcast %cst_42 : f32 to vector<1x2304xf32>
    %153 = arith.select %7, %141, %152 : vector<1x2304xi1>, vector<1x2304xf32>
    %cst_43 = arith.constant dense<0xFF800000> : vector<1xf32>
    %154 = vector.multi_reduction <maximumf>, %153, %cst_43 [1] : vector<1x2304xf32> to vector<1xf32>
    %155 = vector.shape_cast %154 : vector<1xf32> to vector<1x1xf32>
    %cst_44 = arith.constant 0.000000e+00 : f32
    %156 = vector.broadcast %cst_44 : f32 to vector<1x1xf32>
    %157 = arith.cmpf oeq, %155, %156 : vector<1x1xf32>
    %cst_45 = arith.constant 9.99999974E-6 : f32
    %158 = vector.broadcast %cst_45 : f32 to vector<1x1xf32>
    %159 = arith.select %157, %158, %155 : vector<1x1xi1>, vector<1x1xf32>
    %160 = vector.broadcast %159 : vector<1x1xf32> to vector<1x2304xf32>
    %161 = arith.cmpf oeq, %153, %160 : vector<1x2304xf32>
    %162 = arith.extui %161 : vector<1x2304xi1> to vector<1x2304xi32>
    %163 = arith.sitofp %162 : vector<1x2304xi32> to vector<1x2304xf32>
    %164 = arith.addf %88, %163 : vector<1x2304xf32>
    %c2_i32_46 = arith.constant 2 : i32
    %c8_i32_47 = arith.constant 8 : i32
    %165 = arith.muli %arg0, %c8_i32_47 : i32
    %166 = arith.addi %165, %c2_i32_46 : i32
    %c5_i32_48 = arith.constant 5 : i32
    %167 = arith.muli %166, %c5_i32_48 : i32
    %c0_i32_49 = arith.constant 0 : i32
    %168 = arith.addi %167, %c0_i32_49 : i32
    %169 = arith.index_cast %168 : i32 to index
    %170 = memref.load %arg1[%169] : memref<80xf32, #tpu.memory_space<smem>>
    %c1_i32_50 = arith.constant 1 : i32
    %171 = arith.addi %167, %c1_i32_50 : i32
    %172 = arith.index_cast %171 : i32 to index
    %173 = memref.load %arg1[%172] : memref<80xf32, #tpu.memory_space<smem>>
    %c2_i32_51 = arith.constant 2 : i32
    %174 = arith.addi %167, %c2_i32_51 : i32
    %175 = arith.index_cast %174 : i32 to index
    %176 = memref.load %arg1[%175] : memref<80xf32, #tpu.memory_space<smem>>
    %c3_i32_52 = arith.constant 3 : i32
    %177 = arith.addi %167, %c3_i32_52 : i32
    %178 = arith.index_cast %177 : i32 to index
    %179 = memref.load %arg1[%178] : memref<80xf32, #tpu.memory_space<smem>>
    %180 = arith.subf %176, %170 : f32
    %cst_53 = arith.constant 1.000000e+00 : f32
    %181 = arith.addf %180, %cst_53 : f32
    %182 = arith.subf %179, %173 : f32
    %cst_54 = arith.constant 1.000000e+00 : f32
    %183 = arith.addf %182, %cst_54 : f32
    %184 = arith.mulf %181, %183 : f32
    %cst_55 = arith.constant 1.000000e+00 : f32
    %185 = arith.cmpf oeq, %181, %cst_55 : f32
    %cst_56 = arith.constant 1.000000e+00 : f32
    %186 = arith.cmpf oeq, %183, %cst_56 : f32
    %187 = arith.andi %185, %186 : i1
    %188 = arith.extui %187 : i1 to i32
    %189 = arith.sitofp %188 : i32 to f32
    %190 = vector.broadcast %176 : f32 to vector<1x2304xf32>
    %191 = arith.minimumf %2, %190 : vector<1x2304xf32>
    %192 = vector.broadcast %170 : f32 to vector<1x2304xf32>
    %193 = arith.maximumf %0, %192 : vector<1x2304xf32>
    %194 = arith.subf %191, %193 : vector<1x2304xf32>
    %cst_57 = arith.constant 1.000000e+00 : f32
    %195 = vector.broadcast %cst_57 : f32 to vector<1x2304xf32>
    %196 = arith.addf %194, %195 : vector<1x2304xf32>
    %cst_58 = arith.constant 0.000000e+00 : f32
    %197 = vector.broadcast %cst_58 : f32 to vector<1x2304xf32>
    %198 = arith.maximumf %196, %197 : vector<1x2304xf32>
    %199 = vector.broadcast %179 : f32 to vector<1x2304xf32>
    %200 = arith.minimumf %3, %199 : vector<1x2304xf32>
    %201 = vector.broadcast %173 : f32 to vector<1x2304xf32>
    %202 = arith.maximumf %1, %201 : vector<1x2304xf32>
    %203 = arith.subf %200, %202 : vector<1x2304xf32>
    %cst_59 = arith.constant 1.000000e+00 : f32
    %204 = vector.broadcast %cst_59 : f32 to vector<1x2304xf32>
    %205 = arith.addf %203, %204 : vector<1x2304xf32>
    %cst_60 = arith.constant 0.000000e+00 : f32
    %206 = vector.broadcast %cst_60 : f32 to vector<1x2304xf32>
    %207 = arith.maximumf %205, %206 : vector<1x2304xf32>
    %208 = arith.mulf %198, %207 : vector<1x2304xf32>
    %209 = vector.broadcast %184 : f32 to vector<1x2304xf32>
    %210 = arith.subf %209, %208 : vector<1x2304xf32>
    %211 = arith.addf %4, %210 : vector<1x2304xf32>
    %212 = arith.divf %208, %211 : vector<1x2304xf32>
    %cst_61 = arith.constant 1.000000e+00 : f32
    %213 = arith.subf %cst_61, %189 : f32
    %214 = vector.broadcast %213 : f32 to vector<1x2304xf32>
    %215 = arith.mulf %212, %214 : vector<1x2304xf32>
    %cst_62 = arith.constant -1.000000e+00 : f32
    %216 = vector.broadcast %cst_62 : f32 to vector<1x2304xf32>
    %217 = arith.select %10, %216, %215 : vector<1x2304xi1>, vector<1x2304xf32>
    %218 = arith.cmpf ogt, %217, %143 : vector<1x2304xf32>
    %219 = arith.select %218, %217, %143 : vector<1x2304xi1>, vector<1x2304xf32>
    %220 = vector.broadcast %170 : f32 to vector<1x2304xf32>
    %221 = arith.select %218, %220, %145 : vector<1x2304xi1>, vector<1x2304xf32>
    %222 = vector.broadcast %173 : f32 to vector<1x2304xf32>
    %223 = arith.select %218, %222, %147 : vector<1x2304xi1>, vector<1x2304xf32>
    %224 = vector.broadcast %176 : f32 to vector<1x2304xf32>
    %225 = arith.select %218, %224, %149 : vector<1x2304xi1>, vector<1x2304xf32>
    %226 = vector.broadcast %179 : f32 to vector<1x2304xf32>
    %227 = arith.select %218, %226, %151 : vector<1x2304xi1>, vector<1x2304xf32>
    %cst_63 = arith.constant -1.000000e+30 : f32
    %228 = vector.broadcast %cst_63 : f32 to vector<1x2304xf32>
    %229 = arith.select %7, %217, %228 : vector<1x2304xi1>, vector<1x2304xf32>
    %cst_64 = arith.constant dense<0xFF800000> : vector<1xf32>
    %230 = vector.multi_reduction <maximumf>, %229, %cst_64 [1] : vector<1x2304xf32> to vector<1xf32>
    %231 = vector.shape_cast %230 : vector<1xf32> to vector<1x1xf32>
    %cst_65 = arith.constant 0.000000e+00 : f32
    %232 = vector.broadcast %cst_65 : f32 to vector<1x1xf32>
    %233 = arith.cmpf oeq, %231, %232 : vector<1x1xf32>
    %cst_66 = arith.constant 9.99999974E-6 : f32
    %234 = vector.broadcast %cst_66 : f32 to vector<1x1xf32>
    %235 = arith.select %233, %234, %231 : vector<1x1xi1>, vector<1x1xf32>
    %236 = vector.broadcast %235 : vector<1x1xf32> to vector<1x2304xf32>
    %237 = arith.cmpf oeq, %229, %236 : vector<1x2304xf32>
    %238 = arith.extui %237 : vector<1x2304xi1> to vector<1x2304xi32>
    %239 = arith.sitofp %238 : vector<1x2304xi32> to vector<1x2304xf32>
    %240 = arith.addf %164, %239 : vector<1x2304xf32>
    %c3_i32_67 = arith.constant 3 : i32
    %c8_i32_68 = arith.constant 8 : i32
    %241 = arith.muli %arg0, %c8_i32_68 : i32
    %242 = arith.addi %241, %c3_i32_67 : i32
    %c5_i32_69 = arith.constant 5 : i32
    %243 = arith.muli %242, %c5_i32_69 : i32
    %c0_i32_70 = arith.constant 0 : i32
    %244 = arith.addi %243, %c0_i32_70 : i32
    %245 = arith.index_cast %244 : i32 to index
    %246 = memref.load %arg1[%245] : memref<80xf32, #tpu.memory_space<smem>>
    %c1_i32_71 = arith.constant 1 : i32
    %247 = arith.addi %243, %c1_i32_71 : i32
    %248 = arith.index_cast %247 : i32 to index
    %249 = memref.load %arg1[%248] : memref<80xf32, #tpu.memory_space<smem>>
    %c2_i32_72 = arith.constant 2 : i32
    %250 = arith.addi %243, %c2_i32_72 : i32
    %251 = arith.index_cast %250 : i32 to index
    %252 = memref.load %arg1[%251] : memref<80xf32, #tpu.memory_space<smem>>
    %c3_i32_73 = arith.constant 3 : i32
    %253 = arith.addi %243, %c3_i32_73 : i32
    %254 = arith.index_cast %253 : i32 to index
    %255 = memref.load %arg1[%254] : memref<80xf32, #tpu.memory_space<smem>>
    %256 = arith.subf %252, %246 : f32
    %cst_74 = arith.constant 1.000000e+00 : f32
    %257 = arith.addf %256, %cst_74 : f32
    %258 = arith.subf %255, %249 : f32
    %cst_75 = arith.constant 1.000000e+00 : f32
    %259 = arith.addf %258, %cst_75 : f32
    %260 = arith.mulf %257, %259 : f32
    %cst_76 = arith.constant 1.000000e+00 : f32
    %261 = arith.cmpf oeq, %257, %cst_76 : f32
    %cst_77 = arith.constant 1.000000e+00 : f32
    %262 = arith.cmpf oeq, %259, %cst_77 : f32
    %263 = arith.andi %261, %262 : i1
    %264 = arith.extui %263 : i1 to i32
    %265 = arith.sitofp %264 : i32 to f32
    %266 = vector.broadcast %252 : f32 to vector<1x2304xf32>
    %267 = arith.minimumf %2, %266 : vector<1x2304xf32>
    %268 = vector.broadcast %246 : f32 to vector<1x2304xf32>
    %269 = arith.maximumf %0, %268 : vector<1x2304xf32>
    %270 = arith.subf %267, %269 : vector<1x2304xf32>
    %cst_78 = arith.constant 1.000000e+00 : f32
    %271 = vector.broadcast %cst_78 : f32 to vector<1x2304xf32>
    %272 = arith.addf %270, %271 : vector<1x2304xf32>
    %cst_79 = arith.constant 0.000000e+00 : f32
    %273 = vector.broadcast %cst_79 : f32 to vector<1x2304xf32>
    %274 = arith.maximumf %272, %273 : vector<1x2304xf32>
    %275 = vector.broadcast %255 : f32 to vector<1x2304xf32>
    %276 = arith.minimumf %3, %275 : vector<1x2304xf32>
    %277 = vector.broadcast %249 : f32 to vector<1x2304xf32>
    %278 = arith.maximumf %1, %277 : vector<1x2304xf32>
    %279 = arith.subf %276, %278 : vector<1x2304xf32>
    %cst_80 = arith.constant 1.000000e+00 : f32
    %280 = vector.broadcast %cst_80 : f32 to vector<1x2304xf32>
    %281 = arith.addf %279, %280 : vector<1x2304xf32>
    %cst_81 = arith.constant 0.000000e+00 : f32
    %282 = vector.broadcast %cst_81 : f32 to vector<1x2304xf32>
    %283 = arith.maximumf %281, %282 : vector<1x2304xf32>
    %284 = arith.mulf %274, %283 : vector<1x2304xf32>
    %285 = vector.broadcast %260 : f32 to vector<1x2304xf32>
    %286 = arith.subf %285, %284 : vector<1x2304xf32>
    %287 = arith.addf %4, %286 : vector<1x2304xf32>
    %288 = arith.divf %284, %287 : vector<1x2304xf32>
    %cst_82 = arith.constant 1.000000e+00 : f32
    %289 = arith.subf %cst_82, %265 : f32
    %290 = vector.broadcast %289 : f32 to vector<1x2304xf32>
    %291 = arith.mulf %288, %290 : vector<1x2304xf32>
    %cst_83 = arith.constant -1.000000e+00 : f32
    %292 = vector.broadcast %cst_83 : f32 to vector<1x2304xf32>
    %293 = arith.select %10, %292, %291 : vector<1x2304xi1>, vector<1x2304xf32>
    %294 = arith.cmpf ogt, %293, %219 : vector<1x2304xf32>
    %295 = arith.select %294, %293, %219 : vector<1x2304xi1>, vector<1x2304xf32>
    %296 = vector.broadcast %246 : f32 to vector<1x2304xf32>
    %297 = arith.select %294, %296, %221 : vector<1x2304xi1>, vector<1x2304xf32>
    %298 = vector.broadcast %249 : f32 to vector<1x2304xf32>
    %299 = arith.select %294, %298, %223 : vector<1x2304xi1>, vector<1x2304xf32>
    %300 = vector.broadcast %252 : f32 to vector<1x2304xf32>
    %301 = arith.select %294, %300, %225 : vector<1x2304xi1>, vector<1x2304xf32>
    %302 = vector.broadcast %255 : f32 to vector<1x2304xf32>
    %303 = arith.select %294, %302, %227 : vector<1x2304xi1>, vector<1x2304xf32>
    %cst_84 = arith.constant -1.000000e+30 : f32
    %304 = vector.broadcast %cst_84 : f32 to vector<1x2304xf32>
    %305 = arith.select %7, %293, %304 : vector<1x2304xi1>, vector<1x2304xf32>
    %cst_85 = arith.constant dense<0xFF800000> : vector<1xf32>
    %306 = vector.multi_reduction <maximumf>, %305, %cst_85 [1] : vector<1x2304xf32> to vector<1xf32>
    %307 = vector.shape_cast %306 : vector<1xf32> to vector<1x1xf32>
    %cst_86 = arith.constant 0.000000e+00 : f32
    %308 = vector.broadcast %cst_86 : f32 to vector<1x1xf32>
    %309 = arith.cmpf oeq, %307, %308 : vector<1x1xf32>
    %cst_87 = arith.constant 9.99999974E-6 : f32
    %310 = vector.broadcast %cst_87 : f32 to vector<1x1xf32>
    %311 = arith.select %309, %310, %307 : vector<1x1xi1>, vector<1x1xf32>
    %312 = vector.broadcast %311 : vector<1x1xf32> to vector<1x2304xf32>
    %313 = arith.cmpf oeq, %305, %312 : vector<1x2304xf32>
    %314 = arith.extui %313 : vector<1x2304xi1> to vector<1x2304xi32>
    %315 = arith.sitofp %314 : vector<1x2304xi32> to vector<1x2304xf32>
    %316 = arith.addf %240, %315 : vector<1x2304xf32>
    %c4_i32 = arith.constant 4 : i32
    %c8_i32_88 = arith.constant 8 : i32
    %317 = arith.muli %arg0, %c8_i32_88 : i32
    %318 = arith.addi %317, %c4_i32 : i32
    %c5_i32_89 = arith.constant 5 : i32
    %319 = arith.muli %318, %c5_i32_89 : i32
    %c0_i32_90 = arith.constant 0 : i32
    %320 = arith.addi %319, %c0_i32_90 : i32
    %321 = arith.index_cast %320 : i32 to index
    %322 = memref.load %arg1[%321] : memref<80xf32, #tpu.memory_space<smem>>
    %c1_i32_91 = arith.constant 1 : i32
    %323 = arith.addi %319, %c1_i32_91 : i32
    %324 = arith.index_cast %323 : i32 to index
    %325 = memref.load %arg1[%324] : memref<80xf32, #tpu.memory_space<smem>>
    %c2_i32_92 = arith.constant 2 : i32
    %326 = arith.addi %319, %c2_i32_92 : i32
    %327 = arith.index_cast %326 : i32 to index
    %328 = memref.load %arg1[%327] : memref<80xf32, #tpu.memory_space<smem>>
    %c3_i32_93 = arith.constant 3 : i32
    %329 = arith.addi %319, %c3_i32_93 : i32
    %330 = arith.index_cast %329 : i32 to index
    %331 = memref.load %arg1[%330] : memref<80xf32, #tpu.memory_space<smem>>
    %332 = arith.subf %328, %322 : f32
    %cst_94 = arith.constant 1.000000e+00 : f32
    %333 = arith.addf %332, %cst_94 : f32
    %334 = arith.subf %331, %325 : f32
    %cst_95 = arith.constant 1.000000e+00 : f32
    %335 = arith.addf %334, %cst_95 : f32
    %336 = arith.mulf %333, %335 : f32
    %cst_96 = arith.constant 1.000000e+00 : f32
    %337 = arith.cmpf oeq, %333, %cst_96 : f32
    %cst_97 = arith.constant 1.000000e+00 : f32
    %338 = arith.cmpf oeq, %335, %cst_97 : f32
    %339 = arith.andi %337, %338 : i1
    %340 = arith.extui %339 : i1 to i32
    %341 = arith.sitofp %340 : i32 to f32
    %342 = vector.broadcast %328 : f32 to vector<1x2304xf32>
    %343 = arith.minimumf %2, %342 : vector<1x2304xf32>
    %344 = vector.broadcast %322 : f32 to vector<1x2304xf32>
    %345 = arith.maximumf %0, %344 : vector<1x2304xf32>
    %346 = arith.subf %343, %345 : vector<1x2304xf32>
    %cst_98 = arith.constant 1.000000e+00 : f32
    %347 = vector.broadcast %cst_98 : f32 to vector<1x2304xf32>
    %348 = arith.addf %346, %347 : vector<1x2304xf32>
    %cst_99 = arith.constant 0.000000e+00 : f32
    %349 = vector.broadcast %cst_99 : f32 to vector<1x2304xf32>
    %350 = arith.maximumf %348, %349 : vector<1x2304xf32>
    %351 = vector.broadcast %331 : f32 to vector<1x2304xf32>
    %352 = arith.minimumf %3, %351 : vector<1x2304xf32>
    %353 = vector.broadcast %325 : f32 to vector<1x2304xf32>
    %354 = arith.maximumf %1, %353 : vector<1x2304xf32>
    %355 = arith.subf %352, %354 : vector<1x2304xf32>
    %cst_100 = arith.constant 1.000000e+00 : f32
    %356 = vector.broadcast %cst_100 : f32 to vector<1x2304xf32>
    %357 = arith.addf %355, %356 : vector<1x2304xf32>
    %cst_101 = arith.constant 0.000000e+00 : f32
    %358 = vector.broadcast %cst_101 : f32 to vector<1x2304xf32>
    %359 = arith.maximumf %357, %358 : vector<1x2304xf32>
    %360 = arith.mulf %350, %359 : vector<1x2304xf32>
    %361 = vector.broadcast %336 : f32 to vector<1x2304xf32>
    %362 = arith.subf %361, %360 : vector<1x2304xf32>
    %363 = arith.addf %4, %362 : vector<1x2304xf32>
    %364 = arith.divf %360, %363 : vector<1x2304xf32>
    %cst_102 = arith.constant 1.000000e+00 : f32
    %365 = arith.subf %cst_102, %341 : f32
    %366 = vector.broadcast %365 : f32 to vector<1x2304xf32>
    %367 = arith.mulf %364, %366 : vector<1x2304xf32>
    %cst_103 = arith.constant -1.000000e+00 : f32
    %368 = vector.broadcast %cst_103 : f32 to vector<1x2304xf32>
    %369 = arith.select %10, %368, %367 : vector<1x2304xi1>, vector<1x2304xf32>
    %370 = arith.cmpf ogt, %369, %295 : vector<1x2304xf32>
    %371 = arith.select %370, %369, %295 : vector<1x2304xi1>, vector<1x2304xf32>
    %372 = vector.broadcast %322 : f32 to vector<1x2304xf32>
    %373 = arith.select %370, %372, %297 : vector<1x2304xi1>, vector<1x2304xf32>
    %374 = vector.broadcast %325 : f32 to vector<1x2304xf32>
    %375 = arith.select %370, %374, %299 : vector<1x2304xi1>, vector<1x2304xf32>
    %376 = vector.broadcast %328 : f32 to vector<1x2304xf32>
    %377 = arith.select %370, %376, %301 : vector<1x2304xi1>, vector<1x2304xf32>
    %378 = vector.broadcast %331 : f32 to vector<1x2304xf32>
    %379 = arith.select %370, %378, %303 : vector<1x2304xi1>, vector<1x2304xf32>
    %cst_104 = arith.constant -1.000000e+30 : f32
    %380 = vector.broadcast %cst_104 : f32 to vector<1x2304xf32>
    %381 = arith.select %7, %369, %380 : vector<1x2304xi1>, vector<1x2304xf32>
    %cst_105 = arith.constant dense<0xFF800000> : vector<1xf32>
    %382 = vector.multi_reduction <maximumf>, %381, %cst_105 [1] : vector<1x2304xf32> to vector<1xf32>
    %383 = vector.shape_cast %382 : vector<1xf32> to vector<1x1xf32>
    %cst_106 = arith.constant 0.000000e+00 : f32
    %384 = vector.broadcast %cst_106 : f32 to vector<1x1xf32>
    %385 = arith.cmpf oeq, %383, %384 : vector<1x1xf32>
    %cst_107 = arith.constant 9.99999974E-6 : f32
    %386 = vector.broadcast %cst_107 : f32 to vector<1x1xf32>
    %387 = arith.select %385, %386, %383 : vector<1x1xi1>, vector<1x1xf32>
    %388 = vector.broadcast %387 : vector<1x1xf32> to vector<1x2304xf32>
    %389 = arith.cmpf oeq, %381, %388 : vector<1x2304xf32>
    %390 = arith.extui %389 : vector<1x2304xi1> to vector<1x2304xi32>
    %391 = arith.sitofp %390 : vector<1x2304xi32> to vector<1x2304xf32>
    %392 = arith.addf %316, %391 : vector<1x2304xf32>
    %c5_i32_108 = arith.constant 5 : i32
    %c8_i32_109 = arith.constant 8 : i32
    %393 = arith.muli %arg0, %c8_i32_109 : i32
    %394 = arith.addi %393, %c5_i32_108 : i32
    %c5_i32_110 = arith.constant 5 : i32
    %395 = arith.muli %394, %c5_i32_110 : i32
    %c0_i32_111 = arith.constant 0 : i32
    %396 = arith.addi %395, %c0_i32_111 : i32
    %397 = arith.index_cast %396 : i32 to index
    %398 = memref.load %arg1[%397] : memref<80xf32, #tpu.memory_space<smem>>
    %c1_i32_112 = arith.constant 1 : i32
    %399 = arith.addi %395, %c1_i32_112 : i32
    %400 = arith.index_cast %399 : i32 to index
    %401 = memref.load %arg1[%400] : memref<80xf32, #tpu.memory_space<smem>>
    %c2_i32_113 = arith.constant 2 : i32
    %402 = arith.addi %395, %c2_i32_113 : i32
    %403 = arith.index_cast %402 : i32 to index
    %404 = memref.load %arg1[%403] : memref<80xf32, #tpu.memory_space<smem>>
    %c3_i32_114 = arith.constant 3 : i32
    %405 = arith.addi %395, %c3_i32_114 : i32
    %406 = arith.index_cast %405 : i32 to index
    %407 = memref.load %arg1[%406] : memref<80xf32, #tpu.memory_space<smem>>
    %408 = arith.subf %404, %398 : f32
    %cst_115 = arith.constant 1.000000e+00 : f32
    %409 = arith.addf %408, %cst_115 : f32
    %410 = arith.subf %407, %401 : f32
    %cst_116 = arith.constant 1.000000e+00 : f32
    %411 = arith.addf %410, %cst_116 : f32
    %412 = arith.mulf %409, %411 : f32
    %cst_117 = arith.constant 1.000000e+00 : f32
    %413 = arith.cmpf oeq, %409, %cst_117 : f32
    %cst_118 = arith.constant 1.000000e+00 : f32
    %414 = arith.cmpf oeq, %411, %cst_118 : f32
    %415 = arith.andi %413, %414 : i1
    %416 = arith.extui %415 : i1 to i32
    %417 = arith.sitofp %416 : i32 to f32
    %418 = vector.broadcast %404 : f32 to vector<1x2304xf32>
    %419 = arith.minimumf %2, %418 : vector<1x2304xf32>
    %420 = vector.broadcast %398 : f32 to vector<1x2304xf32>
    %421 = arith.maximumf %0, %420 : vector<1x2304xf32>
    %422 = arith.subf %419, %421 : vector<1x2304xf32>
    %cst_119 = arith.constant 1.000000e+00 : f32
    %423 = vector.broadcast %cst_119 : f32 to vector<1x2304xf32>
    %424 = arith.addf %422, %423 : vector<1x2304xf32>
    %cst_120 = arith.constant 0.000000e+00 : f32
    %425 = vector.broadcast %cst_120 : f32 to vector<1x2304xf32>
    %426 = arith.maximumf %424, %425 : vector<1x2304xf32>
    %427 = vector.broadcast %407 : f32 to vector<1x2304xf32>
    %428 = arith.minimumf %3, %427 : vector<1x2304xf32>
    %429 = vector.broadcast %401 : f32 to vector<1x2304xf32>
    %430 = arith.maximumf %1, %429 : vector<1x2304xf32>
    %431 = arith.subf %428, %430 : vector<1x2304xf32>
    %cst_121 = arith.constant 1.000000e+00 : f32
    %432 = vector.broadcast %cst_121 : f32 to vector<1x2304xf32>
    %433 = arith.addf %431, %432 : vector<1x2304xf32>
    %cst_122 = arith.constant 0.000000e+00 : f32
    %434 = vector.broadcast %cst_122 : f32 to vector<1x2304xf32>
    %435 = arith.maximumf %433, %434 : vector<1x2304xf32>
    %436 = arith.mulf %426, %435 : vector<1x2304xf32>
    %437 = vector.broadcast %412 : f32 to vector<1x2304xf32>
    %438 = arith.subf %437, %436 : vector<1x2304xf32>
    %439 = arith.addf %4, %438 : vector<1x2304xf32>
    %440 = arith.divf %436, %439 : vector<1x2304xf32>
    %cst_123 = arith.constant 1.000000e+00 : f32
    %441 = arith.subf %cst_123, %417 : f32
    %442 = vector.broadcast %441 : f32 to vector<1x2304xf32>
    %443 = arith.mulf %440, %442 : vector<1x2304xf32>
    %cst_124 = arith.constant -1.000000e+00 : f32
    %444 = vector.broadcast %cst_124 : f32 to vector<1x2304xf32>
    %445 = arith.select %10, %444, %443 : vector<1x2304xi1>, vector<1x2304xf32>
    %446 = arith.cmpf ogt, %445, %371 : vector<1x2304xf32>
    %447 = arith.select %446, %445, %371 : vector<1x2304xi1>, vector<1x2304xf32>
    %448 = vector.broadcast %398 : f32 to vector<1x2304xf32>
    %449 = arith.select %446, %448, %373 : vector<1x2304xi1>, vector<1x2304xf32>
    %450 = vector.broadcast %401 : f32 to vector<1x2304xf32>
    %451 = arith.select %446, %450, %375 : vector<1x2304xi1>, vector<1x2304xf32>
    %452 = vector.broadcast %404 : f32 to vector<1x2304xf32>
    %453 = arith.select %446, %452, %377 : vector<1x2304xi1>, vector<1x2304xf32>
    %454 = vector.broadcast %407 : f32 to vector<1x2304xf32>
    %455 = arith.select %446, %454, %379 : vector<1x2304xi1>, vector<1x2304xf32>
    %cst_125 = arith.constant -1.000000e+30 : f32
    %456 = vector.broadcast %cst_125 : f32 to vector<1x2304xf32>
    %457 = arith.select %7, %445, %456 : vector<1x2304xi1>, vector<1x2304xf32>
    %cst_126 = arith.constant dense<0xFF800000> : vector<1xf32>
    %458 = vector.multi_reduction <maximumf>, %457, %cst_126 [1] : vector<1x2304xf32> to vector<1xf32>
    %459 = vector.shape_cast %458 : vector<1xf32> to vector<1x1xf32>
    %cst_127 = arith.constant 0.000000e+00 : f32
    %460 = vector.broadcast %cst_127 : f32 to vector<1x1xf32>
    %461 = arith.cmpf oeq, %459, %460 : vector<1x1xf32>
    %cst_128 = arith.constant 9.99999974E-6 : f32
    %462 = vector.broadcast %cst_128 : f32 to vector<1x1xf32>
    %463 = arith.select %461, %462, %459 : vector<1x1xi1>, vector<1x1xf32>
    %464 = vector.broadcast %463 : vector<1x1xf32> to vector<1x2304xf32>
    %465 = arith.cmpf oeq, %457, %464 : vector<1x2304xf32>
    %466 = arith.extui %465 : vector<1x2304xi1> to vector<1x2304xi32>
    %467 = arith.sitofp %466 : vector<1x2304xi32> to vector<1x2304xf32>
    %468 = arith.addf %392, %467 : vector<1x2304xf32>
    %c6_i32 = arith.constant 6 : i32
    %c8_i32_129 = arith.constant 8 : i32
    %469 = arith.muli %arg0, %c8_i32_129 : i32
    %470 = arith.addi %469, %c6_i32 : i32
    %c5_i32_130 = arith.constant 5 : i32
    %471 = arith.muli %470, %c5_i32_130 : i32
    %c0_i32_131 = arith.constant 0 : i32
    %472 = arith.addi %471, %c0_i32_131 : i32
    %473 = arith.index_cast %472 : i32 to index
    %474 = memref.load %arg1[%473] : memref<80xf32, #tpu.memory_space<smem>>
    %c1_i32_132 = arith.constant 1 : i32
    %475 = arith.addi %471, %c1_i32_132 : i32
    %476 = arith.index_cast %475 : i32 to index
    %477 = memref.load %arg1[%476] : memref<80xf32, #tpu.memory_space<smem>>
    %c2_i32_133 = arith.constant 2 : i32
    %478 = arith.addi %471, %c2_i32_133 : i32
    %479 = arith.index_cast %478 : i32 to index
    %480 = memref.load %arg1[%479] : memref<80xf32, #tpu.memory_space<smem>>
    %c3_i32_134 = arith.constant 3 : i32
    %481 = arith.addi %471, %c3_i32_134 : i32
    %482 = arith.index_cast %481 : i32 to index
    %483 = memref.load %arg1[%482] : memref<80xf32, #tpu.memory_space<smem>>
    %484 = arith.subf %480, %474 : f32
    %cst_135 = arith.constant 1.000000e+00 : f32
    %485 = arith.addf %484, %cst_135 : f32
    %486 = arith.subf %483, %477 : f32
    %cst_136 = arith.constant 1.000000e+00 : f32
    %487 = arith.addf %486, %cst_136 : f32
    %488 = arith.mulf %485, %487 : f32
    %cst_137 = arith.constant 1.000000e+00 : f32
    %489 = arith.cmpf oeq, %485, %cst_137 : f32
    %cst_138 = arith.constant 1.000000e+00 : f32
    %490 = arith.cmpf oeq, %487, %cst_138 : f32
    %491 = arith.andi %489, %490 : i1
    %492 = arith.extui %491 : i1 to i32
    %493 = arith.sitofp %492 : i32 to f32
    %494 = vector.broadcast %480 : f32 to vector<1x2304xf32>
    %495 = arith.minimumf %2, %494 : vector<1x2304xf32>
    %496 = vector.broadcast %474 : f32 to vector<1x2304xf32>
    %497 = arith.maximumf %0, %496 : vector<1x2304xf32>
    %498 = arith.subf %495, %497 : vector<1x2304xf32>
    %cst_139 = arith.constant 1.000000e+00 : f32
    %499 = vector.broadcast %cst_139 : f32 to vector<1x2304xf32>
    %500 = arith.addf %498, %499 : vector<1x2304xf32>
    %cst_140 = arith.constant 0.000000e+00 : f32
    %501 = vector.broadcast %cst_140 : f32 to vector<1x2304xf32>
    %502 = arith.maximumf %500, %501 : vector<1x2304xf32>
    %503 = vector.broadcast %483 : f32 to vector<1x2304xf32>
    %504 = arith.minimumf %3, %503 : vector<1x2304xf32>
    %505 = vector.broadcast %477 : f32 to vector<1x2304xf32>
    %506 = arith.maximumf %1, %505 : vector<1x2304xf32>
    %507 = arith.subf %504, %506 : vector<1x2304xf32>
    %cst_141 = arith.constant 1.000000e+00 : f32
    %508 = vector.broadcast %cst_141 : f32 to vector<1x2304xf32>
    %509 = arith.addf %507, %508 : vector<1x2304xf32>
    %cst_142 = arith.constant 0.000000e+00 : f32
    %510 = vector.broadcast %cst_142 : f32 to vector<1x2304xf32>
    %511 = arith.maximumf %509, %510 : vector<1x2304xf32>
    %512 = arith.mulf %502, %511 : vector<1x2304xf32>
    %513 = vector.broadcast %488 : f32 to vector<1x2304xf32>
    %514 = arith.subf %513, %512 : vector<1x2304xf32>
    %515 = arith.addf %4, %514 : vector<1x2304xf32>
    %516 = arith.divf %512, %515 : vector<1x2304xf32>
    %cst_143 = arith.constant 1.000000e+00 : f32
    %517 = arith.subf %cst_143, %493 : f32
    %518 = vector.broadcast %517 : f32 to vector<1x2304xf32>
    %519 = arith.mulf %516, %518 : vector<1x2304xf32>
    %cst_144 = arith.constant -1.000000e+00 : f32
    %520 = vector.broadcast %cst_144 : f32 to vector<1x2304xf32>
    %521 = arith.select %10, %520, %519 : vector<1x2304xi1>, vector<1x2304xf32>
    %522 = arith.cmpf ogt, %521, %447 : vector<1x2304xf32>
    %523 = arith.select %522, %521, %447 : vector<1x2304xi1>, vector<1x2304xf32>
    %524 = vector.broadcast %474 : f32 to vector<1x2304xf32>
    %525 = arith.select %522, %524, %449 : vector<1x2304xi1>, vector<1x2304xf32>
    %526 = vector.broadcast %477 : f32 to vector<1x2304xf32>
    %527 = arith.select %522, %526, %451 : vector<1x2304xi1>, vector<1x2304xf32>
    %528 = vector.broadcast %480 : f32 to vector<1x2304xf32>
    %529 = arith.select %522, %528, %453 : vector<1x2304xi1>, vector<1x2304xf32>
    %530 = vector.broadcast %483 : f32 to vector<1x2304xf32>
    %531 = arith.select %522, %530, %455 : vector<1x2304xi1>, vector<1x2304xf32>
    %cst_145 = arith.constant -1.000000e+30 : f32
    %532 = vector.broadcast %cst_145 : f32 to vector<1x2304xf32>
    %533 = arith.select %7, %521, %532 : vector<1x2304xi1>, vector<1x2304xf32>
    %cst_146 = arith.constant dense<0xFF800000> : vector<1xf32>
    %534 = vector.multi_reduction <maximumf>, %533, %cst_146 [1] : vector<1x2304xf32> to vector<1xf32>
    %535 = vector.shape_cast %534 : vector<1xf32> to vector<1x1xf32>
    %cst_147 = arith.constant 0.000000e+00 : f32
    %536 = vector.broadcast %cst_147 : f32 to vector<1x1xf32>
    %537 = arith.cmpf oeq, %535, %536 : vector<1x1xf32>
    %cst_148 = arith.constant 9.99999974E-6 : f32
    %538 = vector.broadcast %cst_148 : f32 to vector<1x1xf32>
    %539 = arith.select %537, %538, %535 : vector<1x1xi1>, vector<1x1xf32>
    %540 = vector.broadcast %539 : vector<1x1xf32> to vector<1x2304xf32>
    %541 = arith.cmpf oeq, %533, %540 : vector<1x2304xf32>
    %542 = arith.extui %541 : vector<1x2304xi1> to vector<1x2304xi32>
    %543 = arith.sitofp %542 : vector<1x2304xi32> to vector<1x2304xf32>
    %544 = arith.addf %468, %543 : vector<1x2304xf32>
    %c7_i32 = arith.constant 7 : i32
    %c8_i32_149 = arith.constant 8 : i32
    %545 = arith.muli %arg0, %c8_i32_149 : i32
    %546 = arith.addi %545, %c7_i32 : i32
    %c5_i32_150 = arith.constant 5 : i32
    %547 = arith.muli %546, %c5_i32_150 : i32
    %c0_i32_151 = arith.constant 0 : i32
    %548 = arith.addi %547, %c0_i32_151 : i32
    %549 = arith.index_cast %548 : i32 to index
    %550 = memref.load %arg1[%549] : memref<80xf32, #tpu.memory_space<smem>>
    %c1_i32_152 = arith.constant 1 : i32
    %551 = arith.addi %547, %c1_i32_152 : i32
    %552 = arith.index_cast %551 : i32 to index
    %553 = memref.load %arg1[%552] : memref<80xf32, #tpu.memory_space<smem>>
    %c2_i32_153 = arith.constant 2 : i32
    %554 = arith.addi %547, %c2_i32_153 : i32
    %555 = arith.index_cast %554 : i32 to index
    %556 = memref.load %arg1[%555] : memref<80xf32, #tpu.memory_space<smem>>
    %c3_i32_154 = arith.constant 3 : i32
    %557 = arith.addi %547, %c3_i32_154 : i32
    %558 = arith.index_cast %557 : i32 to index
    %559 = memref.load %arg1[%558] : memref<80xf32, #tpu.memory_space<smem>>
    %560 = arith.subf %556, %550 : f32
    %cst_155 = arith.constant 1.000000e+00 : f32
    %561 = arith.addf %560, %cst_155 : f32
    %562 = arith.subf %559, %553 : f32
    %cst_156 = arith.constant 1.000000e+00 : f32
    %563 = arith.addf %562, %cst_156 : f32
    %564 = arith.mulf %561, %563 : f32
    %cst_157 = arith.constant 1.000000e+00 : f32
    %565 = arith.cmpf oeq, %561, %cst_157 : f32
    %cst_158 = arith.constant 1.000000e+00 : f32
    %566 = arith.cmpf oeq, %563, %cst_158 : f32
    %567 = arith.andi %565, %566 : i1
    %568 = arith.extui %567 : i1 to i32
    %569 = arith.sitofp %568 : i32 to f32
    %570 = vector.broadcast %556 : f32 to vector<1x2304xf32>
    %571 = arith.minimumf %2, %570 : vector<1x2304xf32>
    %572 = vector.broadcast %550 : f32 to vector<1x2304xf32>
    %573 = arith.maximumf %0, %572 : vector<1x2304xf32>
    %574 = arith.subf %571, %573 : vector<1x2304xf32>
    %cst_159 = arith.constant 1.000000e+00 : f32
    %575 = vector.broadcast %cst_159 : f32 to vector<1x2304xf32>
    %576 = arith.addf %574, %575 : vector<1x2304xf32>
    %cst_160 = arith.constant 0.000000e+00 : f32
    %577 = vector.broadcast %cst_160 : f32 to vector<1x2304xf32>
    %578 = arith.maximumf %576, %577 : vector<1x2304xf32>
    %579 = vector.broadcast %559 : f32 to vector<1x2304xf32>
    %580 = arith.minimumf %3, %579 : vector<1x2304xf32>
    %581 = vector.broadcast %553 : f32 to vector<1x2304xf32>
    %582 = arith.maximumf %1, %581 : vector<1x2304xf32>
    %583 = arith.subf %580, %582 : vector<1x2304xf32>
    %cst_161 = arith.constant 1.000000e+00 : f32
    %584 = vector.broadcast %cst_161 : f32 to vector<1x2304xf32>
    %585 = arith.addf %583, %584 : vector<1x2304xf32>
    %cst_162 = arith.constant 0.000000e+00 : f32
    %586 = vector.broadcast %cst_162 : f32 to vector<1x2304xf32>
    %587 = arith.maximumf %585, %586 : vector<1x2304xf32>
    %588 = arith.mulf %578, %587 : vector<1x2304xf32>
    %589 = vector.broadcast %564 : f32 to vector<1x2304xf32>
    %590 = arith.subf %589, %588 : vector<1x2304xf32>
    %591 = arith.addf %4, %590 : vector<1x2304xf32>
    %592 = arith.divf %588, %591 : vector<1x2304xf32>
    %cst_163 = arith.constant 1.000000e+00 : f32
    %593 = arith.subf %cst_163, %569 : f32
    %594 = vector.broadcast %593 : f32 to vector<1x2304xf32>
    %595 = arith.mulf %592, %594 : vector<1x2304xf32>
    %cst_164 = arith.constant -1.000000e+00 : f32
    %596 = vector.broadcast %cst_164 : f32 to vector<1x2304xf32>
    %597 = arith.select %10, %596, %595 : vector<1x2304xi1>, vector<1x2304xf32>
    %598 = arith.cmpf ogt, %597, %523 : vector<1x2304xf32>
    %599 = arith.select %598, %597, %523 : vector<1x2304xi1>, vector<1x2304xf32>
    %600 = vector.broadcast %550 : f32 to vector<1x2304xf32>
    %601 = arith.select %598, %600, %525 : vector<1x2304xi1>, vector<1x2304xf32>
    %602 = vector.broadcast %553 : f32 to vector<1x2304xf32>
    %603 = arith.select %598, %602, %527 : vector<1x2304xi1>, vector<1x2304xf32>
    %604 = vector.broadcast %556 : f32 to vector<1x2304xf32>
    %605 = arith.select %598, %604, %529 : vector<1x2304xi1>, vector<1x2304xf32>
    %606 = vector.broadcast %559 : f32 to vector<1x2304xf32>
    %607 = arith.select %598, %606, %531 : vector<1x2304xi1>, vector<1x2304xf32>
    %cst_165 = arith.constant -1.000000e+30 : f32
    %608 = vector.broadcast %cst_165 : f32 to vector<1x2304xf32>
    %609 = arith.select %7, %597, %608 : vector<1x2304xi1>, vector<1x2304xf32>
    %cst_166 = arith.constant dense<0xFF800000> : vector<1xf32>
    %610 = vector.multi_reduction <maximumf>, %609, %cst_166 [1] : vector<1x2304xf32> to vector<1xf32>
    %611 = vector.shape_cast %610 : vector<1xf32> to vector<1x1xf32>
    %cst_167 = arith.constant 0.000000e+00 : f32
    %612 = vector.broadcast %cst_167 : f32 to vector<1x1xf32>
    %613 = arith.cmpf oeq, %611, %612 : vector<1x1xf32>
    %cst_168 = arith.constant 9.99999974E-6 : f32
    %614 = vector.broadcast %cst_168 : f32 to vector<1x1xf32>
    %615 = arith.select %613, %614, %611 : vector<1x1xi1>, vector<1x1xf32>
    %616 = vector.broadcast %615 : vector<1x1xf32> to vector<1x2304xf32>
    %617 = arith.cmpf oeq, %609, %616 : vector<1x2304xf32>
    %618 = arith.extui %617 : vector<1x2304xi1> to vector<1x2304xi32>
    %619 = arith.sitofp %618 : vector<1x2304xi32> to vector<1x2304xf32>
    %620 = arith.addf %544, %619 : vector<1x2304xf32>
    %c8_i32_169 = arith.constant 8 : i32
    %cst_170 = arith.constant -1.000000e+00 : f32
    %621 = vector.broadcast %cst_170 : f32 to vector<1x2304xf32>
    %cst_171 = arith.constant 3.000000e-01 : f32
    %622 = vector.broadcast %cst_171 : f32 to vector<1x2304xf32>
    %623 = arith.cmpf olt, %599, %622 : vector<1x2304xf32>
    %cst_172 = arith.constant 0.000000e+00 : f32
    %624 = vector.broadcast %cst_172 : f32 to vector<1x2304xf32>
    %625 = arith.select %623, %624, %621 : vector<1x2304xi1>, vector<1x2304xf32>
    %cst_173 = arith.constant 0.000000e+00 : f32
    %626 = vector.broadcast %cst_173 : f32 to vector<1x2304xf32>
    %627 = arith.cmpf ogt, %620, %626 : vector<1x2304xf32>
    %cst_174 = arith.constant 1.000000e+00 : f32
    %628 = vector.broadcast %cst_174 : f32 to vector<1x2304xf32>
    %629 = arith.select %627, %628, %625 : vector<1x2304xi1>, vector<1x2304xf32>
    %cst_175 = arith.constant 0.699999988 : f32
    %630 = vector.broadcast %cst_175 : f32 to vector<1x2304xf32>
    %631 = arith.cmpf oge, %599, %630 : vector<1x2304xf32>
    %cst_176 = arith.constant 1.000000e+00 : f32
    %632 = vector.broadcast %cst_176 : f32 to vector<1x2304xf32>
    %633 = arith.select %631, %632, %629 : vector<1x2304xi1>, vector<1x2304xf32>
    %cst_177 = arith.constant -1.000000e+00 : f32
    %634 = vector.broadcast %cst_177 : f32 to vector<1x2304xf32>
    %635 = arith.select %7, %633, %634 : vector<1x2304xi1>, vector<1x2304xf32>
    %c0_178 = arith.constant 0 : index
    %c0_179 = arith.constant 0 : index
    %c0_180 = arith.constant 0 : index
    %636 = vector.load %arg4[%c0_178, %c0_179, %c0_180] : memref<1x1x2304xf32, #tpu.memory_space<vmem>>, vector<1x1x2304xf32>
    %637 = vector.shape_cast %636 : vector<1x1x2304xf32> to vector<1x2304xf32>
    %638 = vector.shape_cast %635 : vector<1x2304xf32> to vector<1x1x2304xf32>
    tpu.vector_store %arg4[%c0_178, %c0_179, %c0_180], %638 {strides = array<i32>} : memref<1x1x2304xf32, #tpu.memory_space<vmem>>, vector<1x1x2304xf32>,
    %639 = arith.subf %605, %601 : vector<1x2304xf32>
    %cst_181 = arith.constant 1.000000e+00 : f32
    %640 = vector.broadcast %cst_181 : f32 to vector<1x2304xf32>
    %641 = arith.addf %639, %640 : vector<1x2304xf32>
    %642 = arith.subf %607, %603 : vector<1x2304xf32>
    %cst_182 = arith.constant 1.000000e+00 : f32
    %643 = vector.broadcast %cst_182 : f32 to vector<1x2304xf32>
    %644 = arith.addf %642, %643 : vector<1x2304xf32>
    %cst_183 = arith.constant 5.000000e-01 : f32
    %645 = vector.broadcast %cst_183 : f32 to vector<1x2304xf32>
    %646 = arith.mulf %645, %641 : vector<1x2304xf32>
    %647 = arith.addf %601, %646 : vector<1x2304xf32>
    %cst_184 = arith.constant 5.000000e-01 : f32
    %648 = vector.broadcast %cst_184 : f32 to vector<1x2304xf32>
    %649 = arith.mulf %648, %644 : vector<1x2304xf32>
    %650 = arith.addf %603, %649 : vector<1x2304xf32>
    %c5 = arith.constant 5 : index
    %c0_185 = arith.constant 0 : index
    %651 = vector.load %arg2[%c5, %c0_185] : memref<16x2304xf32, #tpu.memory_space<vmem>>, vector<1x2304xf32>
    %652 = arith.subf %647, %651 : vector<1x2304xf32>
    %c7 = arith.constant 7 : index
    %c0_186 = arith.constant 0 : index
    %653 = vector.load %arg2[%c7, %c0_186] : memref<16x2304xf32, #tpu.memory_space<vmem>>, vector<1x2304xf32>
    %654 = arith.mulf %652, %653 : vector<1x2304xf32>
    %c6 = arith.constant 6 : index
    %c0_187 = arith.constant 0 : index
    %655 = vector.load %arg2[%c6, %c0_187] : memref<16x2304xf32, #tpu.memory_space<vmem>>, vector<1x2304xf32>
    %656 = arith.subf %650, %655 : vector<1x2304xf32>
    %c8 = arith.constant 8 : index
    %c0_188 = arith.constant 0 : index
    %657 = vector.load %arg2[%c8, %c0_188] : memref<16x2304xf32, #tpu.memory_space<vmem>>, vector<1x2304xf32>
    %658 = arith.mulf %656, %657 : vector<1x2304xf32>
    %659 = math.log %641 : vector<1x2304xf32>
    %c9 = arith.constant 9 : index
    %c0_189 = arith.constant 0 : index
    %660 = vector.load %arg2[%c9, %c0_189] : memref<16x2304xf32, #tpu.memory_space<vmem>>, vector<1x2304xf32>
    %661 = arith.subf %659, %660 : vector<1x2304xf32>
    %662 = math.log %644 : vector<1x2304xf32>
    %c10 = arith.constant 10 : index
    %c0_190 = arith.constant 0 : index
    %663 = vector.load %arg2[%c10, %c0_190] : memref<16x2304xf32, #tpu.memory_space<vmem>>, vector<1x2304xf32>
    %664 = arith.subf %662, %663 : vector<1x2304xf32>
    %665 = tpu.concatenate %654, %658, %661, %664 in 0 : vector<1x2304xf32>, vector<1x2304xf32>, vector<1x2304xf32>, vector<1x2304xf32> -> vector<4x2304xf32>
    %cst_191 = arith.constant 0.000000e+00 : f32
    %666 = vector.shape_cast %7 : vector<1x2304xi1> to vector<1x2304xi1>
    %667 = vector.broadcast %666 : vector<1x2304xi1> to vector<4x2304xi1>
    %668 = vector.broadcast %cst_191 : f32 to vector<4x2304xf32>
    %669 = arith.select %667, %665, %668 : vector<4x2304xi1>, vector<4x2304xf32>
    %670 = vector.extract_strided_slice %669 {offsets = [0, 0], sizes = [4, 256], strides = [1, 1]} : vector<4x2304xf32> to vector<4x256xf32>
    %c0_192 = arith.constant 0 : index
    %c0_193 = arith.constant 0 : index
    %c0_194 = arith.constant 0 : index
    %671 = vector.load %arg3[%c0_192, %c0_193, %c0_194] : memref<1x36x256xf32, #tpu.memory_space<vmem>>, vector<1x4x256xf32>
    %672 = vector.shape_cast %671 : vector<1x4x256xf32> to vector<4x256xf32>
    %673 = vector.shape_cast %670 : vector<4x256xf32> to vector<1x4x256xf32>
    tpu.vector_store %arg3[%c0_192, %c0_193, %c0_194], %673 {strides = array<i32>} : memref<1x36x256xf32, #tpu.memory_space<vmem>>, vector<1x4x256xf32>,
    %674 = vector.extract_strided_slice %669 {offsets = [0, 256], sizes = [4, 256], strides = [1, 1]} : vector<4x2304xf32> to vector<4x256xf32>
    %c0_195 = arith.constant 0 : index
    %c4_196 = arith.constant 4 : index
    %c0_197 = arith.constant 0 : index
    %675 = vector.load %arg3[%c0_195, %c4_196, %c0_197] : memref<1x36x256xf32, #tpu.memory_space<vmem>>, vector<1x4x256xf32>
    %676 = vector.shape_cast %675 : vector<1x4x256xf32> to vector<4x256xf32>
    %677 = vector.shape_cast %674 : vector<4x256xf32> to vector<1x4x256xf32>
    tpu.vector_store %arg3[%c0_195, %c4_196, %c0_197], %677 {strides = array<i32>} : memref<1x36x256xf32, #tpu.memory_space<vmem>>, vector<1x4x256xf32>,
    %678 = vector.extract_strided_slice %669 {offsets = [0, 512], sizes = [4, 256], strides = [1, 1]} : vector<4x2304xf32> to vector<4x256xf32>
    %c0_198 = arith.constant 0 : index
    %c8_199 = arith.constant 8 : index
    %c0_200 = arith.constant 0 : index
    %679 = vector.load %arg3[%c0_198, %c8_199, %c0_200] : memref<1x36x256xf32, #tpu.memory_space<vmem>>, vector<1x4x256xf32>
    %680 = vector.shape_cast %679 : vector<1x4x256xf32> to vector<4x256xf32>
    %681 = vector.shape_cast %678 : vector<4x256xf32> to vector<1x4x256xf32>
    tpu.vector_store %arg3[%c0_198, %c8_199, %c0_200], %681 {strides = array<i32>} : memref<1x36x256xf32, #tpu.memory_space<vmem>>, vector<1x4x256xf32>,
    %682 = vector.extract_strided_slice %669 {offsets = [0, 768], sizes = [4, 256], strides = [1, 1]} : vector<4x2304xf32> to vector<4x256xf32>
    %c0_201 = arith.constant 0 : index
    %c12_202 = arith.constant 12 : index
    %c0_203 = arith.constant 0 : index
    %683 = vector.load %arg3[%c0_201, %c12_202, %c0_203] : memref<1x36x256xf32, #tpu.memory_space<vmem>>, vector<1x4x256xf32>
    %684 = vector.shape_cast %683 : vector<1x4x256xf32> to vector<4x256xf32>
    %685 = vector.shape_cast %682 : vector<4x256xf32> to vector<1x4x256xf32>
    tpu.vector_store %arg3[%c0_201, %c12_202, %c0_203], %685 {strides = array<i32>} : memref<1x36x256xf32, #tpu.memory_space<vmem>>, vector<1x4x256xf32>,
    %686 = vector.extract_strided_slice %669 {offsets = [0, 1024], sizes = [4, 256], strides = [1, 1]} : vector<4x2304xf32> to vector<4x256xf32>
    %c0_204 = arith.constant 0 : index
    %c16 = arith.constant 16 : index
    %c0_205 = arith.constant 0 : index
    %687 = vector.load %arg3[%c0_204, %c16, %c0_205] : memref<1x36x256xf32, #tpu.memory_space<vmem>>, vector<1x4x256xf32>
    %688 = vector.shape_cast %687 : vector<1x4x256xf32> to vector<4x256xf32>
    %689 = vector.shape_cast %686 : vector<4x256xf32> to vector<1x4x256xf32>
    tpu.vector_store %arg3[%c0_204, %c16, %c0_205], %689 {strides = array<i32>} : memref<1x36x256xf32, #tpu.memory_space<vmem>>, vector<1x4x256xf32>,
    %690 = vector.extract_strided_slice %669 {offsets = [0, 1280], sizes = [4, 256], strides = [1, 1]} : vector<4x2304xf32> to vector<4x256xf32>
    %c0_206 = arith.constant 0 : index
    %c20 = arith.constant 20 : index
    %c0_207 = arith.constant 0 : index
    %691 = vector.load %arg3[%c0_206, %c20, %c0_207] : memref<1x36x256xf32, #tpu.memory_space<vmem>>, vector<1x4x256xf32>
    %692 = vector.shape_cast %691 : vector<1x4x256xf32> to vector<4x256xf32>
    %693 = vector.shape_cast %690 : vector<4x256xf32> to vector<1x4x256xf32>
    tpu.vector_store %arg3[%c0_206, %c20, %c0_207], %693 {strides = array<i32>} : memref<1x36x256xf32, #tpu.memory_space<vmem>>, vector<1x4x256xf32>,
    %694 = vector.extract_strided_slice %669 {offsets = [0, 1536], sizes = [4, 256], strides = [1, 1]} : vector<4x2304xf32> to vector<4x256xf32>
    %c0_208 = arith.constant 0 : index
    %c24 = arith.constant 24 : index
    %c0_209 = arith.constant 0 : index
    %695 = vector.load %arg3[%c0_208, %c24, %c0_209] : memref<1x36x256xf32, #tpu.memory_space<vmem>>, vector<1x4x256xf32>
    %696 = vector.shape_cast %695 : vector<1x4x256xf32> to vector<4x256xf32>
    %697 = vector.shape_cast %694 : vector<4x256xf32> to vector<1x4x256xf32>
    tpu.vector_store %arg3[%c0_208, %c24, %c0_209], %697 {strides = array<i32>} : memref<1x36x256xf32, #tpu.memory_space<vmem>>, vector<1x4x256xf32>,
    %698 = vector.extract_strided_slice %669 {offsets = [0, 1792], sizes = [4, 256], strides = [1, 1]} : vector<4x2304xf32> to vector<4x256xf32>
    %c0_210 = arith.constant 0 : index
    %c28 = arith.constant 28 : index
    %c0_211 = arith.constant 0 : index
    %699 = vector.load %arg3[%c0_210, %c28, %c0_211] : memref<1x36x256xf32, #tpu.memory_space<vmem>>, vector<1x4x256xf32>
    %700 = vector.shape_cast %699 : vector<1x4x256xf32> to vector<4x256xf32>
    %701 = vector.shape_cast %698 : vector<4x256xf32> to vector<1x4x256xf32>
    tpu.vector_store %arg3[%c0_210, %c28, %c0_211], %701 {strides = array<i32>} : memref<1x36x256xf32, #tpu.memory_space<vmem>>, vector<1x4x256xf32>,
    %702 = vector.extract_strided_slice %669 {offsets = [0, 2048], sizes = [4, 256], strides = [1, 1]} : vector<4x2304xf32> to vector<4x256xf32>
    %c0_212 = arith.constant 0 : index
    %c32 = arith.constant 32 : index
    %c0_213 = arith.constant 0 : index
    %703 = vector.load %arg3[%c0_212, %c32, %c0_213] : memref<1x36x256xf32, #tpu.memory_space<vmem>>, vector<1x4x256xf32>
    %704 = vector.shape_cast %703 : vector<1x4x256xf32> to vector<4x256xf32>
    %705 = vector.shape_cast %702 : vector<4x256xf32> to vector<1x4x256xf32>
    tpu.vector_store %arg3[%c0_212, %c32, %c0_213], %705 {strides = array<i32>} : memref<1x36x256xf32, #tpu.memory_space<vmem>>, vector<1x4x256xf32>,
    return
  }
  func.func @transform_0(%arg0: i32, %arg1: memref<80xf32, #tpu.memory_space<smem>>) -> (i32, i32) {
    %c0_i32 = arith.constant 0 : i32
    %c0_i32_0 = arith.constant 0 : i32
    %c0_i32_1 = arith.constant 0 : i32
    return %c0_i32, %c0_i32_0 : i32, i32
  }
  func.func @transform_1(%arg0: i32, %arg1: memref<80xf32, #tpu.memory_space<smem>>) -> (i32, i32, i32) {
    %c0_i32 = arith.constant 0 : i32
    %c0_i32_0 = arith.constant 0 : i32
    %c0_i32_1 = arith.constant 0 : i32
    return %arg0, %c0_i32, %c0_i32_0 : i32, i32, i32
  }
  func.func @transform_2(%arg0: i32, %arg1: memref<80xf32, #tpu.memory_space<smem>>) -> (i32, i32, i32) {
    %c0_i32 = arith.constant 0 : i32
    %c0_i32_0 = arith.constant 0 : i32
    %c0_i32_1 = arith.constant 0 : i32
    return %arg0, %c0_i32, %c0_i32_0 : i32, i32, i32
  }
}

</mosaic_0001>

<llo_original>
// kernel: _device_forward.1
$region0: #{_device_forward.1}
  #allocation0 [shape = 'u32[]', space=smem, size = 0x4, offset = 0x4, fixed_abs, tag = 'smem constant byte address 0x4 - core index']
  #allocation1 [shape = 'u32[72,128]{1,0:T(1,128)}', space=vmem, size = 0x9000, scoped, tag = 'internal scratch']
  #allocation2 [shape = 's32[1]{0}', space=sflag, size = 0x4, scoped, tag = 'scoped memory for _device_forward.1']
  #allocation3 [shape = 'u8[512]{0}', space=smem, size = 0x200, scoped, tag = 'prefetched SMEM operand 0']
  %s0 = inlined_call_operand.hbm [shape: f32[80], index: 0, kind: input, shape index: {}]
  %s1 = inlined_call_operand.hbm [shape: f32[16,2304], index: 1, kind: input, shape index: {}]
  %s2 = inlined_call_operand.vmem [shape: f32[2,36,256], index: 2, kind: output, shape index: {0}]
  %s3 = inlined_call_operand.vmem [shape: f32[2,1,2304], index: 3, kind: output, shape index: {1}]
  %4 = xla_tuple %s2, %s3
  %s5 = sld [smem:[#allocation0]]
  $region49: #{_device_forward.1} parent=0
    _
  %s7 = ssub.s32 1, %s5
  %s8 = scalar_select 0, %s7, %s5
  %s10 = sshll.u32 %s0, 4
  %s11 = int_to_ptr.hbm [resolvable:$true] %s10
  %13 = dma.hbm_to_smem %s11, 16, [#allocation3], [#allocation2]
  %15 = dma.done [#allocation2], 16
  %16 = sfence
  $region1: #{_device_forward.1} parent=0
    #allocation4 [shape = 'u8[147456]{0}', space=vmem, size = 0x24000, scoped, tag = 'input window, operand 1, single buffered']
    #allocation5 [shape = 's32[2]{0}', space=sflag, size = 0x8, scoped, tag = 'scoped memory for _device_forward.1']
    %17 = vsyncpa [#allocation5], 0
    loop: start=0, step=1, limit=4
    $region2: #{_device_forward.1} parent=1 // loop_pre_header
      _
    $region3: #{_device_forward.1} parent=1 // loop_header
      %s19 = sphi 0, %s23
      %p20 = scmp.ge.s32.totalorder %s19, 4
      %s27 = sphi 0, %s27
      %s29 = sphi 0, %s27
      %s30 = sphi 0, %s29
      %s44 = sphi 0, %s30
      %s50 = sphi 0, %s52
      %s53 = sphi 0, %s50
      %s54 = sphi 0, %s53
      %s70 = sphi 0, %s54
      %s76 = sphi 0, %s78
      %s79 = sphi 0, %s76
      %s80 = sphi 0, %s79
      %s96 = sphi 0, %s80
    $region4: #{_device_forward.1} parent=1 // loop_header_branch
      %22 = sbr.rel (%p20) target = $region8
    $region5: #{_device_forward.1} parent=1 // loop_body
      %s24 = ssub.s32 %s19, 1
      %s25 = ssub.s32 %s19, 2
      %s26 = sadd.s32 %s19, 1
      %s28 = sadd.s32 %s27, 1
      %p31 = scmp.eq.s32.totalorder %s19, 1
      %p32 = scmp.ne.s32.totalorder %s27, %s29
      %p33 = scmp.eq.s32.totalorder %s19, 0
      %p34 = por %p32, %p33
      %p35 = scmp.ne.s32.totalorder %s27, %s29
      %p36 = scmp.eq.s32.totalorder %s24, 1
      %p37 = por %p35, %p36
      %p38 = scmp.ne.s32.totalorder %s29, %s30
      %p39 = scmp.eq.s32.totalorder %s24, 0
      %p40 = por %p38, %p39
      %p41 = scmp.ne.s32.totalorder %s29, %s30
      %p42 = scmp.eq.s32.totalorder %s25, 1
      %p43 = por %p41, %p42
      %p45 = scmp.ne.s32.totalorder %s30, %s44
      %p46 = scmp.eq.s32.totalorder %s25, 0
      %p47 = por %p45, %p46
      %s48 = ssub.s32 %s19, %s26
      %p49 = scmp.eq.s32.totalorder %s48, 0
      %s51 = sadd.s32 %s50, 1
      %s52 = scalar_select %p49, %s50, %s51
      %p55 = pneg %p49
      %p56 = scmp.eq.s32.totalorder %s19, 1
      %p57 = por %p55, %p56
      %p58 = scmp.ne.s32.totalorder %s50, %s53
      %p59 = scmp.eq.s32.totalorder %s19, 0
      %p60 = por %p58, %p59
      %p61 = scmp.ne.s32.totalorder %s50, %s53
      %p62 = scmp.eq.s32.totalorder %s24, 1
      %p63 = por %p61, %p62
      %p64 = scmp.ne.s32.totalorder %s53, %s54
      %p65 = scmp.eq.s32.totalorder %s24, 0
      %p66 = por %p64, %p65
      %p67 = scmp.ne.s32.totalorder %s53, %s54
      %p68 = scmp.eq.s32.totalorder %s25, 1
      %p69 = por %p67, %p68
      %p71 = scmp.ne.s32.totalorder %s54, %s70
      %p72 = scmp.eq.s32.totalorder %s25, 0
      %p73 = por %p71, %p72
      %s74 = ssub.s32 %s19, %s26
      %p75 = scmp.eq.s32.totalorder %s74, 0
      %s77 = sadd.s32 %s76, 1
      %s78 = scalar_select %p75, %s76, %s77
      %p81 = pneg %p75
      %p82 = scmp.eq.s32.totalorder %s19, 1
      %p83 = por %p81, %p82
      %p84 = scmp.ne.s32.totalorder %s76, %s79
      %p85 = scmp.eq.s32.totalorder %s19, 0
      %p86 = por %p84, %p85
      %p87 = scmp.ne.s32.totalorder %s76, %s79
      %p88 = scmp.eq.s32.totalorder %s24, 1
      %p89 = por %p87, %p88
      %p90 = scmp.ne.s32.totalorder %s79, %s80
      %p91 = scmp.eq.s32.totalorder %s24, 0
      %p92 = por %p90, %p91
      %p93 = scmp.ne.s32.totalorder %s79, %s80
      %p94 = scmp.eq.s32.totalorder %s25, 1
      %p95 = por %p93, %p94
      %p97 = scmp.ne.s32.totalorder %s80, %s96
      %p98 = scmp.eq.s32.totalorder %s25, 0
      %p99 = por %p97, %p98
      %p100 = scmp.le.s32.totalorder 1, %s19
      %p101 = scmp.lt.s32.totalorder %s19, 3
      %p102 = pnand %p100, %p101
      %p103 = pneg %p102
      // Predicated region
      $region9: #{_device_forward.1} parent=5 // pred_check
        _
      $region10: #{_device_forward.1} parent=5 // pred_check_branch
        %105 = sbr.rel (%p102) target = $region12
      $region11: #{_device_forward.1} parent=5 // pred_region
        %s106 = ssub.s32 %s19, 1
        // Predicated region
        $region13: #{_device_forward.1} parent=11 // pred_check
          %p107 = pneg %p40
        $region14: #{_device_forward.1} parent=11 // pred_check_branch
          %109 = sbr.rel (%p107) target = $region16
        $region15: #{_device_forward.1} parent=11 // pred_region
          %111 = vsyncadd [#allocation5], 0
          %s112 = sshll.u32 %s1, 4
          %s113 = int_to_ptr.hbm [resolvable:$true] %s112
          %s114 = sshll.u32 [#allocation4], 4
          %s115 = int_to_ptr.vmem [resolvable:$true] %s114
          %120 = dma.hbm_to_vmem [thread:$0]  %s113, 4608, %s115, [#allocation5], 2304, 2304, 144
        $region16: #{_device_forward.1} parent=11 // pred_fallthru
          _
      $region12: #{_device_forward.1} parent=5 // pred_fallthru
        _
      %p121 = scmp.lt.s32.totalorder %s19, 2
      // Predicated region
      $region17: #{_device_forward.1} parent=5 // pred_check
        %p122 = pneg %p121
      $region18: #{_device_forward.1} parent=5 // pred_check_branch
        %124 = sbr.rel (%p122) target = $region20
      $region19: #{_device_forward.1} parent=5 // pred_region
        _
      $region20: #{_device_forward.1} parent=5 // pred_fallthru
        _
      %p125 = scmp.le.s32.totalorder 1, %s19
      %p126 = scmp.lt.s32.totalorder %s19, 3
      %p127 = pnand %p125, %p126
      %p128 = pneg %p127
      // Predicated region
      $region21: #{_device_forward.1} parent=5 // pred_check
        _
      $region22: #{_device_forward.1} parent=5 // pred_check_branch
        %130 = sbr.rel (%p127) target = $region24
      $region23: #{_device_forward.1} parent=5 // pred_region
        %s131 = ssub.s32 %s19, 1
        // Predicated region
        $region25: #{_device_forward.1} parent=23 // pred_check
          %p132 = pneg %p40
        $region26: #{_device_forward.1} parent=23 // pred_check_branch
          %134 = sbr.rel (%p132) target = $region28
        $region27: #{_device_forward.1} parent=23 // pred_region
          %136 = dma.done [#allocation5], 4608
        $region28: #{_device_forward.1} parent=23 // pred_fallthru
          _
        %p137 = pneg %p40
        %p138 = pneg %p37
        %p139 = pneg %p66
        %p140 = pneg %p63
        %p141 = scmp.lt.s32.totalorder %s24, 1
        %s142 = scalar_select %p141, %s24, 1
        %s143 = smul.addr %s142, 10
        %s144 = smul.addr %s143, 8
        %s145 = scalar_lea.vmem %s2, %s144
        %p146 = pneg %p92
        %p147 = pneg %p89
        %p148 = scmp.lt.s32.totalorder %s24, 1
        %s149 = scalar_select %p148, %s24, 1
        %s150 = smul.addr %s149, 18
        %s151 = scalar_lea.vmem %s3, %s150
        %p152 = scmp.lt.s32.totalorder %s24, 1
        %s153 = scalar_select %p152, %s24, 1
        %s154 = smul.addr %s153, 10
        %s155 = smul.addr %s154, 8
        %s156 = scalar_lea.vmem %s2, %s155
        %p157 = scmp.lt.s32.totalorder %s24, 1
        %s158 = scalar_select %p157, %s24, 1
        %s159 = smul.addr %s158, 18
        %s160 = scalar_lea.vmem %s3, %s159
        %v161 = vld [vmem:[#allocation4] ss:$8 sm:$0xf]
        %v162 = vld [vmem:[#allocation4] ss:$8 sm:$0xf0]
        %v163 = vor.u32 %v161, %v162
        %s164 = scalar_lea.vmem [#allocation4], 64
        %v165 = vld [vmem:[%s164] ss:$8 sm:$0xf]
        %v166 = vld [vmem:[%s164] ss:$8 sm:$0xf0]
        %v167 = vor.u32 %v165, %v166
        %s168 = scalar_lea.vmem [#allocation4], 128
        %v169 = vld [vmem:[%s168] ss:$8 sm:$0x3]
        %s170 = scalar_lea.vmem [#allocation4], 1
        %v171 = vld [vmem:[%s170] ss:$8 sm:$0xf]
        %v172 = vld [vmem:[%s170] ss:$8 sm:$0xf0]
        %v173 = vor.u32 %v171, %v172
        %s174 = scalar_lea.vmem [#allocation4], 65
        %v175 = vld [vmem:[%s174] ss:$8 sm:$0xf]
        %v176 = vld [vmem:[%s174] ss:$8 sm:$0xf0]
        %v177 = vor.u32 %v175, %v176
        %s178 = scalar_lea.vmem [#allocation4], 129
        %v179 = vld [vmem:[%s178] ss:$8 sm:$0x3]
        %s180 = scalar_lea.vmem [#allocation4], 2
        %v181 = vld [vmem:[%s180] ss:$8 sm:$0xf]
        %v182 = vld [vmem:[%s180] ss:$8 sm:$0xf0]
        %v183 = vor.u32 %v181, %v182
        %s184 = scalar_lea.vmem [#allocation4], 66
        %v185 = vld [vmem:[%s184] ss:$8 sm:$0xf]
        %v186 = vld [vmem:[%s184] ss:$8 sm:$0xf0]
        %v187 = vor.u32 %v185, %v186
        %s188 = scalar_lea.vmem [#allocation4], 130
        %v189 = vld [vmem:[%s188] ss:$8 sm:$0x3]
        %s190 = scalar_lea.vmem [#allocation4], 3
        %v191 = vld [vmem:[%s190] ss:$8 sm:$0xf]
        %v192 = vld [vmem:[%s190] ss:$8 sm:$0xf0]
        %v193 = vor.u32 %v191, %v192
        %s194 = scalar_lea.vmem [#allocation4], 67
        %v195 = vld [vmem:[%s194] ss:$8 sm:$0xf]
        %v196 = vld [vmem:[%s194] ss:$8 sm:$0xf0]
        %v197 = vor.u32 %v195, %v196
        %s198 = scalar_lea.vmem [#allocation4], 131
        %v199 = vld [vmem:[%s198] ss:$8 sm:$0x3]
        %s200 = scalar_lea.vmem [#allocation4], 4
        %v201 = vld [vmem:[%s200] ss:$8 sm:$0xf]
        %v202 = vld [vmem:[%s200] ss:$8 sm:$0xf0]
        %v203 = vor.u32 %v201, %v202
        %s204 = scalar_lea.vmem [#allocation4], 68
        %v205 = vld [vmem:[%s204] ss:$8 sm:$0xf]
        %v206 = vld [vmem:[%s204] ss:$8 sm:$0xf0]
        %v207 = vor.u32 %v205, %v206
        %s208 = scalar_lea.vmem [#allocation4], 132
        %v209 = vld [vmem:[%s208] ss:$8 sm:$0x3]
        %s210 = scalar_lea.vmem [#allocation4], 147
        %v211 = vld [vmem:[%s210] ss:$8 sm:$0xf]
        %v212 = vld [vmem:[%s210] ss:$8 sm:$0xf0]
        %v213 = vor.u32 %v211, %v212
        %s214 = scalar_lea.vmem [#allocation4], 211
        %v215 = vld [vmem:[%s214] ss:$8 sm:$0xf]
        %v216 = vld [vmem:[%s214] ss:$8 sm:$0xf0]
        %v217 = vor.u32 %v215, %v216
        %s218 = scalar_lea.vmem [#allocation4], 275
        %v219 = vld [vmem:[%s218] ss:$8 sm:$0x3]
        %vm220 = vcmp.gt.f32.partialorder %v213, 0.5
        %vm221 = vcmp.gt.f32.partialorder %v217, 0.5
        %vm222 = vcmp.gt.f32.partialorder %v219, 0.5
        %s223 = scalar_lea.vmem [#allocation4], 148
        %v224 = vld [vmem:[%s223] ss:$8 sm:$0xf]
        %v225 = vld [vmem:[%s223] ss:$8 sm:$0xf0]
        %v226 = vor.u32 %v224, %v225
        %s227 = scalar_lea.vmem [#allocation4], 212
        %v228 = vld [vmem:[%s227] ss:$8 sm:$0xf]
        %v229 = vld [vmem:[%s227] ss:$8 sm:$0xf0]
        %v230 = vor.u32 %v228, %v229
        %s231 = scalar_lea.vmem [#allocation4], 276
        %v232 = vld [vmem:[%s231] ss:$8 sm:$0x3]
        %vm233 = vcmp.gt.f32.partialorder %v226, 0.5
        %vm234 = vcmp.gt.f32.partialorder %v230, 0.5
        %vm235 = vcmp.gt.f32.partialorder %v232, 0.5
        %s236 = smul.u32 %s24, 40
        %s237 = sld [smem:[#allocation3 + %s236]]
        %s238 = sadd.s32 %s236, 1
        %s239 = sld [smem:[#allocation3 + %s238]]
        %s240 = sadd.s32 %s236, 2
        %s241 = sld [smem:[#allocation3 + %s240]]
        %s242 = sadd.s32 %s236, 3
        %s243 = sld [smem:[#allocation3 + %s242]]
        %s244 = ssub.f32 %s241, %s237
        %s245 = sadd.f32 %s244, 1.0
        %s246 = ssub.f32 %s243, %s239
        %s247 = sadd.f32 %s246, 1.0
        %s248 = smul.f32 %s245, %s247
        %p249 = scmp.eq.f32.partialorder %s245, 1.0
        %p250 = scmp.eq.f32.partialorder %s247, 1.0
        %p251 = pnand %p249, %p250
        %p252 = pneg %p251
        %s253 = scalar_select %p252, 1, 0
        %s254 = scvt.s32.f32 %s253
        %v255 = vstv %s241
        %v256 = vmin.f32 %v183, %v255
        %v257 = vmin.f32 %v187, %v255
        %v258 = vmin.f32 %v189, %v255
        %v259 = vstv %s237
        %v260 = vmax.f32 %v163, %v259
        %v261 = vmax.f32 %v167, %v259
        %v262 = vmax.f32 %v169, %v259
        %v263 = vsub.f32 %v256, %v260
        %v264 = vsub.f32 %v257, %v261
        %v265 = vsub.f32 %v258, %v262
        %v266 = vadd.f32 %v263, 1.0
        %v267 = vadd.f32 %v264, 1.0
        %v268 = vadd.f32 %v265, 1.0
        %v269 = vmax.f32 %v266, 0.0
        %v270 = vmax.f32 %v267, 0.0
        %v271 = vmax.f32 %v268, 0.0
        %v272 = vstv %s243
        %v273 = vmin.f32 %v193, %v272
        %v274 = vmin.f32 %v197, %v272
        %v275 = vmin.f32 %v199, %v272
        %v276 = vstv %s239
        %v277 = vmax.f32 %v173, %v276
        %v278 = vmax.f32 %v177, %v276
        %v279 = vmax.f32 %v179, %v276
        %v280 = vsub.f32 %v273, %v277
        %v281 = vsub.f32 %v274, %v278
        %v282 = vsub.f32 %v275, %v279
        %v283 = vadd.f32 %v280, 1.0
        %v284 = vadd.f32 %v281, 1.0
        %v285 = vadd.f32 %v282, 1.0
        %v286 = vmax.f32 %v283, 0.0
        %v287 = vmax.f32 %v284, 0.0
        %v288 = vmax.f32 %v285, 0.0
        %v289 = vmul.f32 %v269, %v286
        %v290 = vmul.f32 %v270, %v287
        %v291 = vmul.f32 %v271, %v288
        %v292 = vstv %s248
        %v293 = vsub.f32 %v292, %v289
        %v294 = vsub.f32 %v292, %v290
        %v295 = vsub.f32 %v292, %v291
        %v296 = vadd.f32 %v203, %v293
        %v297 = vadd.f32 %v207, %v294
        %v298 = vadd.f32 %v209, %v295
        %v299 = vrcp.pop %v296
        %v300 = vmul.f32 %v296, %v299
        %v301 = vsub.f32 1.0, %v300
        %v302 = vmul.f32 %v299, %v301
        %v303 = vadd.f32 %v299, %v302
        %vm304 = vweird.f32 %v296
        %vm305 = vweird.f32 %v299
        %vm306 = vmor %vm304, %vm305
        %v307 = vsel %vm306, %v299, %v303
        %v308 = vand.u32 2147483647, %v296
        %vm309 = vcmp.eq.f32.partialorder %v308, 8.507059e+37
        %v310 = vand.u32 %v296, 2147483648
        %v311 = vor.u32 1.1754944e-38, %v310
        %v312 = vsel %vm309, %v311, %v307
        %v313 = vmul.f32 %v289, %v312
        %v314 = vrcp.pop %v297
        %v315 = vmul.f32 %v297, %v314
        %v316 = vsub.f32 1.0, %v315
        %v317 = vmul.f32 %v314, %v316
        %v318 = vadd.f32 %v314, %v317
        %vm319 = vweird.f32 %v297
        %vm320 = vweird.f32 %v314
        %vm321 = vmor %vm319, %vm320
        %v322 = vsel %vm321, %v314, %v318
        %v323 = vand.u32 2147483647, %v297
        %vm324 = vcmp.eq.f32.partialorder %v323, 8.507059e+37
        %v325 = vand.u32 %v297, 2147483648
        %v326 = vor.u32 1.1754944e-38, %v325
        %v327 = vsel %vm324, %v326, %v322
        %v328 = vmul.f32 %v290, %v327
        %v329 = vrcp.pop %v298
        %v330 = vmul.f32 %v298, %v329
        %v331 = vsub.f32 1.0, %v330
        %v332 = vmul.f32 %v329, %v331
        %v333 = vadd.f32 %v329, %v332
        %vm334 = vweird.f32 %v298
        %vm335 = vweird.f32 %v329
        %vm336 = vmor %vm334, %vm335
        %v337 = vsel %vm336, %v329, %v333
        %v338 = vand.u32 2147483647, %v298
        %vm339 = vcmp.eq.f32.partialorder %v338, 8.507059e+37
        %v340 = vand.u32 %v298, 2147483648
        %v341 = vor.u32 1.1754944e-38, %v340
        %v342 = vsel %vm339, %v341, %v337
        %v343 = vmul.f32 %v291, %v342
        %s344 = ssub.f32 1.0, %s254
        %v345 = vstv %s344
        %v346 = vmul.f32 %v313, %v345
        %v347 = vmul.f32 %v328, %v345
        %v348 = vmul.f32 %v343, %v345
        %v349 = vsel %vm233, -1.0, %v346
        %v350 = vsel %vm234, -1.0, %v347
        %v351 = vsel %vm235, -1.0, %v348
        %vm352 = vcmp.gt.f32.partialorder %v349, -1e+30
        %vm353 = vcmp.gt.f32.partialorder %v350, -1e+30
        %vm354 = vcmp.gt.f32.partialorder %v351, -1e+30
        %v355 = vsel %vm352, %v349, -1e+30
        %v356 = vsel %vm353, %v350, -1e+30
        %v357 = vsel %vm354, %v351, -1e+30
        %v358 = vsel %vm352, %v259, 0.0
        %v359 = vsel %vm353, %v259, 0.0
        %v360 = vsel %vm354, %v259, 0.0
        %v361 = vsel %vm352, %v276, 0.0
        %v362 = vsel %vm353, %v276, 0.0
        %v363 = vsel %vm354, %v276, 0.0
        %v364 = vsel %vm352, %v255, 0.0
        %v365 = vsel %vm353, %v255, 0.0
        %v366 = vsel %vm354, %v255, 0.0
        %v367 = vsel %vm352, %v272, 0.0
        %v368 = vsel %vm353, %v272, 0.0
        %v369 = vsel %vm354, %v272, 0.0
        %v370 = vsel %vm220, %v349, -1e+30
        %v371 = vsel %vm221, %v350, -1e+30
        %v372 = vsel %vm222, %v351, -1e+30
        %v376 = vperm.slane %v370, 0
        %v377 = vperm.slane %v370, 1
        %v378 = vperm.slane %v370, 2
        %v379 = vperm.slane %v370, 3
        %v380 = vperm.slane %v370, 4
        %v381 = vperm.slane %v370, 5
        %v382 = vperm.slane %v370, 6
        %v383 = vperm.slane %v370, 7
        %v384 = vperm.slane %v371, 0
        %v385 = vperm.slane %v371, 1
        %v386 = vperm.slane %v371, 2
        %v387 = vperm.slane %v371, 3
        %v388 = vperm.slane %v371, 4
        %v389 = vperm.slane %v371, 5
        %v390 = vperm.slane %v371, 6
        %v391 = vperm.slane %v371, 7
        %v392 = vperm.slane %v372, 0
        %v393 = vperm.slane %v372, 1
        %vm412 = vcmask 1040384
        %v413 = vsel %vm412, %v376, -inf
        %v414 = vsel %vm412, %v377, -inf
        %v415 = vsel %vm412, %v378, -inf
        %v416 = vsel %vm412, %v379, -inf
        %v417 = vsel %vm412, %v380, -inf
        %v418 = vmax.f32 %v413, %v417
        %v419 = vsel %vm412, %v381, -inf
        %v420 = vmax.f32 %v414, %v419
        %v421 = vsel %vm412, %v382, -inf
        %v422 = vmax.f32 %v415, %v421
        %v423 = vsel %vm412, %v383, -inf
        %v424 = vmax.f32 %v416, %v423
        %v425 = vsel %vm412, %v384, -inf
        %v426 = vmax.f32 %v418, %v425
        %v427 = vsel %vm412, %v385, -inf
        %v428 = vmax.f32 %v420, %v427
        %v429 = vsel %vm412, %v386, -inf
        %v430 = vmax.f32 %v422, %v429
        %v431 = vsel %vm412, %v387, -inf
        %v432 = vmax.f32 %v424, %v431
        %v433 = vsel %vm412, %v388, -inf
        %v434 = vmax.f32 %v426, %v433
        %v435 = vsel %vm412, %v389, -inf
        %v436 = vmax.f32 %v428, %v435
        %v437 = vsel %vm412, %v390, -inf
        %v438 = vmax.f32 %v430, %v437
        %v439 = vsel %vm412, %v391, -inf
        %v440 = vmax.f32 %v432, %v439
        %v441 = vsel %vm412, %v392, -inf
        %v442 = vmax.f32 %v434, %v441
        %v443 = vsel %vm412, %v393, -inf
        %v444 = vmax.f32 %v436, %v443
        %v445 = vmax.f32 %v442, %v444
        %v446 = vmax.f32 %v438, %v440
        %v447 = vmax.f32 %v445, %v446
        %448 = vmax.xlane.f32.xlu0 %v447
        %v449 = vpop.xlane.xlu0 %448
        %vm450 = vcmp.eq.f32.partialorder %v449, 0.0
        %v451 = vsel %vm450, 1e-05, %v449
        %v453 = vperm.slane %v451, 0
        %vm455 = vcmp.eq.f32.partialorder %v370, %v453
        %vm456 = vcmp.eq.f32.partialorder %v371, %v453
        %vm457 = vcmp.eq.f32.partialorder %v372, %v453
        %v458 = vsel %vm455, 1, 0
        %v459 = vsel %vm456, 1, 0
        %v460 = vsel %vm457, 1, 0
        %v461 = vcvt.s32.f32 %v458
        %v462 = vcvt.s32.f32 %v459
        %v463 = vcvt.s32.f32 %v460
        %v464 = vadd.f32 %v461, 0.0
        %v465 = vadd.f32 %v462, 0.0
        %v466 = vadd.f32 %v463, 0.0
        %s467 = smul.u32 %s24, 8
        %s468 = sadd.s32 %s467, 1
        %s469 = smul.u32 %s468, 5
        %s470 = sld [smem:[#allocation3 + %s469]]
        %s471 = sadd.s32 %s469, 1
        %s472 = sld [smem:[#allocation3 + %s471]]
        %s473 = sadd.s32 %s469, 2
        %s474 = sld [smem:[#allocation3 + %s473]]
        %s475 = sadd.s32 %s469, 3
        %s476 = sld [smem:[#allocation3 + %s475]]
        %s477 = ssub.f32 %s474, %s470
        %s478 = sadd.f32 %s477, 1.0
        %s479 = ssub.f32 %s476, %s472
        %s480 = sadd.f32 %s479, 1.0
        %s481 = smul.f32 %s478, %s480
        %p482 = scmp.eq.f32.partialorder %s478, 1.0
        %p483 = scmp.eq.f32.partialorder %s480, 1.0
        %p484 = pnand %p482, %p483
        %p485 = pneg %p484
        %s486 = scalar_select %p485, 1, 0
        %s487 = scvt.s32.f32 %s486
        %v488 = vstv %s474
        %v489 = vmin.f32 %v183, %v488
        %v490 = vmin.f32 %v187, %v488
        %v491 = vmin.f32 %v189, %v488
        %v492 = vstv %s470
        %v493 = vmax.f32 %v163, %v492
        %v494 = vmax.f32 %v167, %v492
        %v495 = vmax.f32 %v169, %v492
        %v496 = vsub.f32 %v489, %v493
        %v497 = vsub.f32 %v490, %v494
        %v498 = vsub.f32 %v491, %v495
        %v499 = vadd.f32 %v496, 1.0
        %v500 = vadd.f32 %v497, 1.0
        %v501 = vadd.f32 %v498, 1.0
        %v502 = vmax.f32 %v499, 0.0
        %v503 = vmax.f32 %v500, 0.0
        %v504 = vmax.f32 %v501, 0.0
        %v505 = vstv %s476
        %v506 = vmin.f32 %v193, %v505
        %v507 = vmin.f32 %v197, %v505
        %v508 = vmin.f32 %v199, %v505
        %v509 = vstv %s472
        %v510 = vmax.f32 %v173, %v509
        %v511 = vmax.f32 %v177, %v509
        %v512 = vmax.f32 %v179, %v509
        %v513 = vsub.f32 %v506, %v510
        %v514 = vsub.f32 %v507, %v511
        %v515 = vsub.f32 %v508, %v512
        %v516 = vadd.f32 %v513, 1.0
        %v517 = vadd.f32 %v514, 1.0
        %v518 = vadd.f32 %v515, 1.0
        %v519 = vmax.f32 %v516, 0.0
        %v520 = vmax.f32 %v517, 0.0
        %v521 = vmax.f32 %v518, 0.0
        %v522 = vmul.f32 %v502, %v519
        %v523 = vmul.f32 %v503, %v520
        %v524 = vmul.f32 %v504, %v521
        %v525 = vstv %s481
        %v526 = vsub.f32 %v525, %v522
        %v527 = vsub.f32 %v525, %v523
        %v528 = vsub.f32 %v525, %v524
        %v529 = vadd.f32 %v203, %v526
        %v530 = vadd.f32 %v207, %v527
        %v531 = vadd.f32 %v209, %v528
        %v532 = vrcp.pop %v529
        %v533 = vmul.f32 %v529, %v532
        %v534 = vsub.f32 1.0, %v533
        %v535 = vmul.f32 %v532, %v534
        %v536 = vadd.f32 %v532, %v535
        %vm537 = vweird.f32 %v529
        %vm538 = vweird.f32 %v532
        %vm539 = vmor %vm537, %vm538
        %v540 = vsel %vm539, %v532, %v536
        %v541 = vand.u32 2147483647, %v529
        %vm542 = vcmp.eq.f32.partialorder %v541, 8.507059e+37
        %v543 = vand.u32 %v529, 2147483648
        %v544 = vor.u32 1.1754944e-38, %v543
        %v545 = vsel %vm542, %v544, %v540
        %v546 = vmul.f32 %v522, %v545
        %v547 = vrcp.pop %v530
        %v548 = vmul.f32 %v530, %v547
        %v549 = vsub.f32 1.0, %v548
        %v550 = vmul.f32 %v547, %v549
        %v551 = vadd.f32 %v547, %v550
        %vm552 = vweird.f32 %v530
        %vm553 = vweird.f32 %v547
        %vm554 = vmor %vm552, %vm553
        %v555 = vsel %vm554, %v547, %v551
        %v556 = vand.u32 2147483647, %v530
        %vm557 = vcmp.eq.f32.partialorder %v556, 8.507059e+37
        %v558 = vand.u32 %v530, 2147483648
        %v559 = vor.u32 1.1754944e-38, %v558
        %v560 = vsel %vm557, %v559, %v555
        %v561 = vmul.f32 %v523, %v560
        %v562 = vrcp.pop %v531
        %v563 = vmul.f32 %v531, %v562
        %v564 = vsub.f32 1.0, %v563
        %v565 = vmul.f32 %v562, %v564
        %v566 = vadd.f32 %v562, %v565
        %vm567 = vweird.f32 %v531
        %vm568 = vweird.f32 %v562
        %vm569 = vmor %vm567, %vm568
        %v570 = vsel %vm569, %v562, %v566
        %v571 = vand.u32 2147483647, %v531
        %vm572 = vcmp.eq.f32.partialorder %v571, 8.507059e+37
        %v573 = vand.u32 %v531, 2147483648
        %v574 = vor.u32 1.1754944e-38, %v573
        %v575 = vsel %vm572, %v574, %v570
        %v576 = vmul.f32 %v524, %v575
        %s577 = ssub.f32 1.0, %s487
        %v578 = vstv %s577
        %v579 = vmul.f32 %v546, %v578
        %v580 = vmul.f32 %v561, %v578
        %v581 = vmul.f32 %v576, %v578
        %v582 = vsel %vm233, -1.0, %v579
        %v583 = vsel %vm234, -1.0, %v580
        %v584 = vsel %vm235, -1.0, %v581
        %vm585 = vcmp.gt.f32.partialorder %v582, %v355
        %vm586 = vcmp.gt.f32.partialorder %v583, %v356
        %vm587 = vcmp.gt.f32.partialorder %v584, %v357
        %v588 = vsel %vm585, %v582, %v355
        %v589 = vsel %vm586, %v583, %v356
        %v590 = vsel %vm587, %v584, %v357
        %v591 = vsel %vm585, %v492, %v358
        %v592 = vsel %vm586, %v492, %v359
        %v593 = vsel %vm587, %v492, %v360
        %v594 = vsel %vm585, %v509, %v361
        %v595 = vsel %vm586, %v509, %v362
        %v596 = vsel %vm587, %v509, %v363
        %v597 = vsel %vm585, %v488, %v364
        %v598 = vsel %vm586, %v488, %v365
        %v599 = vsel %vm587, %v488, %v366
        %v600 = vsel %vm585, %v505, %v367
        %v601 = vsel %vm586, %v505, %v368
        %v602 = vsel %vm587, %v505, %v369
        %v603 = vsel %vm220, %v582, -1e+30
        %v604 = vsel %vm221, %v583, -1e+30
        %v605 = vsel %vm222, %v584, -1e+30
        %v609 = vperm.slane %v603, 0
        %v610 = vperm.slane %v603, 1
        %v611 = vperm.slane %v603, 2
        %v612 = vperm.slane %v603, 3
        %v613 = vperm.slane %v603, 4
        %v614 = vperm.slane %v603, 5
        %v615 = vperm.slane %v603, 6
        %v616 = vperm.slane %v603, 7
        %v617 = vperm.slane %v604, 0
        %v618 = vperm.slane %v604, 1
        %v619 = vperm.slane %v604, 2
        %v620 = vperm.slane %v604, 3
        %v621 = vperm.slane %v604, 4
        %v622 = vperm.slane %v604, 5
        %v623 = vperm.slane %v604, 6
        %v624 = vperm.slane %v604, 7
        %v625 = vperm.slane %v605, 0
        %v626 = vperm.slane %v605, 1
        %v645 = vsel %vm412, %v609, -inf
        %v646 = vsel %vm412, %v610, -inf
        %v647 = vsel %vm412, %v611, -inf
        %v648 = vsel %vm412, %v612, -inf
        %v649 = vsel %vm412, %v613, -inf
        %v650 = vmax.f32 %v645, %v649
        %v651 = vsel %vm412, %v614, -inf
        %v652 = vmax.f32 %v646, %v651
        %v653 = vsel %vm412, %v615, -inf
        %v654 = vmax.f32 %v647, %v653
        %v655 = vsel %vm412, %v616, -inf
        %v656 = vmax.f32 %v648, %v655
        %v657 = vsel %vm412, %v617, -inf
        %v658 = vmax.f32 %v650, %v657
        %v659 = vsel %vm412, %v618, -inf
        %v660 = vmax.f32 %v652, %v659
        %v661 = vsel %vm412, %v619, -inf
        %v662 = vmax.f32 %v654, %v661
        %v663 = vsel %vm412, %v620, -inf
        %v664 = vmax.f32 %v656, %v663
        %v665 = vsel %vm412, %v621, -inf
        %v666 = vmax.f32 %v658, %v665
        %v667 = vsel %vm412, %v622, -inf
        %v668 = vmax.f32 %v660, %v667
        %v669 = vsel %vm412, %v623, -inf
        %v670 = vmax.f32 %v662, %v669
        %v671 = vsel %vm412, %v624, -inf
        %v672 = vmax.f32 %v664, %v671
        %v673 = vsel %vm412, %v625, -inf
        %v674 = vmax.f32 %v666, %v673
        %v675 = vsel %vm412, %v626, -inf
        %v676 = vmax.f32 %v668, %v675
        %v677 = vmax.f32 %v674, %v676
        %v678 = vmax.f32 %v670, %v672
        %v679 = vmax.f32 %v677, %v678
        %680 = vmax.xlane.f32.xlu0 %v679
        %v681 = vpop.xlane.xlu0 %680
        %vm682 = vcmp.eq.f32.partialorder %v681, 0.0
        %v683 = vsel %vm682, 1e-05, %v681
        %v685 = vperm.slane %v683, 0
        %vm687 = vcmp.eq.f32.partialorder %v603, %v685
        %vm688 = vcmp.eq.f32.partialorder %v604, %v685
        %vm689 = vcmp.eq.f32.partialorder %v605, %v685
        %v690 = vsel %vm687, 1, 0
        %v691 = vsel %vm688, 1, 0
        %v692 = vsel %vm689, 1, 0
        %v693 = vcvt.s32.f32 %v690
        %v694 = vcvt.s32.f32 %v691
        %v695 = vcvt.s32.f32 %v692
        %v696 = vadd.f32 %v464, %v693
        %v697 = vadd.f32 %v465, %v694
        %v698 = vadd.f32 %v466, %v695
        %s699 = sadd.s32 %s467, 2
        %s700 = smul.u32 %s699, 5
        %s701 = sld [smem:[#allocation3 + %s700]]
        %s702 = sadd.s32 %s700, 1
        %s703 = sld [smem:[#allocation3 + %s702]]
        %s704 = sadd.s32 %s700, 2
        %s705 = sld [smem:[#allocation3 + %s704]]
        %s706 = sadd.s32 %s700, 3
        %s707 = sld [smem:[#allocation3 + %s706]]
        %s708 = ssub.f32 %s705, %s701
        %s709 = sadd.f32 %s708, 1.0
        %s710 = ssub.f32 %s707, %s703
        %s711 = sadd.f32 %s710, 1.0
        %s712 = smul.f32 %s709, %s711
        %p713 = scmp.eq.f32.partialorder %s709, 1.0
        %p714 = scmp.eq.f32.partialorder %s711, 1.0
        %p715 = pnand %p713, %p714
        %p716 = pneg %p715
        %s717 = scalar_select %p716, 1, 0
        %s718 = scvt.s32.f32 %s717
        %v719 = vstv %s705
        %v720 = vmin.f32 %v183, %v719
        %v721 = vmin.f32 %v187, %v719
        %v722 = vmin.f32 %v189, %v719
        %v723 = vstv %s701
        %v724 = vmax.f32 %v163, %v723
        %v725 = vmax.f32 %v167, %v723
        %v726 = vmax.f32 %v169, %v723
        %v727 = vsub.f32 %v720, %v724
        %v728 = vsub.f32 %v721, %v725
        %v729 = vsub.f32 %v722, %v726
        %v730 = vadd.f32 %v727, 1.0
        %v731 = vadd.f32 %v728, 1.0
        %v732 = vadd.f32 %v729, 1.0
        %v733 = vmax.f32 %v730, 0.0
        %v734 = vmax.f32 %v731, 0.0
        %v735 = vmax.f32 %v732, 0.0
        %v736 = vstv %s707
        %v737 = vmin.f32 %v193, %v736
        %v738 = vmin.f32 %v197, %v736
        %v739 = vmin.f32 %v199, %v736
        %v740 = vstv %s703
        %v741 = vmax.f32 %v173, %v740
        %v742 = vmax.f32 %v177, %v740
        %v743 = vmax.f32 %v179, %v740
        %v744 = vsub.f32 %v737, %v741
        %v745 = vsub.f32 %v738, %v742
        %v746 = vsub.f32 %v739, %v743
        %v747 = vadd.f32 %v744, 1.0
        %v748 = vadd.f32 %v745, 1.0
        %v749 = vadd.f32 %v746, 1.0
        %v750 = vmax.f32 %v747, 0.0
        %v751 = vmax.f32 %v748, 0.0
        %v752 = vmax.f32 %v749, 0.0
        %v753 = vmul.f32 %v733, %v750
        %v754 = vmul.f32 %v734, %v751
        %v755 = vmul.f32 %v735, %v752
        %v756 = vstv %s712
        %v757 = vsub.f32 %v756, %v753
        %v758 = vsub.f32 %v756, %v754
        %v759 = vsub.f32 %v756, %v755
        %v760 = vadd.f32 %v203, %v757
        %v761 = vadd.f32 %v207, %v758
        %v762 = vadd.f32 %v209, %v759
        %v763 = vrcp.pop %v760
        %v764 = vmul.f32 %v760, %v763
        %v765 = vsub.f32 1.0, %v764
        %v766 = vmul.f32 %v763, %v765
        %v767 = vadd.f32 %v763, %v766
        %vm768 = vweird.f32 %v760
        %vm769 = vweird.f32 %v763
        %vm770 = vmor %vm768, %vm769
        %v771 = vsel %vm770, %v763, %v767
        %v772 = vand.u32 2147483647, %v760
        %vm773 = vcmp.eq.f32.partialorder %v772, 8.507059e+37
        %v774 = vand.u32 %v760, 2147483648
        %v775 = vor.u32 1.1754944e-38, %v774
        %v776 = vsel %vm773, %v775, %v771
        %v777 = vmul.f32 %v753, %v776
        %v778 = vrcp.pop %v761
        %v779 = vmul.f32 %v761, %v778
        %v780 = vsub.f32 1.0, %v779
        %v781 = vmul.f32 %v778, %v780
        %v782 = vadd.f32 %v778, %v781
        %vm783 = vweird.f32 %v761
        %vm784 = vweird.f32 %v778
        %vm785 = vmor %vm783, %vm784
        %v786 = vsel %vm785, %v778, %v782
        %v787 = vand.u32 2147483647, %v761
        %vm788 = vcmp.eq.f32.partialorder %v787, 8.507059e+37
        %v789 = vand.u32 %v761, 2147483648
        %v790 = vor.u32 1.1754944e-38, %v789
        %v791 = vsel %vm788, %v790, %v786
        %v792 = vmul.f32 %v754, %v791
        %v793 = vrcp.pop %v762
        %v794 = vmul.f32 %v762, %v793
        %v795 = vsub.f32 1.0, %v794
        %v796 = vmul.f32 %v793, %v795
        %v797 = vadd.f32 %v793, %v796
        %vm798 = vweird.f32 %v762
        %vm799 = vweird.f32 %v793
        %vm800 = vmor %vm798, %vm799
        %v801 = vsel %vm800, %v793, %v797
        %v802 = vand.u32 2147483647, %v762
        %vm803 = vcmp.eq.f32.partialorder %v802, 8.507059e+37
        %v804 = vand.u32 %v762, 2147483648
        %v805 = vor.u32 1.1754944e-38, %v804
        %v806 = vsel %vm803, %v805, %v801
        %v807 = vmul.f32 %v755, %v806
        %s808 = ssub.f32 1.0, %s718
        %v809 = vstv %s808
        %v810 = vmul.f32 %v777, %v809
        %v811 = vmul.f32 %v792, %v809
        %v812 = vmul.f32 %v807, %v809
        %v813 = vsel %vm233, -1.0, %v810
        %v814 = vsel %vm234, -1.0, %v811
        %v815 = vsel %vm235, -1.0, %v812
        %vm816 = vcmp.gt.f32.partialorder %v813, %v588
        %vm817 = vcmp.gt.f32.partialorder %v814, %v589
        %vm818 = vcmp.gt.f32.partialorder %v815, %v590
        %v819 = vsel %vm816, %v813, %v588
        %v820 = vsel %vm817, %v814, %v589
        %v821 = vsel %vm818, %v815, %v590
        %v822 = vsel %vm816, %v723, %v591
        %v823 = vsel %vm817, %v723, %v592
        %v824 = vsel %vm818, %v723, %v593
        %v825 = vsel %vm816, %v740, %v594
        %v826 = vsel %vm817, %v740, %v595
        %v827 = vsel %vm818, %v740, %v596
        %v828 = vsel %vm816, %v719, %v597
        %v829 = vsel %vm817, %v719, %v598
        %v830 = vsel %vm818, %v719, %v599
        %v831 = vsel %vm816, %v736, %v600
        %v832 = vsel %vm817, %v736, %v601
        %v833 = vsel %vm818, %v736, %v602
        %v834 = vsel %vm220, %v813, -1e+30
        %v835 = vsel %vm221, %v814, -1e+30
        %v836 = vsel %vm222, %v815, -1e+30
        %v840 = vperm.slane %v834, 0
        %v841 = vperm.slane %v834, 1
        %v842 = vperm.slane %v834, 2
        %v843 = vperm.slane %v834, 3
        %v844 = vperm.slane %v834, 4
        %v845 = vperm.slane %v834, 5
        %v846 = vperm.slane %v834, 6
        %v847 = vperm.slane %v834, 7
        %v848 = vperm.slane %v835, 0
        %v849 = vperm.slane %v835, 1
        %v850 = vperm.slane %v835, 2
        %v851 = vperm.slane %v835, 3
        %v852 = vperm.slane %v835, 4
        %v853 = vperm.slane %v835, 5
        %v854 = vperm.slane %v835, 6
        %v855 = vperm.slane %v835, 7
        %v856 = vperm.slane %v836, 0
        %v857 = vperm.slane %v836, 1
        %v876 = vsel %vm412, %v840, -inf
        %v877 = vsel %vm412, %v841, -inf
        %v878 = vsel %vm412, %v842, -inf
        %v879 = vsel %vm412, %v843, -inf
        %v880 = vsel %vm412, %v844, -inf
        %v881 = vmax.f32 %v876, %v880
        %v882 = vsel %vm412, %v845, -inf
        %v883 = vmax.f32 %v877, %v882
        %v884 = vsel %vm412, %v846, -inf
        %v885 = vmax.f32 %v878, %v884
        %v886 = vsel %vm412, %v847, -inf
        %v887 = vmax.f32 %v879, %v886
        %v888 = vsel %vm412, %v848, -inf
        %v889 = vmax.f32 %v881, %v888
        %v890 = vsel %vm412, %v849, -inf
        %v891 = vmax.f32 %v883, %v890
        %v892 = vsel %vm412, %v850, -inf
        %v893 = vmax.f32 %v885, %v892
        %v894 = vsel %vm412, %v851, -inf
        %v895 = vmax.f32 %v887, %v894
        %v896 = vsel %vm412, %v852, -inf
        %v897 = vmax.f32 %v889, %v896
        %v898 = vsel %vm412, %v853, -inf
        %v899 = vmax.f32 %v891, %v898
        %v900 = vsel %vm412, %v854, -inf
        %v901 = vmax.f32 %v893, %v900
        %v902 = vsel %vm412, %v855, -inf
        %v903 = vmax.f32 %v895, %v902
        %v904 = vsel %vm412, %v856, -inf
        %v905 = vmax.f32 %v897, %v904
        %v906 = vsel %vm412, %v857, -inf
        %v907 = vmax.f32 %v899, %v906
        %v908 = vmax.f32 %v905, %v907
        %v909 = vmax.f32 %v901, %v903
        %v910 = vmax.f32 %v908, %v909
        %911 = vmax.xlane.f32.xlu0 %v910
        %v912 = vpop.xlane.xlu0 %911
        %vm913 = vcmp.eq.f32.partialorder %v912, 0.0
        %v914 = vsel %vm913, 1e-05, %v912
        %v916 = vperm.slane %v914, 0
        %vm918 = vcmp.eq.f32.partialorder %v834, %v916
        %vm919 = vcmp.eq.f32.partialorder %v835, %v916
        %vm920 = vcmp.eq.f32.partialorder %v836, %v916
        %v921 = vsel %vm918, 1, 0
        %v922 = vsel %vm919, 1, 0
        %v923 = vsel %vm920, 1, 0
        %v924 = vcvt.s32.f32 %v921
        %v925 = vcvt.s32.f32 %v922
        %v926 = vcvt.s32.f32 %v923
        %v927 = vadd.f32 %v696, %v924
        %v928 = vadd.f32 %v697, %v925
        %v929 = vadd.f32 %v698, %v926
        %s930 = sadd.s32 %s467, 3
        %s931 = smul.u32 %s930, 5
        %s932 = sld [smem:[#allocation3 + %s931]]
        %s933 = sadd.s32 %s931, 1
        %s934 = sld [smem:[#allocation3 + %s933]]
        %s935 = sadd.s32 %s931, 2
        %s936 = sld [smem:[#allocation3 + %s935]]
        %s937 = sadd.s32 %s931, 3
        %s938 = sld [smem:[#allocation3 + %s937]]
        %s939 = ssub.f32 %s936, %s932
        %s940 = sadd.f32 %s939, 1.0
        %s941 = ssub.f32 %s938, %s934
        %s942 = sadd.f32 %s941, 1.0
        %s943 = smul.f32 %s940, %s942
        %p944 = scmp.eq.f32.partialorder %s940, 1.0
        %p945 = scmp.eq.f32.partialorder %s942, 1.0
        %p946 = pnand %p944, %p945
        %p947 = pneg %p946
        %s948 = scalar_select %p947, 1, 0
        %s949 = scvt.s32.f32 %s948
        %v950 = vstv %s936
        %v951 = vmin.f32 %v183, %v950
        %v952 = vmin.f32 %v187, %v950
        %v953 = vmin.f32 %v189, %v950
        %v954 = vstv %s932
        %v955 = vmax.f32 %v163, %v954
        %v956 = vmax.f32 %v167, %v954
        %v957 = vmax.f32 %v169, %v954
        %v958 = vsub.f32 %v951, %v955
        %v959 = vsub.f32 %v952, %v956
        %v960 = vsub.f32 %v953, %v957
        %v961 = vadd.f32 %v958, 1.0
        %v962 = vadd.f32 %v959, 1.0
        %v963 = vadd.f32 %v960, 1.0
        %v964 = vmax.f32 %v961, 0.0
        %v965 = vmax.f32 %v962, 0.0
        %v966 = vmax.f32 %v963, 0.0
        %v967 = vstv %s938
        %v968 = vmin.f32 %v193, %v967
        %v969 = vmin.f32 %v197, %v967
        %v970 = vmin.f32 %v199, %v967
        %v971 = vstv %s934
        %v972 = vmax.f32 %v173, %v971
        %v973 = vmax.f32 %v177, %v971
        %v974 = vmax.f32 %v179, %v971
        %v975 = vsub.f32 %v968, %v972
        %v976 = vsub.f32 %v969, %v973
        %v977 = vsub.f32 %v970, %v974
        %v978 = vadd.f32 %v975, 1.0
        %v979 = vadd.f32 %v976, 1.0
        %v980 = vadd.f32 %v977, 1.0
        %v981 = vmax.f32 %v978, 0.0
        %v982 = vmax.f32 %v979, 0.0
        %v983 = vmax.f32 %v980, 0.0
        %v984 = vmul.f32 %v964, %v981
        %v985 = vmul.f32 %v965, %v982
        %v986 = vmul.f32 %v966, %v983
        %v987 = vstv %s943
        %v988 = vsub.f32 %v987, %v984
        %v989 = vsub.f32 %v987, %v985
        %v990 = vsub.f32 %v987, %v986
        %v991 = vadd.f32 %v203, %v988
        %v992 = vadd.f32 %v207, %v989
        %v993 = vadd.f32 %v209, %v990
        %v994 = vrcp.pop %v991
        %v995 = vmul.f32 %v991, %v994
        %v996 = vsub.f32 1.0, %v995
        %v997 = vmul.f32 %v994, %v996
        %v998 = vadd.f32 %v994, %v997
        %vm999 = vweird.f32 %v991
        %vm1000 = vweird.f32 %v994
        %vm1001 = vmor %vm999, %vm1000
        %v1002 = vsel %vm1001, %v994, %v998
        %v1003 = vand.u32 2147483647, %v991
        %vm1004 = vcmp.eq.f32.partialorder %v1003, 8.507059e+37
        %v1005 = vand.u32 %v991, 2147483648
        %v1006 = vor.u32 1.1754944e-38, %v1005
        %v1007 = vsel %vm1004, %v1006, %v1002
        %v1008 = vmul.f32 %v984, %v1007
        %v1009 = vrcp.pop %v992
        %v1010 = vmul.f32 %v992, %v1009
        %v1011 = vsub.f32 1.0, %v1010
        %v1012 = vmul.f32 %v1009, %v1011
        %v1013 = vadd.f32 %v1009, %v1012
        %vm1014 = vweird.f32 %v992
        %vm1015 = vweird.f32 %v1009
        %vm1016 = vmor %vm1014, %vm1015
        %v1017 = vsel %vm1016, %v1009, %v1013
        %v1018 = vand.u32 2147483647, %v992
        %vm1019 = vcmp.eq.f32.partialorder %v1018, 8.507059e+37
        %v1020 = vand.u32 %v992, 2147483648
        %v1021 = vor.u32 1.1754944e-38, %v1020
        %v1022 = vsel %vm1019, %v1021, %v1017
        %v1023 = vmul.f32 %v985, %v1022
        %v1024 = vrcp.pop %v993
        %v1025 = vmul.f32 %v993, %v1024
        %v1026 = vsub.f32 1.0, %v1025
        %v1027 = vmul.f32 %v1024, %v1026
        %v1028 = vadd.f32 %v1024, %v1027
        %vm1029 = vweird.f32 %v993
        %vm1030 = vweird.f32 %v1024
        %vm1031 = vmor %vm1029, %vm1030
        %v1032 = vsel %vm1031, %v1024, %v1028
        %v1033 = vand.u32 2147483647, %v993
        %vm1034 = vcmp.eq.f32.partialorder %v1033, 8.507059e+37
        %v1035 = vand.u32 %v993, 2147483648
        %v1036 = vor.u32 1.1754944e-38, %v1035
        %v1037 = vsel %vm1034, %v1036, %v1032
        %v1038 = vmul.f32 %v986, %v1037
        %s1039 = ssub.f32 1.0, %s949
        %v1040 = vstv %s1039
        %v1041 = vmul.f32 %v1008, %v1040
        %v1042 = vmul.f32 %v1023, %v1040
        %v1043 = vmul.f32 %v1038, %v1040
        %v1044 = vsel %vm233, -1.0, %v1041
        %v1045 = vsel %vm234, -1.0, %v1042
        %v1046 = vsel %vm235, -1.0, %v1043
        %vm1047 = vcmp.gt.f32.partialorder %v1044, %v819
        %vm1048 = vcmp.gt.f32.partialorder %v1045, %v820
        %vm1049 = vcmp.gt.f32.partialorder %v1046, %v821
        %v1050 = vsel %vm1047, %v1044, %v819
        %v1051 = vsel %vm1048, %v1045, %v820
        %v1052 = vsel %vm1049, %v1046, %v821
        %v1053 = vsel %vm1047, %v954, %v822
        %v1054 = vsel %vm1048, %v954, %v823
        %v1055 = vsel %vm1049, %v954, %v824
        %v1056 = vsel %vm1047, %v971, %v825
        %v1057 = vsel %vm1048, %v971, %v826
        %v1058 = vsel %vm1049, %v971, %v827
        %v1059 = vsel %vm1047, %v950, %v828
        %v1060 = vsel %vm1048, %v950, %v829
        %v1061 = vsel %vm1049, %v950, %v830
        %v1062 = vsel %vm1047, %v967, %v831
        %v1063 = vsel %vm1048, %v967, %v832
        %v1064 = vsel %vm1049, %v967, %v833
        %v1065 = vsel %vm220, %v1044, -1e+30
        %v1066 = vsel %vm221, %v1045, -1e+30
        %v1067 = vsel %vm222, %v1046, -1e+30
        %v1071 = vperm.slane %v1065, 0
        %v1072 = vperm.slane %v1065, 1
        %v1073 = vperm.slane %v1065, 2
        %v1074 = vperm.slane %v1065, 3
        %v1075 = vperm.slane %v1065, 4
        %v1076 = vperm.slane %v1065, 5
        %v1077 = vperm.slane %v1065, 6
        %v1078 = vperm.slane %v1065, 7
        %v1079 = vperm.slane %v1066, 0
        %v1080 = vperm.slane %v1066, 1
        %v1081 = vperm.slane %v1066, 2
        %v1082 = vperm.slane %v1066, 3
        %v1083 = vperm.slane %v1066, 4
        %v1084 = vperm.slane %v1066, 5
        %v1085 = vperm.slane %v1066, 6
        %v1086 = vperm.slane %v1066, 7
        %v1087 = vperm.slane %v1067, 0
        %v1088 = vperm.slane %v1067, 1
        %v1107 = vsel %vm412, %v1071, -inf
        %v1108 = vsel %vm412, %v1072, -inf
        %v1109 = vsel %vm412, %v1073, -inf
        %v1110 = vsel %vm412, %v1074, -inf
        %v1111 = vsel %vm412, %v1075, -inf
        %v1112 = vmax.f32 %v1107, %v1111
        %v1113 = vsel %vm412, %v1076, -inf
        %v1114 = vmax.f32 %v1108, %v1113
        %v1115 = vsel %vm412, %v1077, -inf
        %v1116 = vmax.f32 %v1109, %v1115
        %v1117 = vsel %vm412, %v1078, -inf
        %v1118 = vmax.f32 %v1110, %v1117
        %v1119 = vsel %vm412, %v1079, -inf
        %v1120 = vmax.f32 %v1112, %v1119
        %v1121 = vsel %vm412, %v1080, -inf
        %v1122 = vmax.f32 %v1114, %v1121
        %v1123 = vsel %vm412, %v1081, -inf
        %v1124 = vmax.f32 %v1116, %v1123
        %v1125 = vsel %vm412, %v1082, -inf
        %v1126 = vmax.f32 %v1118, %v1125
        %v1127 = vsel %vm412, %v1083, -inf
        %v1128 = vmax.f32 %v1120, %v1127
        %v1129 = vsel %vm412, %v1084, -inf
        %v1130 = vmax.f32 %v1122, %v1129
        %v1131 = vsel %vm412, %v1085, -inf
        %v1132 = vmax.f32 %v1124, %v1131
        %v1133 = vsel %vm412, %v1086, -inf
        %v1134 = vmax.f32 %v1126, %v1133
        %v1135 = vsel %vm412, %v1087, -inf
        %v1136 = vmax.f32 %v1128, %v1135
        %v1137 = vsel %vm412, %v1088, -inf
        %v1138 = vmax.f32 %v1130, %v1137
        %v1139 = vmax.f32 %v1136, %v1138
        %v1140 = vmax.f32 %v1132, %v1134
        %v1141 = vmax.f32 %v1139, %v1140
        %1142 = vmax.xlane.f32.xlu0 %v1141
        %v1143 = vpop.xlane.xlu0 %1142
        %vm1144 = vcmp.eq.f32.partialorder %v1143, 0.0
        %v1145 = vsel %vm1144, 1e-05, %v1143
        %v1147 = vperm.slane %v1145, 0
        %vm1149 = vcmp.eq.f32.partialorder %v1065, %v1147
        %vm1150 = vcmp.eq.f32.partialorder %v1066, %v1147
        %vm1151 = vcmp.eq.f32.partialorder %v1067, %v1147
        %v1152 = vsel %vm1149, 1, 0
        %v1153 = vsel %vm1150, 1, 0
        %v1154 = vsel %vm1151, 1, 0
        %v1155 = vcvt.s32.f32 %v1152
        %v1156 = vcvt.s32.f32 %v1153
        %v1157 = vcvt.s32.f32 %v1154
        %v1158 = vadd.f32 %v927, %v1155
        %v1159 = vadd.f32 %v928, %v1156
        %v1160 = vadd.f32 %v929, %v1157
        %s1161 = sadd.s32 %s467, 4
        %s1162 = smul.u32 %s1161, 5
        %s1163 = sld [smem:[#allocation3 + %s1162]]
        %s1164 = sadd.s32 %s1162, 1
        %s1165 = sld [smem:[#allocation3 + %s1164]]
        %s1166 = sadd.s32 %s1162, 2
        %s1167 = sld [smem:[#allocation3 + %s1166]]
        %s1168 = sadd.s32 %s1162, 3
        %s1169 = sld [smem:[#allocation3 + %s1168]]
        %s1170 = ssub.f32 %s1167, %s1163
        %s1171 = sadd.f32 %s1170, 1.0
        %s1172 = ssub.f32 %s1169, %s1165
        %s1173 = sadd.f32 %s1172, 1.0
        %s1174 = smul.f32 %s1171, %s1173
        %p1175 = scmp.eq.f32.partialorder %s1171, 1.0
        %p1176 = scmp.eq.f32.partialorder %s1173, 1.0
        %p1177 = pnand %p1175, %p1176
        %p1178 = pneg %p1177
        %s1179 = scalar_select %p1178, 1, 0
        %s1180 = scvt.s32.f32 %s1179
        %v1181 = vstv %s1167
        %v1182 = vmin.f32 %v183, %v1181
        %v1183 = vmin.f32 %v187, %v1181
        %v1184 = vmin.f32 %v189, %v1181
        %v1185 = vstv %s1163
        %v1186 = vmax.f32 %v163, %v1185
        %v1187 = vmax.f32 %v167, %v1185
        %v1188 = vmax.f32 %v169, %v1185
        %v1189 = vsub.f32 %v1182, %v1186
        %v1190 = vsub.f32 %v1183, %v1187
        %v1191 = vsub.f32 %v1184, %v1188
        %v1192 = vadd.f32 %v1189, 1.0
        %v1193 = vadd.f32 %v1190, 1.0
        %v1194 = vadd.f32 %v1191, 1.0
        %v1195 = vmax.f32 %v1192, 0.0
        %v1196 = vmax.f32 %v1193, 0.0
        %v1197 = vmax.f32 %v1194, 0.0
        %v1198 = vstv %s1169
        %v1199 = vmin.f32 %v193, %v1198
        %v1200 = vmin.f32 %v197, %v1198
        %v1201 = vmin.f32 %v199, %v1198
        %v1202 = vstv %s1165
        %v1203 = vmax.f32 %v173, %v1202
        %v1204 = vmax.f32 %v177, %v1202
        %v1205 = vmax.f32 %v179, %v1202
        %v1206 = vsub.f32 %v1199, %v1203
        %v1207 = vsub.f32 %v1200, %v1204
        %v1208 = vsub.f32 %v1201, %v1205
        %v1209 = vadd.f32 %v1206, 1.0
        %v1210 = vadd.f32 %v1207, 1.0
        %v1211 = vadd.f32 %v1208, 1.0
        %v1212 = vmax.f32 %v1209, 0.0
        %v1213 = vmax.f32 %v1210, 0.0
        %v1214 = vmax.f32 %v1211, 0.0
        %v1215 = vmul.f32 %v1195, %v1212
        %v1216 = vmul.f32 %v1196, %v1213
        %v1217 = vmul.f32 %v1197, %v1214
        %v1218 = vstv %s1174
        %v1219 = vsub.f32 %v1218, %v1215
        %v1220 = vsub.f32 %v1218, %v1216
        %v1221 = vsub.f32 %v1218, %v1217
        %v1222 = vadd.f32 %v203, %v1219
        %v1223 = vadd.f32 %v207, %v1220
        %v1224 = vadd.f32 %v209, %v1221
        %v1225 = vrcp.pop %v1222
        %v1226 = vmul.f32 %v1222, %v1225
        %v1227 = vsub.f32 1.0, %v1226
        %v1228 = vmul.f32 %v1225, %v1227
        %v1229 = vadd.f32 %v1225, %v1228
        %vm1230 = vweird.f32 %v1222
        %vm1231 = vweird.f32 %v1225
        %vm1232 = vmor %vm1230, %vm1231
        %v1233 = vsel %vm1232, %v1225, %v1229
        %v1234 = vand.u32 2147483647, %v1222
        %vm1235 = vcmp.eq.f32.partialorder %v1234, 8.507059e+37
        %v1236 = vand.u32 %v1222, 2147483648
        %v1237 = vor.u32 1.1754944e-38, %v1236
        %v1238 = vsel %vm1235, %v1237, %v1233
        %v1239 = vmul.f32 %v1215, %v1238
        %v1240 = vrcp.pop %v1223
        %v1241 = vmul.f32 %v1223, %v1240
        %v1242 = vsub.f32 1.0, %v1241
        %v1243 = vmul.f32 %v1240, %v1242
        %v1244 = vadd.f32 %v1240, %v1243
        %vm1245 = vweird.f32 %v1223
        %vm1246 = vweird.f32 %v1240
        %vm1247 = vmor %vm1245, %vm1246
        %v1248 = vsel %vm1247, %v1240, %v1244
        %v1249 = vand.u32 2147483647, %v1223
        %vm1250 = vcmp.eq.f32.partialorder %v1249, 8.507059e+37
        %v1251 = vand.u32 %v1223, 2147483648
        %v1252 = vor.u32 1.1754944e-38, %v1251
        %v1253 = vsel %vm1250, %v1252, %v1248
        %v1254 = vmul.f32 %v1216, %v1253
        %v1255 = vrcp.pop %v1224
        %v1256 = vmul.f32 %v1224, %v1255
        %v1257 = vsub.f32 1.0, %v1256
        %v1258 = vmul.f32 %v1255, %v1257
        %v1259 = vadd.f32 %v1255, %v1258
        %vm1260 = vweird.f32 %v1224
        %vm1261 = vweird.f32 %v1255
        %vm1262 = vmor %vm1260, %vm1261
        %v1263 = vsel %vm1262, %v1255, %v1259
        %v1264 = vand.u32 2147483647, %v1224
        %vm1265 = vcmp.eq.f32.partialorder %v1264, 8.507059e+37
        %v1266 = vand.u32 %v1224, 2147483648
        %v1267 = vor.u32 1.1754944e-38, %v1266
        %v1268 = vsel %vm1265, %v1267, %v1263
        %v1269 = vmul.f32 %v1217, %v1268
        %s1270 = ssub.f32 1.0, %s1180
        %v1271 = vstv %s1270
        %v1272 = vmul.f32 %v1239, %v1271
        %v1273 = vmul.f32 %v1254, %v1271
        %v1274 = vmul.f32 %v1269, %v1271
        %v1275 = vsel %vm233, -1.0, %v1272
        %v1276 = vsel %vm234, -1.0, %v1273
        %v1277 = vsel %vm235, -1.0, %v1274
        %vm1278 = vcmp.gt.f32.partialorder %v1275, %v1050
        %vm1279 = vcmp.gt.f32.partialorder %v1276, %v1051
        %vm1280 = vcmp.gt.f32.partialorder %v1277, %v1052
        %v1281 = vsel %vm1278, %v1275, %v1050
        %v1282 = vsel %vm1279, %v1276, %v1051
        %v1283 = vsel %vm1280, %v1277, %v1052
        %v1284 = vsel %vm1278, %v1185, %v1053
        %v1285 = vsel %vm1279, %v1185, %v1054
        %v1286 = vsel %vm1280, %v1185, %v1055
        %v1287 = vsel %vm1278, %v1202, %v1056
        %v1288 = vsel %vm1279, %v1202, %v1057
        %v1289 = vsel %vm1280, %v1202, %v1058
        %v1290 = vsel %vm1278, %v1181, %v1059
        %v1291 = vsel %vm1279, %v1181, %v1060
        %v1292 = vsel %vm1280, %v1181, %v1061
        %v1293 = vsel %vm1278, %v1198, %v1062
        %v1294 = vsel %vm1279, %v1198, %v1063
        %v1295 = vsel %vm1280, %v1198, %v1064
        %v1296 = vsel %vm220, %v1275, -1e+30
        %v1297 = vsel %vm221, %v1276, -1e+30
        %v1298 = vsel %vm222, %v1277, -1e+30
        %v1302 = vperm.slane %v1296, 0
        %v1303 = vperm.slane %v1296, 1
        %v1304 = vperm.slane %v1296, 2
        %v1305 = vperm.slane %v1296, 3
        %v1306 = vperm.slane %v1296, 4
        %v1307 = vperm.slane %v1296, 5
        %v1308 = vperm.slane %v1296, 6
        %v1309 = vperm.slane %v1296, 7
        %v1310 = vperm.slane %v1297, 0
        %v1311 = vperm.slane %v1297, 1
        %v1312 = vperm.slane %v1297, 2
        %v1313 = vperm.slane %v1297, 3
        %v1314 = vperm.slane %v1297, 4
        %v1315 = vperm.slane %v1297, 5
        %v1316 = vperm.slane %v1297, 6
        %v1317 = vperm.slane %v1297, 7
        %v1318 = vperm.slane %v1298, 0
        %v1319 = vperm.slane %v1298, 1
        %v1338 = vsel %vm412, %v1302, -inf
        %v1339 = vsel %vm412, %v1303, -inf
        %v1340 = vsel %vm412, %v1304, -inf
        %v1341 = vsel %vm412, %v1305, -inf
        %v1342 = vsel %vm412, %v1306, -inf
        %v1343 = vmax.f32 %v1338, %v1342
        %v1344 = vsel %vm412, %v1307, -inf
        %v1345 = vmax.f32 %v1339, %v1344
        %v1346 = vsel %vm412, %v1308, -inf
        %v1347 = vmax.f32 %v1340, %v1346
        %v1348 = vsel %vm412, %v1309, -inf
        %v1349 = vmax.f32 %v1341, %v1348
        %v1350 = vsel %vm412, %v1310, -inf
        %v1351 = vmax.f32 %v1343, %v1350
        %v1352 = vsel %vm412, %v1311, -inf
        %v1353 = vmax.f32 %v1345, %v1352
        %v1354 = vsel %vm412, %v1312, -inf
        %v1355 = vmax.f32 %v1347, %v1354
        %v1356 = vsel %vm412, %v1313, -inf
        %v1357 = vmax.f32 %v1349, %v1356
        %v1358 = vsel %vm412, %v1314, -inf
        %v1359 = vmax.f32 %v1351, %v1358
        %v1360 = vsel %vm412, %v1315, -inf
        %v1361 = vmax.f32 %v1353, %v1360
        %v1362 = vsel %vm412, %v1316, -inf
        %v1363 = vmax.f32 %v1355, %v1362
        %v1364 = vsel %vm412, %v1317, -inf
        %v1365 = vmax.f32 %v1357, %v1364
        %v1366 = vsel %vm412, %v1318, -inf
        %v1367 = vmax.f32 %v1359, %v1366
        %v1368 = vsel %vm412, %v1319, -inf
        %v1369 = vmax.f32 %v1361, %v1368
        %v1370 = vmax.f32 %v1367, %v1369
        %v1371 = vmax.f32 %v1363, %v1365
        %v1372 = vmax.f32 %v1370, %v1371
        %1373 = vmax.xlane.f32.xlu0 %v1372
        %v1374 = vpop.xlane.xlu0 %1373
        %vm1375 = vcmp.eq.f32.partialorder %v1374, 0.0
        %v1376 = vsel %vm1375, 1e-05, %v1374
        %v1378 = vperm.slane %v1376, 0
        %vm1380 = vcmp.eq.f32.partialorder %v1296, %v1378
        %vm1381 = vcmp.eq.f32.partialorder %v1297, %v1378
        %vm1382 = vcmp.eq.f32.partialorder %v1298, %v1378
        %v1383 = vsel %vm1380, 1, 0
        %v1384 = vsel %vm1381, 1, 0
        %v1385 = vsel %vm1382, 1, 0
        %v1386 = vcvt.s32.f32 %v1383
        %v1387 = vcvt.s32.f32 %v1384
        %v1388 = vcvt.s32.f32 %v1385
        %v1389 = vadd.f32 %v1158, %v1386
        %v1390 = vadd.f32 %v1159, %v1387
        %v1391 = vadd.f32 %v1160, %v1388
        %s1392 = sadd.s32 %s467, 5
        %s1393 = smul.u32 %s1392, 5
        %s1394 = sld [smem:[#allocation3 + %s1393]]
        %s1395 = sadd.s32 %s1393, 1
        %s1396 = sld [smem:[#allocation3 + %s1395]]
        %s1397 = sadd.s32 %s1393, 2
        %s1398 = sld [smem:[#allocation3 + %s1397]]
        %s1399 = sadd.s32 %s1393, 3
        %s1400 = sld [smem:[#allocation3 + %s1399]]
        %s1401 = ssub.f32 %s1398, %s1394
        %s1402 = sadd.f32 %s1401, 1.0
        %s1403 = ssub.f32 %s1400, %s1396
        %s1404 = sadd.f32 %s1403, 1.0
        %s1405 = smul.f32 %s1402, %s1404
        %p1406 = scmp.eq.f32.partialorder %s1402, 1.0
        %p1407 = scmp.eq.f32.partialorder %s1404, 1.0
        %p1408 = pnand %p1406, %p1407
        %p1409 = pneg %p1408
        %s1410 = scalar_select %p1409, 1, 0
        %s1411 = scvt.s32.f32 %s1410
        %v1412 = vstv %s1398
        %v1413 = vmin.f32 %v183, %v1412
        %v1414 = vmin.f32 %v187, %v1412
        %v1415 = vmin.f32 %v189, %v1412
        %v1416 = vstv %s1394
        %v1417 = vmax.f32 %v163, %v1416
        %v1418 = vmax.f32 %v167, %v1416
        %v1419 = vmax.f32 %v169, %v1416
        %v1420 = vsub.f32 %v1413, %v1417
        %v1421 = vsub.f32 %v1414, %v1418
        %v1422 = vsub.f32 %v1415, %v1419
        %v1423 = vadd.f32 %v1420, 1.0
        %v1424 = vadd.f32 %v1421, 1.0
        %v1425 = vadd.f32 %v1422, 1.0
        %v1426 = vmax.f32 %v1423, 0.0
        %v1427 = vmax.f32 %v1424, 0.0
        %v1428 = vmax.f32 %v1425, 0.0
        %v1429 = vstv %s1400
        %v1430 = vmin.f32 %v193, %v1429
        %v1431 = vmin.f32 %v197, %v1429
        %v1432 = vmin.f32 %v199, %v1429
        %v1433 = vstv %s1396
        %v1434 = vmax.f32 %v173, %v1433
        %v1435 = vmax.f32 %v177, %v1433
        %v1436 = vmax.f32 %v179, %v1433
        %v1437 = vsub.f32 %v1430, %v1434
        %v1438 = vsub.f32 %v1431, %v1435
        %v1439 = vsub.f32 %v1432, %v1436
        %v1440 = vadd.f32 %v1437, 1.0
        %v1441 = vadd.f32 %v1438, 1.0
        %v1442 = vadd.f32 %v1439, 1.0
        %v1443 = vmax.f32 %v1440, 0.0
        %v1444 = vmax.f32 %v1441, 0.0
        %v1445 = vmax.f32 %v1442, 0.0
        %v1446 = vmul.f32 %v1426, %v1443
        %v1447 = vmul.f32 %v1427, %v1444
        %v1448 = vmul.f32 %v1428, %v1445
        %v1449 = vstv %s1405
        %v1450 = vsub.f32 %v1449, %v1446
        %v1451 = vsub.f32 %v1449, %v1447
        %v1452 = vsub.f32 %v1449, %v1448
        %v1453 = vadd.f32 %v203, %v1450
        %v1454 = vadd.f32 %v207, %v1451
        %v1455 = vadd.f32 %v209, %v1452
        %v1456 = vrcp.pop %v1453
        %v1457 = vmul.f32 %v1453, %v1456
        %v1458 = vsub.f32 1.0, %v1457
        %v1459 = vmul.f32 %v1456, %v1458
        %v1460 = vadd.f32 %v1456, %v1459
        %vm1461 = vweird.f32 %v1453
        %vm1462 = vweird.f32 %v1456
        %vm1463 = vmor %vm1461, %vm1462
        %v1464 = vsel %vm1463, %v1456, %v1460
        %v1465 = vand.u32 2147483647, %v1453
        %vm1466 = vcmp.eq.f32.partialorder %v1465, 8.507059e+37
        %v1467 = vand.u32 %v1453, 2147483648
        %v1468 = vor.u32 1.1754944e-38, %v1467
        %v1469 = vsel %vm1466, %v1468, %v1464
        %v1470 = vmul.f32 %v1446, %v1469
        %v1471 = vrcp.pop %v1454
        %v1472 = vmul.f32 %v1454, %v1471
        %v1473 = vsub.f32 1.0, %v1472
        %v1474 = vmul.f32 %v1471, %v1473
        %v1475 = vadd.f32 %v1471, %v1474
        %vm1476 = vweird.f32 %v1454
        %vm1477 = vweird.f32 %v1471
        %vm1478 = vmor %vm1476, %vm1477
        %v1479 = vsel %vm1478, %v1471, %v1475
        %v1480 = vand.u32 2147483647, %v1454
        %vm1481 = vcmp.eq.f32.partialorder %v1480, 8.507059e+37
        %v1482 = vand.u32 %v1454, 2147483648
        %v1483 = vor.u32 1.1754944e-38, %v1482
        %v1484 = vsel %vm1481, %v1483, %v1479
        %v1485 = vmul.f32 %v1447, %v1484
        %v1486 = vrcp.pop %v1455
        %v1487 = vmul.f32 %v1455, %v1486
        %v1488 = vsub.f32 1.0, %v1487
        %v1489 = vmul.f32 %v1486, %v1488
        %v1490 = vadd.f32 %v1486, %v1489
        %vm1491 = vweird.f32 %v1455
        %vm1492 = vweird.f32 %v1486
        %vm1493 = vmor %vm1491, %vm1492
        %v1494 = vsel %vm1493, %v1486, %v1490
        %v1495 = vand.u32 2147483647, %v1455
        %vm1496 = vcmp.eq.f32.partialorder %v1495, 8.507059e+37
        %v1497 = vand.u32 %v1455, 2147483648
        %v1498 = vor.u32 1.1754944e-38, %v1497
        %v1499 = vsel %vm1496, %v1498, %v1494
        %v1500 = vmul.f32 %v1448, %v1499
        %s1501 = ssub.f32 1.0, %s1411
        %v1502 = vstv %s1501
        %v1503 = vmul.f32 %v1470, %v1502
        %v1504 = vmul.f32 %v1485, %v1502
        %v1505 = vmul.f32 %v1500, %v1502
        %v1506 = vsel %vm233, -1.0, %v1503
        %v1507 = vsel %vm234, -1.0, %v1504
        %v1508 = vsel %vm235, -1.0, %v1505
        %vm1509 = vcmp.gt.f32.partialorder %v1506, %v1281
        %vm1510 = vcmp.gt.f32.partialorder %v1507, %v1282
        %vm1511 = vcmp.gt.f32.partialorder %v1508, %v1283
        %v1512 = vsel %vm1509, %v1506, %v1281
        %v1513 = vsel %vm1510, %v1507, %v1282
        %v1514 = vsel %vm1511, %v1508, %v1283
        %v1515 = vsel %vm1509, %v1416, %v1284
        %v1516 = vsel %vm1510, %v1416, %v1285
        %v1517 = vsel %vm1511, %v1416, %v1286
        %v1518 = vsel %vm1509, %v1433, %v1287
        %v1519 = vsel %vm1510, %v1433, %v1288
        %v1520 = vsel %vm1511, %v1433, %v1289
        %v1521 = vsel %vm1509, %v1412, %v1290
        %v1522 = vsel %vm1510, %v1412, %v1291
        %v1523 = vsel %vm1511, %v1412, %v1292
        %v1524 = vsel %vm1509, %v1429, %v1293
        %v1525 = vsel %vm1510, %v1429, %v1294
        %v1526 = vsel %vm1511, %v1429, %v1295
        %v1527 = vsel %vm220, %v1506, -1e+30
        %v1528 = vsel %vm221, %v1507, -1e+30
        %v1529 = vsel %vm222, %v1508, -1e+30
        %v1533 = vperm.slane %v1527, 0
        %v1534 = vperm.slane %v1527, 1
        %v1535 = vperm.slane %v1527, 2
        %v1536 = vperm.slane %v1527, 3
        %v1537 = vperm.slane %v1527, 4
        %v1538 = vperm.slane %v1527, 5
        %v1539 = vperm.slane %v1527, 6
        %v1540 = vperm.slane %v1527, 7
        %v1541 = vperm.slane %v1528, 0
        %v1542 = vperm.slane %v1528, 1
        %v1543 = vperm.slane %v1528, 2
        %v1544 = vperm.slane %v1528, 3
        %v1545 = vperm.slane %v1528, 4
        %v1546 = vperm.slane %v1528, 5
        %v1547 = vperm.slane %v1528, 6
        %v1548 = vperm.slane %v1528, 7
        %v1549 = vperm.slane %v1529, 0
        %v1550 = vperm.slane %v1529, 1
        %v1569 = vsel %vm412, %v1533, -inf
        %v1570 = vsel %vm412, %v1534, -inf
        %v1571 = vsel %vm412, %v1535, -inf
        %v1572 = vsel %vm412, %v1536, -inf
        %v1573 = vsel %vm412, %v1537, -inf
        %v1574 = vmax.f32 %v1569, %v1573
        %v1575 = vsel %vm412, %v1538, -inf
        %v1576 = vmax.f32 %v1570, %v1575
        %v1577 = vsel %vm412, %v1539, -inf
        %v1578 = vmax.f32 %v1571, %v1577
        %v1579 = vsel %vm412, %v1540, -inf
        %v1580 = vmax.f32 %v1572, %v1579
        %v1581 = vsel %vm412, %v1541, -inf
        %v1582 = vmax.f32 %v1574, %v1581
        %v1583 = vsel %vm412, %v1542, -inf
        %v1584 = vmax.f32 %v1576, %v1583
        %v1585 = vsel %vm412, %v1543, -inf
        %v1586 = vmax.f32 %v1578, %v1585
        %v1587 = vsel %vm412, %v1544, -inf
        %v1588 = vmax.f32 %v1580, %v1587
        %v1589 = vsel %vm412, %v1545, -inf
        %v1590 = vmax.f32 %v1582, %v1589
        %v1591 = vsel %vm412, %v1546, -inf
        %v1592 = vmax.f32 %v1584, %v1591
        %v1593 = vsel %vm412, %v1547, -inf
        %v1594 = vmax.f32 %v1586, %v1593
        %v1595 = vsel %vm412, %v1548, -inf
        %v1596 = vmax.f32 %v1588, %v1595
        %v1597 = vsel %vm412, %v1549, -inf
        %v1598 = vmax.f32 %v1590, %v1597
        %v1599 = vsel %vm412, %v1550, -inf
        %v1600 = vmax.f32 %v1592, %v1599
        %v1601 = vmax.f32 %v1598, %v1600
        %v1602 = vmax.f32 %v1594, %v1596
        %v1603 = vmax.f32 %v1601, %v1602
        %1604 = vmax.xlane.f32.xlu0 %v1603
        %v1605 = vpop.xlane.xlu0 %1604
        %vm1606 = vcmp.eq.f32.partialorder %v1605, 0.0
        %v1607 = vsel %vm1606, 1e-05, %v1605
        %v1609 = vperm.slane %v1607, 0
        %vm1611 = vcmp.eq.f32.partialorder %v1527, %v1609
        %vm1612 = vcmp.eq.f32.partialorder %v1528, %v1609
        %vm1613 = vcmp.eq.f32.partialorder %v1529, %v1609
        %v1614 = vsel %vm1611, 1, 0
        %v1615 = vsel %vm1612, 1, 0
        %v1616 = vsel %vm1613, 1, 0
        %v1617 = vcvt.s32.f32 %v1614
        %v1618 = vcvt.s32.f32 %v1615
        %v1619 = vcvt.s32.f32 %v1616
        %v1620 = vadd.f32 %v1389, %v1617
        %v1621 = vadd.f32 %v1390, %v1618
        %v1622 = vadd.f32 %v1391, %v1619
        %s1623 = sadd.s32 %s467, 6
        %s1624 = smul.u32 %s1623, 5
        %s1625 = sld [smem:[#allocation3 + %s1624]]
        %s1626 = sadd.s32 %s1624, 1
        %s1627 = sld [smem:[#allocation3 + %s1626]]
        %s1628 = sadd.s32 %s1624, 2
        %s1629 = sld [smem:[#allocation3 + %s1628]]
        %s1630 = sadd.s32 %s1624, 3
        %s1631 = sld [smem:[#allocation3 + %s1630]]
        %s1632 = ssub.f32 %s1629, %s1625
        %s1633 = sadd.f32 %s1632, 1.0
        %s1634 = ssub.f32 %s1631, %s1627
        %s1635 = sadd.f32 %s1634, 1.0
        %s1636 = smul.f32 %s1633, %s1635
        %p1637 = scmp.eq.f32.partialorder %s1633, 1.0
        %p1638 = scmp.eq.f32.partialorder %s1635, 1.0
        %p1639 = pnand %p1637, %p1638
        %p1640 = pneg %p1639
        %s1641 = scalar_select %p1640, 1, 0
        %s1642 = scvt.s32.f32 %s1641
        %v1643 = vstv %s1629
        %v1644 = vmin.f32 %v183, %v1643
        %v1645 = vmin.f32 %v187, %v1643
        %v1646 = vmin.f32 %v189, %v1643
        %v1647 = vstv %s1625
        %v1648 = vmax.f32 %v163, %v1647
        %v1649 = vmax.f32 %v167, %v1647
        %v1650 = vmax.f32 %v169, %v1647
        %v1651 = vsub.f32 %v1644, %v1648
        %v1652 = vsub.f32 %v1645, %v1649
        %v1653 = vsub.f32 %v1646, %v1650
        %v1654 = vadd.f32 %v1651, 1.0
        %v1655 = vadd.f32 %v1652, 1.0
        %v1656 = vadd.f32 %v1653, 1.0
        %v1657 = vmax.f32 %v1654, 0.0
        %v1658 = vmax.f32 %v1655, 0.0
        %v1659 = vmax.f32 %v1656, 0.0
        %v1660 = vstv %s1631
        %v1661 = vmin.f32 %v193, %v1660
        %v1662 = vmin.f32 %v197, %v1660
        %v1663 = vmin.f32 %v199, %v1660
        %v1664 = vstv %s1627
        %v1665 = vmax.f32 %v173, %v1664
        %v1666 = vmax.f32 %v177, %v1664
        %v1667 = vmax.f32 %v179, %v1664
        %v1668 = vsub.f32 %v1661, %v1665
        %v1669 = vsub.f32 %v1662, %v1666
        %v1670 = vsub.f32 %v1663, %v1667
        %v1671 = vadd.f32 %v1668, 1.0
        %v1672 = vadd.f32 %v1669, 1.0
        %v1673 = vadd.f32 %v1670, 1.0
        %v1674 = vmax.f32 %v1671, 0.0
        %v1675 = vmax.f32 %v1672, 0.0
        %v1676 = vmax.f32 %v1673, 0.0
        %v1677 = vmul.f32 %v1657, %v1674
        %v1678 = vmul.f32 %v1658, %v1675
        %v1679 = vmul.f32 %v1659, %v1676
        %v1680 = vstv %s1636
        %v1681 = vsub.f32 %v1680, %v1677
        %v1682 = vsub.f32 %v1680, %v1678
        %v1683 = vsub.f32 %v1680, %v1679
        %v1684 = vadd.f32 %v203, %v1681
        %v1685 = vadd.f32 %v207, %v1682
        %v1686 = vadd.f32 %v209, %v1683
        %v1687 = vrcp.pop %v1684
        %v1688 = vmul.f32 %v1684, %v1687
        %v1689 = vsub.f32 1.0, %v1688
        %v1690 = vmul.f32 %v1687, %v1689
        %v1691 = vadd.f32 %v1687, %v1690
        %vm1692 = vweird.f32 %v1684
        %vm1693 = vweird.f32 %v1687
        %vm1694 = vmor %vm1692, %vm1693
        %v1695 = vsel %vm1694, %v1687, %v1691
        %v1696 = vand.u32 2147483647, %v1684
        %vm1697 = vcmp.eq.f32.partialorder %v1696, 8.507059e+37
        %v1698 = vand.u32 %v1684, 2147483648
        %v1699 = vor.u32 1.1754944e-38, %v1698
        %v1700 = vsel %vm1697, %v1699, %v1695
        %v1701 = vmul.f32 %v1677, %v1700
        %v1702 = vrcp.pop %v1685
        %v1703 = vmul.f32 %v1685, %v1702
        %v1704 = vsub.f32 1.0, %v1703
        %v1705 = vmul.f32 %v1702, %v1704
        %v1706 = vadd.f32 %v1702, %v1705
        %vm1707 = vweird.f32 %v1685
        %vm1708 = vweird.f32 %v1702
        %vm1709 = vmor %vm1707, %vm1708
        %v1710 = vsel %vm1709, %v1702, %v1706
        %v1711 = vand.u32 2147483647, %v1685
        %vm1712 = vcmp.eq.f32.partialorder %v1711, 8.507059e+37
        %v1713 = vand.u32 %v1685, 2147483648
        %v1714 = vor.u32 1.1754944e-38, %v1713
        %v1715 = vsel %vm1712, %v1714, %v1710
        %v1716 = vmul.f32 %v1678, %v1715
        %v1717 = vrcp.pop %v1686
        %v1718 = vmul.f32 %v1686, %v1717
        %v1719 = vsub.f32 1.0, %v1718
        %v1720 = vmul.f32 %v1717, %v1719
        %v1721 = vadd.f32 %v1717, %v1720
        %vm1722 = vweird.f32 %v1686
        %vm1723 = vweird.f32 %v1717
        %vm1724 = vmor %vm1722, %vm1723
        %v1725 = vsel %vm1724, %v1717, %v1721
        %v1726 = vand.u32 2147483647, %v1686
        %vm1727 = vcmp.eq.f32.partialorder %v1726, 8.507059e+37
        %v1728 = vand.u32 %v1686, 2147483648
        %v1729 = vor.u32 1.1754944e-38, %v1728
        %v1730 = vsel %vm1727, %v1729, %v1725
        %v1731 = vmul.f32 %v1679, %v1730
        %s1732 = ssub.f32 1.0, %s1642
        %v1733 = vstv %s1732
        %v1734 = vmul.f32 %v1701, %v1733
        %v1735 = vmul.f32 %v1716, %v1733
        %v1736 = vmul.f32 %v1731, %v1733
        %v1737 = vsel %vm233, -1.0, %v1734
        %v1738 = vsel %vm234, -1.0, %v1735
        %v1739 = vsel %vm235, -1.0, %v1736
        %vm1740 = vcmp.gt.f32.partialorder %v1737, %v1512
        %vm1741 = vcmp.gt.f32.partialorder %v1738, %v1513
        %vm1742 = vcmp.gt.f32.partialorder %v1739, %v1514
        %v1743 = vsel %vm1740, %v1737, %v1512
        %v1744 = vsel %vm1741, %v1738, %v1513
        %v1745 = vsel %vm1742, %v1739, %v1514
        %v1746 = vsel %vm1740, %v1647, %v1515
        %v1747 = vsel %vm1741, %v1647, %v1516
        %v1748 = vsel %vm1742, %v1647, %v1517
        %v1749 = vsel %vm1740, %v1664, %v1518
        %v1750 = vsel %vm1741, %v1664, %v1519
        %v1751 = vsel %vm1742, %v1664, %v1520
        %v1752 = vsel %vm1740, %v1643, %v1521
        %v1753 = vsel %vm1741, %v1643, %v1522
        %v1754 = vsel %vm1742, %v1643, %v1523
        %v1755 = vsel %vm1740, %v1660, %v1524
        %v1756 = vsel %vm1741, %v1660, %v1525
        %v1757 = vsel %vm1742, %v1660, %v1526
        %v1758 = vsel %vm220, %v1737, -1e+30
        %v1759 = vsel %vm221, %v1738, -1e+30
        %v1760 = vsel %vm222, %v1739, -1e+30
        %v1764 = vperm.slane %v1758, 0
        %v1765 = vperm.slane %v1758, 1
        %v1766 = vperm.slane %v1758, 2
        %v1767 = vperm.slane %v1758, 3
        %v1768 = vperm.slane %v1758, 4
        %v1769 = vperm.slane %v1758, 5
        %v1770 = vperm.slane %v1758, 6
        %v1771 = vperm.slane %v1758, 7
        %v1772 = vperm.slane %v1759, 0
        %v1773 = vperm.slane %v1759, 1
        %v1774 = vperm.slane %v1759, 2
        %v1775 = vperm.slane %v1759, 3
        %v1776 = vperm.slane %v1759, 4
        %v1777 = vperm.slane %v1759, 5
        %v1778 = vperm.slane %v1759, 6
        %v1779 = vperm.slane %v1759, 7
        %v1780 = vperm.slane %v1760, 0
        %v1781 = vperm.slane %v1760, 1
        %v1800 = vsel %vm412, %v1764, -inf
        %v1801 = vsel %vm412, %v1765, -inf
        %v1802 = vsel %vm412, %v1766, -inf
        %v1803 = vsel %vm412, %v1767, -inf
        %v1804 = vsel %vm412, %v1768, -inf
        %v1805 = vmax.f32 %v1800, %v1804
        %v1806 = vsel %vm412, %v1769, -inf
        %v1807 = vmax.f32 %v1801, %v1806
        %v1808 = vsel %vm412, %v1770, -inf
        %v1809 = vmax.f32 %v1802, %v1808
        %v1810 = vsel %vm412, %v1771, -inf
        %v1811 = vmax.f32 %v1803, %v1810
        %v1812 = vsel %vm412, %v1772, -inf
        %v1813 = vmax.f32 %v1805, %v1812
        %v1814 = vsel %vm412, %v1773, -inf
        %v1815 = vmax.f32 %v1807, %v1814
        %v1816 = vsel %vm412, %v1774, -inf
        %v1817 = vmax.f32 %v1809, %v1816
        %v1818 = vsel %vm412, %v1775, -inf
        %v1819 = vmax.f32 %v1811, %v1818
        %v1820 = vsel %vm412, %v1776, -inf
        %v1821 = vmax.f32 %v1813, %v1820
        %v1822 = vsel %vm412, %v1777, -inf
        %v1823 = vmax.f32 %v1815, %v1822
        %v1824 = vsel %vm412, %v1778, -inf
        %v1825 = vmax.f32 %v1817, %v1824
        %v1826 = vsel %vm412, %v1779, -inf
        %v1827 = vmax.f32 %v1819, %v1826
        %v1828 = vsel %vm412, %v1780, -inf
        %v1829 = vmax.f32 %v1821, %v1828
        %v1830 = vsel %vm412, %v1781, -inf
        %v1831 = vmax.f32 %v1823, %v1830
        %v1832 = vmax.f32 %v1829, %v1831
        %v1833 = vmax.f32 %v1825, %v1827
        %v1834 = vmax.f32 %v1832, %v1833
        %1835 = vmax.xlane.f32.xlu0 %v1834
        %v1836 = vpop.xlane.xlu0 %1835
        %vm1837 = vcmp.eq.f32.partialorder %v1836, 0.0
        %v1838 = vsel %vm1837, 1e-05, %v1836
        %v1840 = vperm.slane %v1838, 0
        %vm1842 = vcmp.eq.f32.partialorder %v1758, %v1840
        %vm1843 = vcmp.eq.f32.partialorder %v1759, %v1840
        %vm1844 = vcmp.eq.f32.partialorder %v1760, %v1840
        %v1845 = vsel %vm1842, 1, 0
        %v1846 = vsel %vm1843, 1, 0
        %v1847 = vsel %vm1844, 1, 0
        %v1848 = vcvt.s32.f32 %v1845
        %v1849 = vcvt.s32.f32 %v1846
        %v1850 = vcvt.s32.f32 %v1847
        %v1851 = vadd.f32 %v1620, %v1848
        %v1852 = vadd.f32 %v1621, %v1849
        %v1853 = vadd.f32 %v1622, %v1850
        %s1854 = sadd.s32 %s467, 7
        %s1855 = smul.u32 %s1854, 5
        %s1856 = sld [smem:[#allocation3 + %s1855]]
        %s1857 = sadd.s32 %s1855, 1
        %s1858 = sld [smem:[#allocation3 + %s1857]]
        %s1859 = sadd.s32 %s1855, 2
        %s1860 = sld [smem:[#allocation3 + %s1859]]
        %s1861 = sadd.s32 %s1855, 3
        %s1862 = sld [smem:[#allocation3 + %s1861]]
        %s1863 = ssub.f32 %s1860, %s1856
        %s1864 = sadd.f32 %s1863, 1.0
        %s1865 = ssub.f32 %s1862, %s1858
        %s1866 = sadd.f32 %s1865, 1.0
        %s1867 = smul.f32 %s1864, %s1866
        %p1868 = scmp.eq.f32.partialorder %s1864, 1.0
        %p1869 = scmp.eq.f32.partialorder %s1866, 1.0
        %p1870 = pnand %p1868, %p1869
        %p1871 = pneg %p1870
        %s1872 = scalar_select %p1871, 1, 0
        %s1873 = scvt.s32.f32 %s1872
        %v1874 = vstv %s1860
        %v1875 = vmin.f32 %v183, %v1874
        %v1876 = vmin.f32 %v187, %v1874
        %v1877 = vmin.f32 %v189, %v1874
        %v1878 = vstv %s1856
        %v1879 = vmax.f32 %v163, %v1878
        %v1880 = vmax.f32 %v167, %v1878
        %v1881 = vmax.f32 %v169, %v1878
        %v1882 = vsub.f32 %v1875, %v1879
        %v1883 = vsub.f32 %v1876, %v1880
        %v1884 = vsub.f32 %v1877, %v1881
        %v1885 = vadd.f32 %v1882, 1.0
        %v1886 = vadd.f32 %v1883, 1.0
        %v1887 = vadd.f32 %v1884, 1.0
        %v1888 = vmax.f32 %v1885, 0.0
        %v1889 = vmax.f32 %v1886, 0.0
        %v1890 = vmax.f32 %v1887, 0.0
        %v1891 = vstv %s1862
        %v1892 = vmin.f32 %v193, %v1891
        %v1893 = vmin.f32 %v197, %v1891
        %v1894 = vmin.f32 %v199, %v1891
        %v1895 = vstv %s1858
        %v1896 = vmax.f32 %v173, %v1895
        %v1897 = vmax.f32 %v177, %v1895
        %v1898 = vmax.f32 %v179, %v1895
        %v1899 = vsub.f32 %v1892, %v1896
        %v1900 = vsub.f32 %v1893, %v1897
        %v1901 = vsub.f32 %v1894, %v1898
        %v1902 = vadd.f32 %v1899, 1.0
        %v1903 = vadd.f32 %v1900, 1.0
        %v1904 = vadd.f32 %v1901, 1.0
        %v1905 = vmax.f32 %v1902, 0.0
        %v1906 = vmax.f32 %v1903, 0.0
        %v1907 = vmax.f32 %v1904, 0.0
        %v1908 = vmul.f32 %v1888, %v1905
        %v1909 = vmul.f32 %v1889, %v1906
        %v1910 = vmul.f32 %v1890, %v1907
        %v1911 = vstv %s1867
        %v1912 = vsub.f32 %v1911, %v1908
        %v1913 = vsub.f32 %v1911, %v1909
        %v1914 = vsub.f32 %v1911, %v1910
        %v1915 = vadd.f32 %v203, %v1912
        %v1916 = vadd.f32 %v207, %v1913
        %v1917 = vadd.f32 %v209, %v1914
        %v1918 = vrcp.pop %v1915
        %v1919 = vmul.f32 %v1915, %v1918
        %v1920 = vsub.f32 1.0, %v1919
        %v1921 = vmul.f32 %v1918, %v1920
        %v1922 = vadd.f32 %v1918, %v1921
        %vm1923 = vweird.f32 %v1915
        %vm1924 = vweird.f32 %v1918
        %vm1925 = vmor %vm1923, %vm1924
        %v1926 = vsel %vm1925, %v1918, %v1922
        %v1927 = vand.u32 2147483647, %v1915
        %vm1928 = vcmp.eq.f32.partialorder %v1927, 8.507059e+37
        %v1929 = vand.u32 %v1915, 2147483648
        %v1930 = vor.u32 1.1754944e-38, %v1929
        %v1931 = vsel %vm1928, %v1930, %v1926
        %v1932 = vmul.f32 %v1908, %v1931
        %v1933 = vrcp.pop %v1916
        %v1934 = vmul.f32 %v1916, %v1933
        %v1935 = vsub.f32 1.0, %v1934
        %v1936 = vmul.f32 %v1933, %v1935
        %v1937 = vadd.f32 %v1933, %v1936
        %vm1938 = vweird.f32 %v1916
        %vm1939 = vweird.f32 %v1933
        %vm1940 = vmor %vm1938, %vm1939
        %v1941 = vsel %vm1940, %v1933, %v1937
        %v1942 = vand.u32 2147483647, %v1916
        %vm1943 = vcmp.eq.f32.partialorder %v1942, 8.507059e+37
        %v1944 = vand.u32 %v1916, 2147483648
        %v1945 = vor.u32 1.1754944e-38, %v1944
        %v1946 = vsel %vm1943, %v1945, %v1941
        %v1947 = vmul.f32 %v1909, %v1946
        %v1948 = vrcp.pop %v1917
        %v1949 = vmul.f32 %v1917, %v1948
        %v1950 = vsub.f32 1.0, %v1949
        %v1951 = vmul.f32 %v1948, %v1950
        %v1952 = vadd.f32 %v1948, %v1951
        %vm1953 = vweird.f32 %v1917
        %vm1954 = vweird.f32 %v1948
        %vm1955 = vmor %vm1953, %vm1954
        %v1956 = vsel %vm1955, %v1948, %v1952
        %v1957 = vand.u32 2147483647, %v1917
        %vm1958 = vcmp.eq.f32.partialorder %v1957, 8.507059e+37
        %v1959 = vand.u32 %v1917, 2147483648
        %v1960 = vor.u32 1.1754944e-38, %v1959
        %v1961 = vsel %vm1958, %v1960, %v1956
        %v1962 = vmul.f32 %v1910, %v1961
        %s1963 = ssub.f32 1.0, %s1873
        %v1964 = vstv %s1963
        %v1965 = vmul.f32 %v1932, %v1964
        %v1966 = vmul.f32 %v1947, %v1964
        %v1967 = vmul.f32 %v1962, %v1964
        %v1968 = vsel %vm233, -1.0, %v1965
        %v1969 = vsel %vm234, -1.0, %v1966
        %v1970 = vsel %vm235, -1.0, %v1967
        %vm1971 = vcmp.gt.f32.partialorder %v1968, %v1743
        %vm1972 = vcmp.gt.f32.partialorder %v1969, %v1744
        %vm1973 = vcmp.gt.f32.partialorder %v1970, %v1745
        %v1974 = vsel %vm1971, %v1968, %v1743
        %v1975 = vsel %vm1972, %v1969, %v1744
        %v1976 = vsel %vm1973, %v1970, %v1745
        %v1977 = vsel %vm1971, %v1878, %v1746
        %v1978 = vsel %vm1972, %v1878, %v1747
        %v1979 = vsel %vm1973, %v1878, %v1748
        %v1980 = vsel %vm1971, %v1895, %v1749
        %v1981 = vsel %vm1972, %v1895, %v1750
        %v1982 = vsel %vm1973, %v1895, %v1751
        %v1983 = vsel %vm1971, %v1874, %v1752
        %v1984 = vsel %vm1972, %v1874, %v1753
        %v1985 = vsel %vm1973, %v1874, %v1754
        %v1986 = vsel %vm1971, %v1891, %v1755
        %v1987 = vsel %vm1972, %v1891, %v1756
        %v1988 = vsel %vm1973, %v1891, %v1757
        %v1989 = vsel %vm220, %v1968, -1e+30
        %v1990 = vsel %vm221, %v1969, -1e+30
        %v1991 = vsel %vm222, %v1970, -1e+30
        %v1995 = vperm.slane %v1989, 0
        %v1996 = vperm.slane %v1989, 1
        %v1997 = vperm.slane %v1989, 2
        %v1998 = vperm.slane %v1989, 3
        %v1999 = vperm.slane %v1989, 4
        %v2000 = vperm.slane %v1989, 5
        %v2001 = vperm.slane %v1989, 6
        %v2002 = vperm.slane %v1989, 7
        %v2003 = vperm.slane %v1990, 0
        %v2004 = vperm.slane %v1990, 1
        %v2005 = vperm.slane %v1990, 2
        %v2006 = vperm.slane %v1990, 3
        %v2007 = vperm.slane %v1990, 4
        %v2008 = vperm.slane %v1990, 5
        %v2009 = vperm.slane %v1990, 6
        %v2010 = vperm.slane %v1990, 7
        %v2011 = vperm.slane %v1991, 0
        %v2012 = vperm.slane %v1991, 1
        %v2031 = vsel %vm412, %v1995, -inf
        %v2032 = vsel %vm412, %v1996, -inf
        %v2033 = vsel %vm412, %v1997, -inf
        %v2034 = vsel %vm412, %v1998, -inf
        %v2035 = vsel %vm412, %v1999, -inf
        %v2036 = vmax.f32 %v2031, %v2035
        %v2037 = vsel %vm412, %v2000, -inf
        %v2038 = vmax.f32 %v2032, %v2037
        %v2039 = vsel %vm412, %v2001, -inf
        %v2040 = vmax.f32 %v2033, %v2039
        %v2041 = vsel %vm412, %v2002, -inf
        %v2042 = vmax.f32 %v2034, %v2041
        %v2043 = vsel %vm412, %v2003, -inf
        %v2044 = vmax.f32 %v2036, %v2043
        %v2045 = vsel %vm412, %v2004, -inf
        %v2046 = vmax.f32 %v2038, %v2045
        %v2047 = vsel %vm412, %v2005, -inf
        %v2048 = vmax.f32 %v2040, %v2047
        %v2049 = vsel %vm412, %v2006, -inf
        %v2050 = vmax.f32 %v2042, %v2049
        %v2051 = vsel %vm412, %v2007, -inf
        %v2052 = vmax.f32 %v2044, %v2051
        %v2053 = vsel %vm412, %v2008, -inf
        %v2054 = vmax.f32 %v2046, %v2053
        %v2055 = vsel %vm412, %v2009, -inf
        %v2056 = vmax.f32 %v2048, %v2055
        %v2057 = vsel %vm412, %v2010, -inf
        %v2058 = vmax.f32 %v2050, %v2057
        %v2059 = vsel %vm412, %v2011, -inf
        %v2060 = vmax.f32 %v2052, %v2059
        %v2061 = vsel %vm412, %v2012, -inf
        %v2062 = vmax.f32 %v2054, %v2061
        %v2063 = vmax.f32 %v2060, %v2062
        %v2064 = vmax.f32 %v2056, %v2058
        %v2065 = vmax.f32 %v2063, %v2064
        %2066 = vmax.xlane.f32.xlu0 %v2065
        %v2067 = vpop.xlane.xlu0 %2066
        %vm2068 = vcmp.eq.f32.partialorder %v2067, 0.0
        %v2069 = vsel %vm2068, 1e-05, %v2067
        %v2071 = vperm.slane %v2069, 0
        %vm2073 = vcmp.eq.f32.partialorder %v1989, %v2071
        %vm2074 = vcmp.eq.f32.partialorder %v1990, %v2071
        %vm2075 = vcmp.eq.f32.partialorder %v1991, %v2071
        %v2076 = vsel %vm2073, 1, 0
        %v2077 = vsel %vm2074, 1, 0
        %v2078 = vsel %vm2075, 1, 0
        %v2079 = vcvt.s32.f32 %v2076
        %v2080 = vcvt.s32.f32 %v2077
        %v2081 = vcvt.s32.f32 %v2078
        %v2082 = vadd.f32 %v1851, %v2079
        %v2083 = vadd.f32 %v1852, %v2080
        %v2084 = vadd.f32 %v1853, %v2081
        %vm2085 = vcmp.lt.f32.partialorder %v1974, 0.3
        %vm2086 = vcmp.lt.f32.partialorder %v1975, 0.3
        %vm2087 = vcmp.lt.f32.partialorder %v1976, 0.3
        %v2088 = vsel %vm2085, 0.0, -1.0
        %v2089 = vsel %vm2086, 0.0, -1.0
        %v2090 = vsel %vm2087, 0.0, -1.0
        %vm2091 = vcmp.gt.f32.partialorder %v2082, 0.0
        %vm2092 = vcmp.gt.f32.partialorder %v2083, 0.0
        %vm2093 = vcmp.gt.f32.partialorder %v2084, 0.0
        %v2094 = vsel %vm2091, 1.0, %v2088
        %v2095 = vsel %vm2092, 1.0, %v2089
        %v2096 = vsel %vm2093, 1.0, %v2090
        %vm2097 = vcmp.ge.f32.partialorder %v1974, 0.7
        %vm2098 = vcmp.ge.f32.partialorder %v1975, 0.7
        %vm2099 = vcmp.ge.f32.partialorder %v1976, 0.7
        %v2100 = vsel %vm2097, 1.0, %v2094
        %v2101 = vsel %vm2098, 1.0, %v2095
        %v2102 = vsel %vm2099, 1.0, %v2096
        %v2103 = vsel %vm220, %v2100, -1.0
        %v2104 = vsel %vm221, %v2101, -1.0
        %v2105 = vsel %vm222, %v2102, -1.0
        %2106 = vst [vmem:[%s160] sm:$0xff] %v2103
        %2107 = vst [vmem:[%s160 + $0x8] sm:$0xff] %v2104
        %v2108 = vlaneseq
        %vm2109 = vcmp.ge.s32.totalorder %v2108, 0
        %vm2110 = vcmp.lt.s32.totalorder %v2108, 256
        %vm2111 = vmand %vm2109, %vm2110
        %2112 = vst.msk [vmem:[%s160 + $0x10] sm:$0x3] %vm2111, %v2105
        %v2113 = vsub.f32 %v1983, %v1977
        %v2114 = vsub.f32 %v1984, %v1978
        %v2115 = vsub.f32 %v1985, %v1979
        %v2116 = vadd.f32 %v2113, 1.0
        %v2117 = vadd.f32 %v2114, 1.0
        %v2118 = vadd.f32 %v2115, 1.0
        %v2119 = vsub.f32 %v1986, %v1980
        %v2120 = vsub.f32 %v1987, %v1981
        %v2121 = vsub.f32 %v1988, %v1982
        %v2122 = vadd.f32 %v2119, 1.0
        %v2123 = vadd.f32 %v2120, 1.0
        %v2124 = vadd.f32 %v2121, 1.0
        %v2125 = vmul.f32 %v2116, 0.5
        %v2126 = vmul.f32 %v2117, 0.5
        %v2127 = vmul.f32 %v2118, 0.5
        %v2128 = vadd.f32 %v1977, %v2125
        %v2129 = vadd.f32 %v1978, %v2126
        %v2130 = vadd.f32 %v1979, %v2127
        %v2131 = vmul.f32 %v2122, 0.5
        %v2132 = vmul.f32 %v2123, 0.5
        %v2133 = vmul.f32 %v2124, 0.5
        %v2134 = vadd.f32 %v1980, %v2131
        %v2135 = vadd.f32 %v1981, %v2132
        %v2136 = vadd.f32 %v1982, %v2133
        %s2137 = scalar_lea.vmem [#allocation4], 5
        %v2138 = vld [vmem:[%s2137] ss:$8 sm:$0xf]
        %v2139 = vld [vmem:[%s2137] ss:$8 sm:$0xf0]
        %v2140 = vor.u32 %v2138, %v2139
        %s2141 = scalar_lea.vmem [#allocation4], 69
        %v2142 = vld [vmem:[%s2141] ss:$8 sm:$0xf]
        %v2143 = vld [vmem:[%s2141] ss:$8 sm:$0xf0]
        %v2144 = vor.u32 %v2142, %v2143
        %s2145 = scalar_lea.vmem [#allocation4], 133
        %v2146 = vld [vmem:[%s2145] ss:$8 sm:$0x3]
        %v2147 = vsub.f32 %v2128, %v2140
        %v2148 = vsub.f32 %v2129, %v2144
        %v2149 = vsub.f32 %v2130, %v2146
        %s2150 = scalar_lea.vmem [#allocation4], 7
        %v2151 = vld [vmem:[%s2150] ss:$8 sm:$0xf]
        %v2152 = vld [vmem:[%s2150] ss:$8 sm:$0xf0]
        %v2153 = vor.u32 %v2151, %v2152
        %s2154 = scalar_lea.vmem [#allocation4], 71
        %v2155 = vld [vmem:[%s2154] ss:$8 sm:$0xf]
        %v2156 = vld [vmem:[%s2154] ss:$8 sm:$0xf0]
        %v2157 = vor.u32 %v2155, %v2156
        %s2158 = scalar_lea.vmem [#allocation4], 135
        %v2159 = vld [vmem:[%s2158] ss:$8 sm:$0x3]
        %v2160 = vmul.f32 %v2147, %v2153
        %v2161 = vmul.f32 %v2148, %v2157
        %v2162 = vmul.f32 %v2149, %v2159
        %s2163 = scalar_lea.vmem [#allocation4], 6
        %v2164 = vld [vmem:[%s2163] ss:$8 sm:$0xf]
        %v2165 = vld [vmem:[%s2163] ss:$8 sm:$0xf0]
        %v2166 = vor.u32 %v2164, %v2165
        %s2167 = scalar_lea.vmem [#allocation4], 70
        %v2168 = vld [vmem:[%s2167] ss:$8 sm:$0xf]
        %v2169 = vld [vmem:[%s2167] ss:$8 sm:$0xf0]
        %v2170 = vor.u32 %v2168, %v2169
        %s2171 = scalar_lea.vmem [#allocation4], 134
        %v2172 = vld [vmem:[%s2171] ss:$8 sm:$0x3]
        %v2173 = vsub.f32 %v2134, %v2166
        %v2174 = vsub.f32 %v2135, %v2170
        %v2175 = vsub.f32 %v2136, %v2172
        %s2176 = scalar_lea.vmem [#allocation4], 144
        %v2177 = vld [vmem:[%s2176] ss:$8 sm:$0xf]
        %v2178 = vld [vmem:[%s2176] ss:$8 sm:$0xf0]
        %v2179 = vor.u32 %v2177, %v2178
        %s2180 = scalar_lea.vmem [#allocation4], 208
        %v2181 = vld [vmem:[%s2180] ss:$8 sm:$0xf]
        %v2182 = vld [vmem:[%s2180] ss:$8 sm:$0xf0]
        %v2183 = vor.u32 %v2181, %v2182
        %s2184 = scalar_lea.vmem [#allocation4], 272
        %v2185 = vld [vmem:[%s2184] ss:$8 sm:$0x3]
        %v2186 = vmul.f32 %v2173, %v2179
        %v2187 = vmul.f32 %v2174, %v2183
        %v2188 = vmul.f32 %v2175, %v2185
        %v2189 = vlog2.pop %v2116
        %v2190 = vmul.f32 %v2189, 0.6931472
        %v2191 = vlog2.pop %v2117
        %v2192 = vmul.f32 %v2191, 0.6931472
        %v2193 = vlog2.pop %v2118
        %v2194 = vmul.f32 %v2193, 0.6931472
        %s2195 = scalar_lea.vmem [#allocation4], 145
        %v2196 = vld [vmem:[%s2195] ss:$8 sm:$0xf]
        %v2197 = vld [vmem:[%s2195] ss:$8 sm:$0xf0]
        %v2198 = vor.u32 %v2196, %v2197
        %s2199 = scalar_lea.vmem [#allocation4], 209
        %v2200 = vld [vmem:[%s2199] ss:$8 sm:$0xf]
        %v2201 = vld [vmem:[%s2199] ss:$8 sm:$0xf0]
        %v2202 = vor.u32 %v2200, %v2201
        %s2203 = scalar_lea.vmem [#allocation4], 273
        %v2204 = vld [vmem:[%s2203] ss:$8 sm:$0x3]
        %v2205 = vsub.f32 %v2190, %v2198
        %v2206 = vsub.f32 %v2192, %v2202
        %v2207 = vsub.f32 %v2194, %v2204
        %v2208 = vlog2.pop %v2122
        %v2209 = vmul.f32 %v2208, 0.6931472
        %v2210 = vlog2.pop %v2123
        %v2211 = vmul.f32 %v2210, 0.6931472
        %v2212 = vlog2.pop %v2124
        %v2213 = vmul.f32 %v2212, 0.6931472
        %s2214 = scalar_lea.vmem [#allocation4], 146
        %v2215 = vld [vmem:[%s2214] ss:$8 sm:$0xf]
        %v2216 = vld [vmem:[%s2214] ss:$8 sm:$0xf0]
        %v2217 = vor.u32 %v2215, %v2216
        %s2218 = scalar_lea.vmem [#allocation4], 210
        %v2219 = vld [vmem:[%s2218] ss:$8 sm:$0xf]
        %v2220 = vld [vmem:[%s2218] ss:$8 sm:$0xf0]
        %v2221 = vor.u32 %v2219, %v2220
        %s2222 = scalar_lea.vmem [#allocation4], 274
        %v2223 = vld [vmem:[%s2222] ss:$8 sm:$0x3]
        %v2224 = vsub.f32 %v2209, %v2217
        %v2225 = vsub.f32 %v2211, %v2221
        %v2226 = vsub.f32 %v2213, %v2223
        %v2230 = vperm.slane %v2160, 0
        %v2231 = vperm.slane %v2160, 1
        %v2232 = vperm.slane %v2160, 2
        %v2233 = vperm.slane %v2160, 3
        %v2234 = vperm.slane %v2160, 4
        %v2235 = vperm.slane %v2160, 5
        %v2236 = vperm.slane %v2160, 6
        %v2237 = vperm.slane %v2160, 7
        %v2238 = vperm.slane %v2161, 0
        %v2239 = vperm.slane %v2161, 1
        %v2240 = vperm.slane %v2161, 2
        %v2241 = vperm.slane %v2161, 3
        %v2242 = vperm.slane %v2161, 4
        %v2243 = vperm.slane %v2161, 5
        %v2244 = vperm.slane %v2161, 6
        %v2245 = vperm.slane %v2161, 7
        %v2246 = vperm.slane %v2162, 0
        %v2247 = vperm.slane %v2162, 1
        %v2269 = vperm.slane %v2186, 0
        %v2270 = vperm.slane %v2186, 1
        %v2271 = vperm.slane %v2186, 2
        %v2272 = vperm.slane %v2186, 3
        %v2273 = vperm.slane %v2186, 4
        %v2274 = vperm.slane %v2186, 5
        %v2275 = vperm.slane %v2186, 6
        %v2276 = vperm.slane %v2186, 7
        %v2277 = vperm.slane %v2187, 0
        %v2278 = vperm.slane %v2187, 1
        %v2279 = vperm.slane %v2187, 2
        %v2280 = vperm.slane %v2187, 3
        %v2281 = vperm.slane %v2187, 4
        %v2282 = vperm.slane %v2187, 5
        %v2283 = vperm.slane %v2187, 6
        %v2284 = vperm.slane %v2187, 7
        %v2285 = vperm.slane %v2188, 0
        %v2286 = vperm.slane %v2188, 1
        %v2308 = vperm.slane %v2205, 0
        %v2309 = vperm.slane %v2205, 1
        %v2310 = vperm.slane %v2205, 2
        %v2311 = vperm.slane %v2205, 3
        %v2312 = vperm.slane %v2205, 4
        %v2313 = vperm.slane %v2205, 5
        %v2314 = vperm.slane %v2205, 6
        %v2315 = vperm.slane %v2205, 7
        %v2316 = vperm.slane %v2206, 0
        %v2317 = vperm.slane %v2206, 1
        %v2318 = vperm.slane %v2206, 2
        %v2319 = vperm.slane %v2206, 3
        %v2320 = vperm.slane %v2206, 4
        %v2321 = vperm.slane %v2206, 5
        %v2322 = vperm.slane %v2206, 6
        %v2323 = vperm.slane %v2206, 7
        %v2324 = vperm.slane %v2207, 0
        %v2325 = vperm.slane %v2207, 1
        %v2347 = vperm.slane %v2224, 0
        %v2348 = vperm.slane %v2224, 1
        %v2349 = vperm.slane %v2224, 2
        %v2350 = vperm.slane %v2224, 3
        %v2351 = vperm.slane %v2224, 4
        %v2352 = vperm.slane %v2224, 5
        %v2353 = vperm.slane %v2224, 6
        %v2354 = vperm.slane %v2224, 7
        %v2355 = vperm.slane %v2225, 0
        %v2356 = vperm.slane %v2225, 1
        %v2357 = vperm.slane %v2225, 2
        %v2358 = vperm.slane %v2225, 3
        %v2359 = vperm.slane %v2225, 4
        %v2360 = vperm.slane %v2225, 5
        %v2361 = vperm.slane %v2225, 6
        %v2362 = vperm.slane %v2225, 7
        %v2363 = vperm.slane %v2226, 0
        %v2364 = vperm.slane %v2226, 1
        %v2383 = vsel %vm412, %v2230, %v2269
        %v2384 = vsel %vm412, %v2231, %v2270
        %v2385 = vsel %vm412, %v2232, %v2271
        %v2386 = vsel %vm412, %v2233, %v2272
        %v2387 = vsel %vm412, %v2234, %v2273
        %v2388 = vsel %vm412, %v2235, %v2274
        %v2389 = vsel %vm412, %v2236, %v2275
        %v2390 = vsel %vm412, %v2237, %v2276
        %v2391 = vsel %vm412, %v2238, %v2277
        %v2392 = vsel %vm412, %v2239, %v2278
        %v2393 = vsel %vm412, %v2240, %v2279
        %v2394 = vsel %vm412, %v2241, %v2280
        %v2395 = vsel %vm412, %v2242, %v2281
        %v2396 = vsel %vm412, %v2243, %v2282
        %v2397 = vsel %vm412, %v2244, %v2283
        %v2398 = vsel %vm412, %v2245, %v2284
        %v2399 = vsel %vm412, %v2246, %v2285
        %v2400 = vsel %vm412, %v2247, %v2286
        %vm2401 = vcmask 1041408
        %v2402 = vsel %vm2401, %v2383, %v2308
        %v2403 = vsel %vm2401, %v2384, %v2309
        %v2404 = vsel %vm2401, %v2385, %v2310
        %v2405 = vsel %vm2401, %v2386, %v2311
        %v2406 = vsel %vm2401, %v2387, %v2312
        %v2407 = vsel %vm2401, %v2388, %v2313
        %v2408 = vsel %vm2401, %v2389, %v2314
        %v2409 = vsel %vm2401, %v2390, %v2315
        %v2410 = vsel %vm2401, %v2391, %v2316
        %v2411 = vsel %vm2401, %v2392, %v2317
        %v2412 = vsel %vm2401, %v2393, %v2318
        %v2413 = vsel %vm2401, %v2394, %v2319
        %v2414 = vsel %vm2401, %v2395, %v2320
        %v2415 = vsel %vm2401, %v2396, %v2321
        %v2416 = vsel %vm2401, %v2397, %v2322
        %v2417 = vsel %vm2401, %v2398, %v2323
        %v2418 = vsel %vm2401, %v2399, %v2324
        %v2419 = vsel %vm2401, %v2400, %v2325
        %vm2420 = vcmask 1042432
        %v2421 = vsel %vm2420, %v2402, %v2347
        %v2422 = vsel %vm2420, %v2403, %v2348
        %v2423 = vsel %vm2420, %v2404, %v2349
        %v2424 = vsel %vm2420, %v2405, %v2350
        %v2425 = vsel %vm2420, %v2406, %v2351
        %v2426 = vsel %vm2420, %v2407, %v2352
        %v2427 = vsel %vm2420, %v2408, %v2353
        %v2428 = vsel %vm2420, %v2409, %v2354
        %v2429 = vsel %vm2420, %v2410, %v2355
        %v2430 = vsel %vm2420, %v2411, %v2356
        %v2431 = vsel %vm2420, %v2412, %v2357
        %v2432 = vsel %vm2420, %v2413, %v2358
        %v2433 = vsel %vm2420, %v2414, %v2359
        %v2434 = vsel %vm2420, %v2415, %v2360
        %v2435 = vsel %vm2420, %v2416, %v2361
        %v2436 = vsel %vm2420, %v2417, %v2362
        %v2437 = vsel %vm2420, %v2418, %v2363
        %v2438 = vsel %vm2420, %v2419, %v2364
        %v2439 = vsel %vm220, 1, 0
        %v2440 = vsel %vm221, 1, 0
        %v2441 = vsel %vm222, 1, 0
        %v2442 = vperm.slane %v2439, 0
        %v2443 = vperm.slane %v2439, 1
        %v2444 = vperm.slane %v2439, 2
        %v2445 = vperm.slane %v2439, 3
        %v2446 = vperm.slane %v2439, 4
        %v2447 = vperm.slane %v2439, 5
        %v2448 = vperm.slane %v2439, 6
        %v2449 = vperm.slane %v2439, 7
        %v2450 = vperm.slane %v2440, 0
        %v2451 = vperm.slane %v2440, 1
        %v2452 = vperm.slane %v2440, 2
        %v2453 = vperm.slane %v2440, 3
        %v2454 = vperm.slane %v2440, 4
        %v2455 = vperm.slane %v2440, 5
        %v2456 = vperm.slane %v2440, 6
        %v2457 = vperm.slane %v2440, 7
        %v2458 = vperm.slane %v2441, 0
        %v2459 = vperm.slane %v2441, 1
        %vm2460 = vcmp.eq.s32.totalorder %v2442, 1
        %vm2461 = vcmp.eq.s32.totalorder %v2443, 1
        %vm2462 = vcmp.eq.s32.totalorder %v2444, 1
        %vm2463 = vcmp.eq.s32.totalorder %v2445, 1
        %vm2464 = vcmp.eq.s32.totalorder %v2446, 1
        %vm2465 = vcmp.eq.s32.totalorder %v2447, 1
        %vm2466 = vcmp.eq.s32.totalorder %v2448, 1
        %vm2467 = vcmp.eq.s32.totalorder %v2449, 1
        %vm2468 = vcmp.eq.s32.totalorder %v2450, 1
        %vm2469 = vcmp.eq.s32.totalorder %v2451, 1
        %vm2470 = vcmp.eq.s32.totalorder %v2452, 1
        %vm2471 = vcmp.eq.s32.totalorder %v2453, 1
        %vm2472 = vcmp.eq.s32.totalorder %v2454, 1
        %vm2473 = vcmp.eq.s32.totalorder %v2455, 1
        %vm2474 = vcmp.eq.s32.totalorder %v2456, 1
        %vm2475 = vcmp.eq.s32.totalorder %v2457, 1
        %vm2476 = vcmp.eq.s32.totalorder %v2458, 1
        %vm2477 = vcmp.eq.s32.totalorder %v2459, 1
        %v2478 = vsel %vm2460, %v2421, 0.0
        %v2479 = vsel %vm2461, %v2422, 0.0
        %v2480 = vsel %vm2462, %v2423, 0.0
        %v2481 = vsel %vm2463, %v2424, 0.0
        %v2482 = vsel %vm2464, %v2425, 0.0
        %v2483 = vsel %vm2465, %v2426, 0.0
        %v2484 = vsel %vm2466, %v2427, 0.0
        %v2485 = vsel %vm2467, %v2428, 0.0
        %v2486 = vsel %vm2468, %v2429, 0.0
        %v2487 = vsel %vm2469, %v2430, 0.0
        %v2488 = vsel %vm2470, %v2431, 0.0
        %v2489 = vsel %vm2471, %v2432, 0.0
        %v2490 = vsel %vm2472, %v2433, 0.0
        %v2491 = vsel %vm2473, %v2434, 0.0
        %v2492 = vsel %vm2474, %v2435, 0.0
        %v2493 = vsel %vm2475, %v2436, 0.0
        %v2494 = vsel %vm2476, %v2437, 0.0
        %v2495 = vsel %vm2477, %v2438, 0.0
        %2496 = vst [vmem:[%s156] sm:$0xf] %v2478
        %2497 = vst [vmem:[%s156 + $0x8] sm:$0xf] %v2479
        %v2500 = vrot.slane %v2480, 4
        %v2501 = vrot.slane %v2481, 4
        %2504 = vst [vmem:[%s156] sm:$0xf0] %v2500
        %2505 = vst [vmem:[%s156 + $0x8] sm:$0xf0] %v2501
        %2506 = vst [vmem:[%s156 + $0x10] sm:$0xf] %v2482
        %2507 = vst [vmem:[%s156 + $0x18] sm:$0xf] %v2483
        %v2510 = vrot.slane %v2484, 4
        %v2511 = vrot.slane %v2485, 4
        %2514 = vst [vmem:[%s156 + $0x10] sm:$0xf0] %v2510
        %2515 = vst [vmem:[%s156 + $0x18] sm:$0xf0] %v2511
        %2516 = vst [vmem:[%s156 + $0x20] sm:$0xf] %v2486
        %2517 = vst [vmem:[%s156 + $0x28] sm:$0xf] %v2487
        %v2520 = vrot.slane %v2488, 4
        %v2521 = vrot.slane %v2489, 4
        %2524 = vst [vmem:[%s156 + $0x20] sm:$0xf0] %v2520
        %2525 = vst [vmem:[%s156 + $0x28] sm:$0xf0] %v2521
        %2526 = vst [vmem:[%s156 + $0x30] sm:$0xf] %v2490
        %2527 = vst [vmem:[%s156 + $0x38] sm:$0xf] %v2491
        %v2530 = vrot.slane %v2492, 4
        %v2531 = vrot.slane %v2493, 4
        %2534 = vst [vmem:[%s156 + $0x30] sm:$0xf0] %v2530
        %2535 = vst [vmem:[%s156 + $0x38] sm:$0xf0] %v2531
        %2536 = vst [vmem:[%s156 + $0x40] sm:$0xf] %v2494
        %2537 = vst [vmem:[%s156 + $0x48] sm:$0xf] %v2495
        %p2538 = scmp.lt.s32.totalorder %s24, 1
        %s2539 = scalar_select %p2538, %s24, 1
        %s2540 = smul.addr %s2539, 10
        %s2541 = smul.addr %s2540, 8
        %s2542 = scalar_lea.vmem %s2, %s2541
        %p2543 = scmp.lt.s32.totalorder %s24, 1
        %s2544 = scalar_select %p2543, %s24, 1
        %s2545 = smul.addr %s2544, 18
        %s2546 = scalar_lea.vmem %s3, %s2545
        // Predicated region
        $region29: #{_device_forward.1} parent=23 // pred_check
          %p2547 = pneg %p63
        $region30: #{_device_forward.1} parent=23 // pred_check_branch
          %2549 = sbr.rel (%p2547) target = $region32
        $region31: #{_device_forward.1} parent=23 // pred_region
          _
        $region32: #{_device_forward.1} parent=23 // pred_fallthru
          _
        // Predicated region
        $region33: #{_device_forward.1} parent=23 // pred_check
          %p2550 = pneg %p89
        $region34: #{_device_forward.1} parent=23 // pred_check_branch
          %2552 = sbr.rel (%p2550) target = $region36
        $region35: #{_device_forward.1} parent=23 // pred_region
          _
        $region36: #{_device_forward.1} parent=23 // pred_fallthru
          _
      $region24: #{_device_forward.1} parent=5 // pred_fallthru
        _
      %p2553 = scmp.le.s32.totalorder 2, %s19
      // Predicated region
      $region37: #{_device_forward.1} parent=5 // pred_check
        %p2554 = pneg %p2553
      $region38: #{_device_forward.1} parent=5 // pred_check_branch
        %2556 = sbr.rel (%p2554) target = $region40
      $region39: #{_device_forward.1} parent=5 // pred_region
        %s2557 = ssub.s32 %s19, 2
        // Predicated region
        $region41: #{_device_forward.1} parent=39 // pred_check
          %p2558 = pneg %p69
        $region42: #{_device_forward.1} parent=39 // pred_check_branch
          %2560 = sbr.rel (%p2558) target = $region44
        $region43: #{_device_forward.1} parent=39 // pred_region
          %p2561 = scmp.lt.s32.totalorder %s25, 1
          %s2562 = scalar_select %p2561, %s25, 1
          %s2563 = smul.addr %s2562, 10
          %s2564 = smul.addr %s2563, 8
          %s2565 = scalar_lea.vmem %s2, %s2564
        $region44: #{_device_forward.1} parent=39 // pred_fallthru
          _
        // Predicated region
        $region45: #{_device_forward.1} parent=39 // pred_check
          %p2566 = pneg %p95
        $region46: #{_device_forward.1} parent=39 // pred_check_branch
          %2568 = sbr.rel (%p2566) target = $region48
        $region47: #{_device_forward.1} parent=39 // pred_region
          %p2569 = scmp.lt.s32.totalorder %s25, 1
          %s2570 = scalar_select %p2569, %s25, 1
          %s2571 = smul.addr %s2570, 18
          %s2572 = scalar_lea.vmem %s3, %s2571
        $region48: #{_device_forward.1} parent=39 // pred_fallthru
          _
      $region40: #{_device_forward.1} parent=5 // pred_fallthru
        _
    $region6: #{_device_forward.1} parent=1 // loop_footer
      %s23 = sadd.s32 1, %s19
    $region7: #{_device_forward.1} parent=1 // loop_footer_branch
      %18 = sbr.rel target = $region3
    $region8: #{_device_forward.1} parent=1 // loop_exit
      _
    %2573 = vsyncpa [#allocation5], 1
    %s2574 = scalar_lea.sflag [#allocation5], 1
    %2575 = vsyncpa %s2574, 1

</llo_original>
